<compile_context>
chip_gen: v6e
topology: v6e:2x2x1
jax: 0.10.0
libtpu: 0.0.40
codegen_flags: <defaults>
</compile_context>

<pallas_src>
from functools import partial

import numpy as np
import jax
import jax.numpy as jnp
from jax import lax
from jax.experimental import pallas as pl
from jax.experimental.pallas import tpu as pltpu

# ----------------------------- configuration --------------------------------
OBS_DIM = 16
NUM_ACTIONS = 4
ACTION_DIM = 8
D_MODEL = 32                      # inner_embed_size
OBS_OUT = D_MODEL - ACTION_DIM    # 24
NUM_LAYERS = 2
HIST = 8                          # history_len == seq_len
D_STATE = 16
D_CONV = 4
EXPAND = 2
D_INNER = EXPAND * D_MODEL        # 64
DT_RANK = -(-D_MODEL // 16)       # ceil(d_model / 16) = 2
BATCH = 2
OUT_PAD = 128                     # lane-dense padded FFN output width


def _silu_k(x):
    # kernel-side silu: the divide goes to the EUP via approx reciprocal
    return x * pl.reciprocal(1.0 + jnp.exp(-x), approx=True)


def _silu_ref(x):
    return x * (1.0 / (1.0 + jnp.exp(-x)))


def _softplus(x):
    # TODO(synk): F.softplus has a linear branch for x > threshold; at these
    # activation scales log1p(exp(x)) is equivalent.
    return jnp.log1p(jnp.exp(x))


# ------------------------------ fused Pallas kernel --------------------------
def dtqn_fused_kernel(inp_ref, pos_ref, w_emb_ref, b_emb_ref,
                      w_xin_ref, w_res_ref, conv_w_ref, conv_b_ref,
                      w_b_ref, w_c_ref, w_delta_ref, b_dt_ref,
                      neg_a_ref, d_ref, w_out_ref,
                      w1_ref, b1_ref, w2_ref, b2_ref,
                      out_ref, *, batch, seq):
    bl = batch * seq

    # ---- embedding: block-diagonal packed [action | obs] weight + learned pos
    x = (jnp.dot(inp_ref[...], w_emb_ref[...],
                 preferred_element_type=jnp.float32)
         + b_emb_ref[...] + pos_ref[...])                        # (bl, D_MODEL)

    # per-row time index (batch folded into sublanes) for causal masking
    t_idx = lax.broadcasted_iota(jnp.int32, (bl, D_INNER), 0) % seq

    for layer in range(NUM_LAYERS):
        w_xin = w_xin_ref[layer]
        w_res = w_res_ref[layer]
        cw = conv_w_ref[layer]                                   # (D_CONV, D_INNER)
        cb = conv_b_ref[layer]
        w_b = w_b_ref[layer]
        w_c = w_c_ref[layer]
        w_delta = w_delta_ref[layer]
        b_dt = b_dt_ref[layer]
        neg_a = neg_a_ref[layer]                                 # (D_STATE, D_INNER) = -exp(A_log).T
        d_skip = d_ref[layer]
        w_out = w_out_ref[layer]

        xc = jnp.dot(x, w_xin, preferred_element_type=jnp.float32)    # (bl, D_INNER)
        res = jnp.dot(x, w_res, preferred_element_type=jnp.float32)   # (bl, D_INNER)

        # causal depthwise conv1d: XLU sublane roll + row mask; the mask also
        # zeroes rows that would otherwise leak across the folded batch edge.
        acc = xc * cw[D_CONV - 1:D_CONV, :]                      # tap with shift 0
        for s in range(1, D_CONV):
            shifted = pltpu.roll(xc, s, axis=0)
            shifted = jnp.where(t_idx >= s, shifted, 0.0)
            acc = acc + shifted * cw[D_CONV - 1 - s:D_CONV - s, :]
        xcs = _silu_k(acc + cb)                                  # (bl, D_INNER)

        # selective-SSM projections; every matmul output is lane-aligned
        bm = jnp.dot(xcs, w_b, preferred_element_type=jnp.float32)    # (bl, D_STATE)
        cm = jnp.dot(xcs, w_c, preferred_element_type=jnp.float32)    # (bl, D_STATE)
        delta = _softplus(
            jnp.dot(xcs, w_delta, preferred_element_type=jnp.float32) + b_dt)

        # state layout (.., D_STATE, D_INNER): lane dim = D_INNER (64)
        da = jnp.exp(delta[:, None, :] * neg_a[None, :, :])      # (bl, S, D)
        dbu = (delta * xcs)[:, None, :] * bm[:, :, None]         # (bl, S, D)

        da = da.reshape(batch, seq, D_STATE, D_INNER)
        dbu = dbu.reshape(batch, seq, D_STATE, D_INNER)
        cm_r = cm.reshape(batch, seq, D_STATE)

        # pure-VPU recurrence; the C contraction is one deferred reduce
        h = jnp.zeros((batch, D_STATE, D_INNER), jnp.float32)
        hs = []
        for t in range(seq):                                     # static unroll
            h = da[:, t] * h + dbu[:, t]
            hs.append(h)
        hstack = jnp.stack(hs, axis=1)                           # (B, L, S, D)
        y = jnp.sum(hstack * cm_r[..., None], axis=2)            # (B, L, D)
        y = y.reshape(bl, D_INNER)

        y = y + xcs * d_skip
        y = y * _silu_k(res)
        x = jnp.dot(y, w_out, preferred_element_type=jnp.float32)     # (bl, D_MODEL)

    # ---- FFN head with a lane-dense (128-wide padded) store
    h1 = jnp.maximum(
        jnp.dot(x, w1_ref[...], preferred_element_type=jnp.float32)
        + b1_ref[...], 0.0)
    out_ref[...] = (jnp.dot(h1, w2_ref[...], preferred_element_type=jnp.float32)
                    + b2_ref[...])


# ------------------------------ pallas_call glue -----------------------------
def _full_spec(shape):
    nd = len(shape)
    return pl.BlockSpec(tuple(shape), lambda i, _nd=nd: (0,) * _nd)


def pack_params(params):
    """One-time host-side repacking of module weights for the fused kernel."""
    # block-diagonal embedding: input [act_oh(4) | obs(16)] -> [act_e(8) | obs_e(24)]
    w_emb = jnp.zeros((NUM_ACTIONS + OBS_DIM, D_MODEL), jnp.float32)
    w_emb = w_emb.at[:NUM_ACTIONS, :ACTION_DIM].set(params["w_act"])
    w_emb = w_emb.at[NUM_ACTIONS:, ACTION_DIM:].set(params["w_obs"])
    b_emb = jnp.concatenate(
        [jnp.zeros((1, ACTION_DIM), jnp.float32), params["b_obs"]], axis=-1)

    def stk(fn):
        return jnp.stack([fn(p) for p in params["layers"]], axis=0)

    w2p = jnp.zeros((D_MODEL, OUT_PAD), jnp.float32)
    w2p = w2p.at[:, :NUM_ACTIONS].set(params["w2"])
    b2p = jnp.zeros((1, OUT_PAD), jnp.float32)
    b2p = b2p.at[:, :NUM_ACTIONS].set(params["b2"])

    return dict(
        pos=params["pos"],
        w_emb=w_emb, b_emb=b_emb,
        w_xin=stk(lambda p: p["w_in"][:, :D_INNER]),
        w_res=stk(lambda p: p["w_in"][:, D_INNER:]),
        conv_w=stk(lambda p: p["conv_w"]),
        conv_b=stk(lambda p: p["conv_b"]),
        w_B=stk(lambda p: p["w_x"][:, DT_RANK:DT_RANK + D_STATE]),
        w_C=stk(lambda p: p["w_x"][:, DT_RANK + D_STATE:]),
        # fold the rank-2 dt projection into one (D_INNER, D_INNER) matrix
        w_delta=stk(lambda p: p["w_x"][:, :DT_RANK] @ p["w_dt"]),
        b_dt=stk(lambda p: p["b_dt"]),
        neg_A_t=stk(lambda p: -jnp.exp(p["a_log"]).T),
        d=stk(lambda p: p["d"]),
        w_out=stk(lambda p: p["w_out"]),
        w1=params["w1"], b1=params["b1"], w2p=w2p, b2p=b2p,
    )


def dtqn_forward(packed, obss, actions):
    b, l, _ = obss.shape
    assert l <= HIST, "Cannot forward, history is longer than expected."
    # torch.roll(action_embed, 1, 1) + zero first step, done on int indices:
    # index -1 one-hots to an all-zero row (nn.Embedding gather -> one-hot@W).
    if l > 1:
        prev = jnp.concatenate(
            [jnp.full((b, 1, 1), -1, actions.dtype), actions[:, :l - 1]], axis=1)
    else:
        prev = actions
    act_oh = jax.nn.one_hot(prev[..., 0], NUM_ACTIONS, dtype=jnp.float32)
    inp = jnp.concatenate([act_oh, obss], axis=-1).reshape(
        b * l, NUM_ACTIONS + OBS_DIM)
    pos_t = jnp.tile(packed["pos"][:l], (b, 1))              # (b*l, D_MODEL)

    args = (inp, pos_t, packed["w_emb"], packed["b_emb"],
            packed["w_xin"], packed["w_res"], packed["conv_w"], packed["conv_b"],
            packed["w_B"], packed["w_C"], packed["w_delta"], packed["b_dt"],
            packed["neg_A_t"], packed["d"], packed["w_out"],
            packed["w1"], packed["b1"], packed["w2p"], packed["b2p"])

    out = pl.pallas_call(
        partial(dtqn_fused_kernel, batch=b, seq=l),
        out_shape=jax.ShapeDtypeStruct((b * l, OUT_PAD), jnp.float32),
        grid=(1,),
        in_specs=[_full_spec(a.shape) for a in args],
        out_specs=_full_spec((b * l, OUT_PAD)),
        compiler_params=pltpu.CompilerParams(
            dimension_semantics=("arbitrary",)),
    )(*args)
    # dropout p=0.0 -> identity; output[:, -l:] is the whole sequence here.
    return out[:, :NUM_ACTIONS].reshape(b, l, NUM_ACTIONS)


# --------------------------- pure-JAX reference ------------------------------
def dtqn_reference(params, obss, actions):
    b, l, _ = obss.shape
    act_oh = jax.nn.one_hot(actions[..., 0], NUM_ACTIONS, dtype=jnp.float32)
    act_e = act_oh @ params["w_act"]
    if l > 1:
        act_e = jnp.concatenate(
            [jnp.zeros_like(act_e[:, :1]), act_e[:, :-1]], axis=1)
    obs_e = obss @ params["w_obs"] + params["b_obs"]
    x = jnp.concatenate([act_e, obs_e], axis=-1) + params["pos"][None, :l]
    for p in params["layers"]:
        xz = x @ p["w_in"]
        xc, res = xz[..., :D_INNER], xz[..., D_INNER:]
        acc = jnp.zeros_like(xc)
        for k in range(D_CONV):
            s = D_CONV - 1 - k
            shifted = xc if s == 0 else jnp.concatenate(
                [jnp.zeros_like(xc[:, :s]), xc[:, :l - s]], axis=1)
            acc = acc + shifted * p["conv_w"][k][None, None, :]
        xc = _silu_ref(acc + p["conv_b"])
        x_dbl = xc @ p["w_x"]
        dt = x_dbl[..., :DT_RANK]
        Bm = x_dbl[..., DT_RANK:DT_RANK + D_STATE]
        Cm = x_dbl[..., DT_RANK + D_STATE:]
        delta = _softplus(dt @ p["w_dt"] + p["b_dt"])
        A = -jnp.exp(p["a_log"])
        dA = jnp.exp(delta[..., None] * A[None, None])
        dBu = delta[..., None] * Bm[:, :, None, :] * xc[..., None]
        h = jnp.zeros((b, D_INNER, D_STATE), jnp.float32)
        ys = []
        for i in range(l):
            h = dA[:, i] * h + dBu[:, i]
            ys.append(jnp.sum(h * Cm[:, i, None, :], axis=-1))
        y = jnp.stack(ys, axis=1) + xc * p["d"]
        y = y * _silu_ref(res)
        x = y @ p["w_out"]
    h1 = jnp.maximum(x @ params["w1"] + params["b1"], 0.0)
    out = h1 @ params["w2"] + params["b2"]
    return out[:, -l:, :]


# ------------------------------ parameter init -------------------------------
def init_params(key):
    ks = jax.random.split(key, 8 + NUM_LAYERS)

    def nrm(k, shape, scale=0.02):
        return scale * jax.random.normal(k, shape, jnp.float32)

    params = dict(
        w_obs=nrm(ks[0], (OBS_DIM, OBS_OUT)),
        b_obs=nrm(ks[1], (1, OBS_OUT)),
        w_act=nrm(ks[2], (NUM_ACTIONS, ACTION_DIM)),
        pos=nrm(ks[3], (HIST, D_MODEL)),
        w1=nrm(ks[4], (D_MODEL, D_MODEL)),
        b1=jnp.zeros((1, D_MODEL), jnp.float32),
        w2=nrm(ks[5], (D_MODEL, NUM_ACTIONS)),
        b2=jnp.zeros((1, NUM_ACTIONS), jnp.float32),
        layers=[],
    )
    a_init = jnp.tile(
        jnp.arange(1, D_STATE + 1, dtype=jnp.float32)[None, :], (D_INNER, 1))
    for layer in range(NUM_LAYERS):
        lk = jax.random.split(ks[8 + layer], 8)
        params["layers"].append(dict(
            w_in=nrm(lk[0], (D_MODEL, 2 * D_INNER)),
            # TODO(synk): verify tap ordering vs PyTorch Conv1d (C,1,K) layout
            # when loading real checkpoints; synthetic init is self-consistent.
            conv_w=nrm(lk[1], (D_CONV, D_INNER), 0.1),
            conv_b=nrm(lk[2], (1, D_INNER), 0.1),
            w_x=nrm(lk[3], (D_INNER, DT_RANK + 2 * D_STATE)),
            w_dt=nrm(lk[4], (DT_RANK, D_INNER), 0.1),
            b_dt=nrm(lk[5], (1, D_INNER), 0.1),
            a_log=jnp.log(a_init),
            d=jnp.ones((1, D_INNER), jnp.float32),
            w_out=nrm(lk[6], (D_INNER, D_MODEL)),
        ))
    return params


# ------------------------------------ main -----------------------------------
if __name__ == "__main__":
    key = jax.random.PRNGKey(0)
    pk, ok, ak = jax.random.split(key, 3)
    params = init_params(pk)
    packed = pack_params(params)

    obss = jax.random.normal(ok, (BATCH, HIST, OBS_DIM), jnp.float32)
    actions = jax.random.randint(ak, (BATCH, HIST, 1), 0, NUM_ACTIONS,
                                 dtype=jnp.int32)

    out = dtqn_forward(packed, obss, actions)
    out = jax.block_until_ready(out)
    assert out.shape == (BATCH, HIST, NUM_ACTIONS)

    ref = dtqn_reference(params, obss, actions)
    np.testing.assert_allclose(np.asarray(out), np.asarray(ref),
                               rtol=1e-2, atol=1e-2)
    print("KERNEL_OK")
</pallas_src>

<mosaic_0001>
module attributes {stable_mosaic.version = 11 : i64} {
  func.func @dtqn_fused_kernel(%arg0: i32, %arg1: memref<16x20xf32, #tpu.memory_space<vmem>>, %arg2: memref<16x32xf32, #tpu.memory_space<vmem>>, %arg3: memref<20x32xf32, #tpu.memory_space<vmem>>, %arg4: memref<1x32xf32, #tpu.memory_space<vmem>>, %arg5: memref<2x32x64xf32, #tpu.memory_space<vmem>>, %arg6: memref<2x32x64xf32, #tpu.memory_space<vmem>>, %arg7: memref<2x4x64xf32, #tpu.memory_space<vmem>>, %arg8: memref<2x1x64xf32, #tpu.memory_space<vmem>>, %arg9: memref<2x64x16xf32, #tpu.memory_space<vmem>>, %arg10: memref<2x64x16xf32, #tpu.memory_space<vmem>>, %arg11: memref<2x64x64xf32, #tpu.memory_space<vmem>>, %arg12: memref<2x1x64xf32, #tpu.memory_space<vmem>>, %arg13: memref<2x16x64xf32, #tpu.memory_space<vmem>>, %arg14: memref<2x1x64xf32, #tpu.memory_space<vmem>>, %arg15: memref<2x64x32xf32, #tpu.memory_space<vmem>>, %arg16: memref<32x32xf32, #tpu.memory_space<vmem>>, %arg17: memref<1x32xf32, #tpu.memory_space<vmem>>, %arg18: memref<32x128xf32, #tpu.memory_space<vmem>>, %arg19: memref<1x128xf32, #tpu.memory_space<vmem>>, %arg20: memref<16x128xf32, #tpu.memory_space<vmem>>) attributes {dimension_semantics = [#tpu.dimension_semantics<arbitrary>], iteration_bounds = array<i64: 1>, scalar_prefetch = 0 : i64, scratch_operands = 0 : i64, tpu.core_type = #tpu.core_type<tc>, window_params = [{pipeline_mode = #tpu.pipeline_mode<synchronous>, transform_indices = @transform_0, window_bounds = array<i64: 16, 20>}, {pipeline_mode = #tpu.pipeline_mode<synchronous>, transform_indices = @transform_1, window_bounds = array<i64: 16, 32>}, {pipeline_mode = #tpu.pipeline_mode<synchronous>, transform_indices = @transform_2, window_bounds = array<i64: 20, 32>}, {pipeline_mode = #tpu.pipeline_mode<synchronous>, transform_indices = @transform_3, window_bounds = array<i64: 1, 32>}, {pipeline_mode = #tpu.pipeline_mode<synchronous>, transform_indices = @transform_4, window_bounds = array<i64: 2, 32, 64>}, {pipeline_mode = #tpu.pipeline_mode<synchronous>, transform_indices = @transform_5, window_bounds = array<i64: 2, 32, 64>}, {pipeline_mode = #tpu.pipeline_mode<synchronous>, transform_indices = @transform_6, window_bounds = array<i64: 2, 4, 64>}, {pipeline_mode = #tpu.pipeline_mode<synchronous>, transform_indices = @transform_7, window_bounds = array<i64: 2, 1, 64>}, {pipeline_mode = #tpu.pipeline_mode<synchronous>, transform_indices = @transform_8, window_bounds = array<i64: 2, 64, 16>}, {pipeline_mode = #tpu.pipeline_mode<synchronous>, transform_indices = @transform_9, window_bounds = array<i64: 2, 64, 16>}, {pipeline_mode = #tpu.pipeline_mode<synchronous>, transform_indices = @transform_10, window_bounds = array<i64: 2, 64, 64>}, {pipeline_mode = #tpu.pipeline_mode<synchronous>, transform_indices = @transform_11, window_bounds = array<i64: 2, 1, 64>}, {pipeline_mode = #tpu.pipeline_mode<synchronous>, transform_indices = @transform_12, window_bounds = array<i64: 2, 16, 64>}, {pipeline_mode = #tpu.pipeline_mode<synchronous>, transform_indices = @transform_13, window_bounds = array<i64: 2, 1, 64>}, {pipeline_mode = #tpu.pipeline_mode<synchronous>, transform_indices = @transform_14, window_bounds = array<i64: 2, 64, 32>}, {pipeline_mode = #tpu.pipeline_mode<synchronous>, transform_indices = @transform_15, window_bounds = array<i64: 32, 32>}, {pipeline_mode = #tpu.pipeline_mode<synchronous>, transform_indices = @transform_16, window_bounds = array<i64: 1, 32>}, {pipeline_mode = #tpu.pipeline_mode<synchronous>, transform_indices = @transform_17, window_bounds = array<i64: 32, 128>}, {pipeline_mode = #tpu.pipeline_mode<synchronous>, transform_indices = @transform_18, window_bounds = array<i64: 1, 128>}, {pipeline_mode = #tpu.pipeline_mode<synchronous>, transform_indices = @transform_19, window_bounds = array<i64: 16, 128>}]} {
    %c0 = arith.constant 0 : index
    %c0_0 = arith.constant 0 : index
    %0 = vector.load %arg1[%c0, %c0_0] : memref<16x20xf32, #tpu.memory_space<vmem>>, vector<16x20xf32>
    %c0_1 = arith.constant 0 : index
    %c0_2 = arith.constant 0 : index
    %1 = vector.load %arg3[%c0_1, %c0_2] : memref<20x32xf32, #tpu.memory_space<vmem>>, vector<20x32xf32>
    %cst = arith.constant dense<0.000000e+00> : vector<16x32xf32>
    %2 = tpu.matmul %0, %1, %cst {dimension_numbers = #tpu.dot_dimension_numbers<[1], [0], [0], [1], [0, 0, 1, 1], [], []>} : vector<16x20xf32>, vector<20x32xf32>, vector<16x32xf32> -> vector<16x32xf32>
    %c0_3 = arith.constant 0 : index
    %c0_4 = arith.constant 0 : index
    %3 = vector.load %arg4[%c0_3, %c0_4] : memref<1x32xf32, #tpu.memory_space<vmem>>, vector<1x32xf32>
    %4 = vector.broadcast %3 : vector<1x32xf32> to vector<16x32xf32>
    %5 = arith.addf %2, %4 : vector<16x32xf32>
    %c0_5 = arith.constant 0 : index
    %c0_6 = arith.constant 0 : index
    %6 = vector.load %arg2[%c0_5, %c0_6] : memref<16x32xf32, #tpu.memory_space<vmem>>, vector<16x32xf32>
    %7 = arith.addf %5, %6 : vector<16x32xf32>
    %8 = tpu.iota {dimensions = array<i32: 0>} : vector<16x64xi32>
    %c8_i32 = arith.constant 8 : i32
    %c0_i32 = arith.constant 0 : i32
    %9 = arith.cmpi eq, %c8_i32, %c0_i32 : i32
    %c1_i32 = arith.constant 1 : i32
    %10 = arith.select %9, %c1_i32, %c8_i32 : i32
    %11 = vector.broadcast %10 : i32 to vector<16x64xi32>
    %12 = arith.remsi %8, %11 : vector<16x64xi32>
    %c0_i32_7 = arith.constant 0 : i32
    %13 = vector.broadcast %c0_i32_7 : i32 to vector<16x64xi32>
    %14 = arith.cmpi ne, %12, %13 : vector<16x64xi32>
    %c0_i32_8 = arith.constant 0 : i32
    %15 = vector.broadcast %c0_i32_8 : i32 to vector<16x64xi32>
    %16 = arith.cmpi slt, %12, %15 : vector<16x64xi32>
    %c0_i32_9 = arith.constant 0 : i32
    %17 = arith.cmpi slt, %10, %c0_i32_9 : i32
    %18 = vector.broadcast %17 : i1 to vector<16x64xi1>
    %19 = vector.broadcast %18 : vector<16x64xi1> to vector<16x64xi1>
    %20 = arith.xori %16, %19 : vector<16x64xi1>
    %21 = arith.andi %20, %14 : vector<16x64xi1>
    %22 = vector.broadcast %10 : i32 to vector<16x64xi32>
    %23 = arith.addi %12, %22 : vector<16x64xi32>
    %24 = arith.select %21, %23, %12 : vector<16x64xi1>, vector<16x64xi32>
    %c0_10 = arith.constant 0 : index
    %c0_11 = arith.constant 0 : index
    %c0_12 = arith.constant 0 : index
    %25 = vector.load %arg5[%c0_10, %c0_11, %c0_12] : memref<2x32x64xf32, #tpu.memory_space<vmem>>, vector<1x32x64xf32>
    %26 = vector.shape_cast %25 : vector<1x32x64xf32> to vector<32x64xf32>
    %c0_13 = arith.constant 0 : index
    %c0_14 = arith.constant 0 : index
    %c0_15 = arith.constant 0 : index
    %27 = vector.load %arg6[%c0_13, %c0_14, %c0_15] : memref<2x32x64xf32, #tpu.memory_space<vmem>>, vector<1x32x64xf32>
    %28 = vector.shape_cast %27 : vector<1x32x64xf32> to vector<32x64xf32>
    %c0_16 = arith.constant 0 : index
    %c0_17 = arith.constant 0 : index
    %c0_18 = arith.constant 0 : index
    %29 = vector.load %arg7[%c0_16, %c0_17, %c0_18] : memref<2x4x64xf32, #tpu.memory_space<vmem>>, vector<1x4x64xf32>
    %30 = vector.shape_cast %29 : vector<1x4x64xf32> to vector<4x64xf32>
    %c0_19 = arith.constant 0 : index
    %c0_20 = arith.constant 0 : index
    %c0_21 = arith.constant 0 : index
    %31 = vector.load %arg8[%c0_19, %c0_20, %c0_21] : memref<2x1x64xf32, #tpu.memory_space<vmem>>, vector<1x1x64xf32>
    %32 = vector.shape_cast %31 : vector<1x1x64xf32> to vector<1x64xf32>
    %c0_22 = arith.constant 0 : index
    %c0_23 = arith.constant 0 : index
    %c0_24 = arith.constant 0 : index
    %33 = vector.load %arg9[%c0_22, %c0_23, %c0_24] : memref<2x64x16xf32, #tpu.memory_space<vmem>>, vector<1x64x16xf32>
    %34 = vector.shape_cast %33 : vector<1x64x16xf32> to vector<64x16xf32>
    %c0_25 = arith.constant 0 : index
    %c0_26 = arith.constant 0 : index
    %c0_27 = arith.constant 0 : index
    %35 = vector.load %arg10[%c0_25, %c0_26, %c0_27] : memref<2x64x16xf32, #tpu.memory_space<vmem>>, vector<1x64x16xf32>
    %36 = vector.shape_cast %35 : vector<1x64x16xf32> to vector<64x16xf32>
    %c0_28 = arith.constant 0 : index
    %c0_29 = arith.constant 0 : index
    %c0_30 = arith.constant 0 : index
    %37 = vector.load %arg11[%c0_28, %c0_29, %c0_30] : memref<2x64x64xf32, #tpu.memory_space<vmem>>, vector<1x64x64xf32>
    %38 = vector.shape_cast %37 : vector<1x64x64xf32> to vector<64x64xf32>
    %c0_31 = arith.constant 0 : index
    %c0_32 = arith.constant 0 : index
    %c0_33 = arith.constant 0 : index
    %39 = vector.load %arg12[%c0_31, %c0_32, %c0_33] : memref<2x1x64xf32, #tpu.memory_space<vmem>>, vector<1x1x64xf32>
    %40 = vector.shape_cast %39 : vector<1x1x64xf32> to vector<1x64xf32>
    %c0_34 = arith.constant 0 : index
    %c0_35 = arith.constant 0 : index
    %c0_36 = arith.constant 0 : index
    %41 = vector.load %arg13[%c0_34, %c0_35, %c0_36] : memref<2x16x64xf32, #tpu.memory_space<vmem>>, vector<1x16x64xf32>
    %42 = vector.shape_cast %41 : vector<1x16x64xf32> to vector<16x64xf32>
    %c0_37 = arith.constant 0 : index
    %c0_38 = arith.constant 0 : index
    %c0_39 = arith.constant 0 : index
    %43 = vector.load %arg14[%c0_37, %c0_38, %c0_39] : memref<2x1x64xf32, #tpu.memory_space<vmem>>, vector<1x1x64xf32>
    %44 = vector.shape_cast %43 : vector<1x1x64xf32> to vector<1x64xf32>
    %c0_40 = arith.constant 0 : index
    %c0_41 = arith.constant 0 : index
    %c0_42 = arith.constant 0 : index
    %45 = vector.load %arg15[%c0_40, %c0_41, %c0_42] : memref<2x64x32xf32, #tpu.memory_space<vmem>>, vector<1x64x32xf32>
    %46 = vector.shape_cast %45 : vector<1x64x32xf32> to vector<64x32xf32>
    %cst_43 = arith.constant dense<0.000000e+00> : vector<16x64xf32>
    %47 = tpu.matmul %7, %26, %cst_43 {dimension_numbers = #tpu.dot_dimension_numbers<[1], [0], [0], [1], [0, 0, 1, 1], [], []>} : vector<16x32xf32>, vector<32x64xf32>, vector<16x64xf32> -> vector<16x64xf32>
    %cst_44 = arith.constant dense<0.000000e+00> : vector<16x64xf32>
    %48 = tpu.matmul %7, %28, %cst_44 {dimension_numbers = #tpu.dot_dimension_numbers<[1], [0], [0], [1], [0, 0, 1, 1], [], []>} : vector<16x32xf32>, vector<32x64xf32>, vector<16x64xf32> -> vector<16x64xf32>
    %49 = vector.extract_strided_slice %30 {offsets = [3, 0], sizes = [1, 64], strides = [1, 1]} : vector<4x64xf32> to vector<1x64xf32>
    %50 = vector.broadcast %49 : vector<1x64xf32> to vector<16x64xf32>
    %51 = arith.mulf %47, %50 : vector<16x64xf32>
    %c1_i32_45 = arith.constant 1 : i32
    %52 = tpu.dynamic_rotate %47 by %c1_i32_45 dim 0 : vector<16x64xf32>, i32 -> vector<16x64xf32>
    %c1_i32_46 = arith.constant 1 : i32
    %53 = vector.broadcast %c1_i32_46 : i32 to vector<16x64xi32>
    %54 = arith.cmpi sge, %24, %53 : vector<16x64xi32>
    %cst_47 = arith.constant 0.000000e+00 : f32
    %55 = vector.broadcast %cst_47 : f32 to vector<16x64xf32>
    %56 = arith.select %54, %52, %55 : vector<16x64xi1>, vector<16x64xf32>
    %57 = vector.extract_strided_slice %30 {offsets = [2, 0], sizes = [1, 64], strides = [1, 1]} : vector<4x64xf32> to vector<1x64xf32>
    %58 = vector.broadcast %57 : vector<1x64xf32> to vector<16x64xf32>
    %59 = arith.mulf %56, %58 : vector<16x64xf32>
    %60 = arith.addf %51, %59 : vector<16x64xf32>
    %c2_i32 = arith.constant 2 : i32
    %61 = tpu.dynamic_rotate %47 by %c2_i32 dim 0 : vector<16x64xf32>, i32 -> vector<16x64xf32>
    %c2_i32_48 = arith.constant 2 : i32
    %62 = vector.broadcast %c2_i32_48 : i32 to vector<16x64xi32>
    %63 = arith.cmpi sge, %24, %62 : vector<16x64xi32>
    %cst_49 = arith.constant 0.000000e+00 : f32
    %64 = vector.broadcast %cst_49 : f32 to vector<16x64xf32>
    %65 = arith.select %63, %61, %64 : vector<16x64xi1>, vector<16x64xf32>
    %66 = vector.extract_strided_slice %30 {offsets = [1, 0], sizes = [1, 64], strides = [1, 1]} : vector<4x64xf32> to vector<1x64xf32>
    %67 = vector.broadcast %66 : vector<1x64xf32> to vector<16x64xf32>
    %68 = arith.mulf %65, %67 : vector<16x64xf32>
    %69 = arith.addf %60, %68 : vector<16x64xf32>
    %c3_i32 = arith.constant 3 : i32
    %70 = tpu.dynamic_rotate %47 by %c3_i32 dim 0 : vector<16x64xf32>, i32 -> vector<16x64xf32>
    %c3_i32_50 = arith.constant 3 : i32
    %71 = vector.broadcast %c3_i32_50 : i32 to vector<16x64xi32>
    %72 = arith.cmpi sge, %24, %71 : vector<16x64xi32>
    %cst_51 = arith.constant 0.000000e+00 : f32
    %73 = vector.broadcast %cst_51 : f32 to vector<16x64xf32>
    %74 = arith.select %72, %70, %73 : vector<16x64xi1>, vector<16x64xf32>
    %75 = vector.extract_strided_slice %30 {offsets = [0, 0], sizes = [1, 64], strides = [1, 1]} : vector<4x64xf32> to vector<1x64xf32>
    %76 = vector.broadcast %75 : vector<1x64xf32> to vector<16x64xf32>
    %77 = arith.mulf %74, %76 : vector<16x64xf32>
    %78 = arith.addf %69, %77 : vector<16x64xf32>
    %79 = vector.broadcast %32 : vector<1x64xf32> to vector<16x64xf32>
    %80 = arith.addf %78, %79 : vector<16x64xf32>
    %cst_52 = arith.constant 0.000000e+00 : f32
    %81 = vector.broadcast %cst_52 : f32 to vector<16x64xf32>
    %82 = arith.subf %81, %80 : vector<16x64xf32>
    %83 = math.exp %82 : vector<16x64xf32>
    %cst_53 = arith.constant 1.000000e+00 : f32
    %84 = vector.broadcast %cst_53 : f32 to vector<16x64xf32>
    %85 = arith.addf %84, %83 : vector<16x64xf32>
    %86 = tpu.reciprocal %85 {approx = true} : vector<16x64xf32> -> vector<16x64xf32>
    %87 = arith.mulf %80, %86 : vector<16x64xf32>
    %cst_54 = arith.constant dense<0.000000e+00> : vector<16x16xf32>
    %88 = tpu.matmul %87, %34, %cst_54 {dimension_numbers = #tpu.dot_dimension_numbers<[1], [0], [0], [1], [0, 0, 1, 1], [], []>} : vector<16x64xf32>, vector<64x16xf32>, vector<16x16xf32> -> vector<16x16xf32>
    %cst_55 = arith.constant dense<0.000000e+00> : vector<16x16xf32>
    %89 = tpu.matmul %87, %36, %cst_55 {dimension_numbers = #tpu.dot_dimension_numbers<[1], [0], [0], [1], [0, 0, 1, 1], [], []>} : vector<16x64xf32>, vector<64x16xf32>, vector<16x16xf32> -> vector<16x16xf32>
    %cst_56 = arith.constant dense<0.000000e+00> : vector<16x64xf32>
    %90 = tpu.matmul %87, %38, %cst_56 {dimension_numbers = #tpu.dot_dimension_numbers<[1], [0], [0], [1], [0, 0, 1, 1], [], []>} : vector<16x64xf32>, vector<64x64xf32>, vector<16x64xf32> -> vector<16x64xf32>
    %91 = vector.broadcast %40 : vector<1x64xf32> to vector<16x64xf32>
    %92 = arith.addf %90, %91 : vector<16x64xf32>
    %93 = math.exp %92 : vector<16x64xf32>
    %94 = math.log1p %93 : vector<16x64xf32>
    %95 = vector.shape_cast %94 : vector<16x64xf32> to vector<16x1x64xf32>
    %96 = vector.shape_cast %42 : vector<16x64xf32> to vector<1x16x64xf32>
    %97 = vector.broadcast %95 : vector<16x1x64xf32> to vector<16x16x64xf32>
    %98 = vector.broadcast %96 : vector<1x16x64xf32> to vector<16x16x64xf32>
    %99 = arith.mulf %97, %98 : vector<16x16x64xf32>
    %100 = math.exp %99 : vector<16x16x64xf32>
    %101 = arith.mulf %94, %87 : vector<16x64xf32>
    %102 = vector.shape_cast %101 : vector<16x64xf32> to vector<16x1x64xf32>
    %103 = vector.shape_cast %88 : vector<16x16xf32> to vector<16x16x1xf32>
    %104 = vector.broadcast %102 : vector<16x1x64xf32> to vector<16x16x64xf32>
    %105 = vector.broadcast %103 : vector<16x16x1xf32> to vector<16x16x64xf32>
    %106 = arith.mulf %104, %105 : vector<16x16x64xf32>
    %107 = vector.shape_cast %100 : vector<16x16x64xf32> to vector<2x8x16x64xf32>
    %108 = vector.shape_cast %106 : vector<16x16x64xf32> to vector<2x8x16x64xf32>
    %109 = vector.shape_cast %89 : vector<16x16xf32> to vector<2x8x16xf32>
    %cst_57 = arith.constant 0.000000e+00 : f32
    %110 = vector.broadcast %cst_57 : f32 to vector<2x16x64xf32>
    %111 = vector.extract_strided_slice %107 {offsets = [0, 0, 0, 0], sizes = [2, 1, 16, 64], strides = [1, 1, 1, 1]} : vector<2x8x16x64xf32> to vector<2x1x16x64xf32>
    %112 = vector.shape_cast %111 : vector<2x1x16x64xf32> to vector<2x16x64xf32>
    %113 = arith.mulf %112, %110 : vector<2x16x64xf32>
    %114 = vector.extract_strided_slice %108 {offsets = [0, 0, 0, 0], sizes = [2, 1, 16, 64], strides = [1, 1, 1, 1]} : vector<2x8x16x64xf32> to vector<2x1x16x64xf32>
    %115 = vector.shape_cast %114 : vector<2x1x16x64xf32> to vector<2x16x64xf32>
    %116 = arith.addf %113, %115 : vector<2x16x64xf32>
    %117 = vector.extract_strided_slice %107 {offsets = [0, 1, 0, 0], sizes = [2, 1, 16, 64], strides = [1, 1, 1, 1]} : vector<2x8x16x64xf32> to vector<2x1x16x64xf32>
    %118 = vector.shape_cast %117 : vector<2x1x16x64xf32> to vector<2x16x64xf32>
    %119 = arith.mulf %118, %116 : vector<2x16x64xf32>
    %120 = vector.extract_strided_slice %108 {offsets = [0, 1, 0, 0], sizes = [2, 1, 16, 64], strides = [1, 1, 1, 1]} : vector<2x8x16x64xf32> to vector<2x1x16x64xf32>
    %121 = vector.shape_cast %120 : vector<2x1x16x64xf32> to vector<2x16x64xf32>
    %122 = arith.addf %119, %121 : vector<2x16x64xf32>
    %123 = vector.extract_strided_slice %107 {offsets = [0, 2, 0, 0], sizes = [2, 1, 16, 64], strides = [1, 1, 1, 1]} : vector<2x8x16x64xf32> to vector<2x1x16x64xf32>
    %124 = vector.shape_cast %123 : vector<2x1x16x64xf32> to vector<2x16x64xf32>
    %125 = arith.mulf %124, %122 : vector<2x16x64xf32>
    %126 = vector.extract_strided_slice %108 {offsets = [0, 2, 0, 0], sizes = [2, 1, 16, 64], strides = [1, 1, 1, 1]} : vector<2x8x16x64xf32> to vector<2x1x16x64xf32>
    %127 = vector.shape_cast %126 : vector<2x1x16x64xf32> to vector<2x16x64xf32>
    %128 = arith.addf %125, %127 : vector<2x16x64xf32>
    %129 = vector.extract_strided_slice %107 {offsets = [0, 3, 0, 0], sizes = [2, 1, 16, 64], strides = [1, 1, 1, 1]} : vector<2x8x16x64xf32> to vector<2x1x16x64xf32>
    %130 = vector.shape_cast %129 : vector<2x1x16x64xf32> to vector<2x16x64xf32>
    %131 = arith.mulf %130, %128 : vector<2x16x64xf32>
    %132 = vector.extract_strided_slice %108 {offsets = [0, 3, 0, 0], sizes = [2, 1, 16, 64], strides = [1, 1, 1, 1]} : vector<2x8x16x64xf32> to vector<2x1x16x64xf32>
    %133 = vector.shape_cast %132 : vector<2x1x16x64xf32> to vector<2x16x64xf32>
    %134 = arith.addf %131, %133 : vector<2x16x64xf32>
    %135 = vector.extract_strided_slice %107 {offsets = [0, 4, 0, 0], sizes = [2, 1, 16, 64], strides = [1, 1, 1, 1]} : vector<2x8x16x64xf32> to vector<2x1x16x64xf32>
    %136 = vector.shape_cast %135 : vector<2x1x16x64xf32> to vector<2x16x64xf32>
    %137 = arith.mulf %136, %134 : vector<2x16x64xf32>
    %138 = vector.extract_strided_slice %108 {offsets = [0, 4, 0, 0], sizes = [2, 1, 16, 64], strides = [1, 1, 1, 1]} : vector<2x8x16x64xf32> to vector<2x1x16x64xf32>
    %139 = vector.shape_cast %138 : vector<2x1x16x64xf32> to vector<2x16x64xf32>
    %140 = arith.addf %137, %139 : vector<2x16x64xf32>
    %141 = vector.extract_strided_slice %107 {offsets = [0, 5, 0, 0], sizes = [2, 1, 16, 64], strides = [1, 1, 1, 1]} : vector<2x8x16x64xf32> to vector<2x1x16x64xf32>
    %142 = vector.shape_cast %141 : vector<2x1x16x64xf32> to vector<2x16x64xf32>
    %143 = arith.mulf %142, %140 : vector<2x16x64xf32>
    %144 = vector.extract_strided_slice %108 {offsets = [0, 5, 0, 0], sizes = [2, 1, 16, 64], strides = [1, 1, 1, 1]} : vector<2x8x16x64xf32> to vector<2x1x16x64xf32>
    %145 = vector.shape_cast %144 : vector<2x1x16x64xf32> to vector<2x16x64xf32>
    %146 = arith.addf %143, %145 : vector<2x16x64xf32>
    %147 = vector.extract_strided_slice %107 {offsets = [0, 6, 0, 0], sizes = [2, 1, 16, 64], strides = [1, 1, 1, 1]} : vector<2x8x16x64xf32> to vector<2x1x16x64xf32>
    %148 = vector.shape_cast %147 : vector<2x1x16x64xf32> to vector<2x16x64xf32>
    %149 = arith.mulf %148, %146 : vector<2x16x64xf32>
    %150 = vector.extract_strided_slice %108 {offsets = [0, 6, 0, 0], sizes = [2, 1, 16, 64], strides = [1, 1, 1, 1]} : vector<2x8x16x64xf32> to vector<2x1x16x64xf32>
    %151 = vector.shape_cast %150 : vector<2x1x16x64xf32> to vector<2x16x64xf32>
    %152 = arith.addf %149, %151 : vector<2x16x64xf32>
    %153 = vector.extract_strided_slice %107 {offsets = [0, 7, 0, 0], sizes = [2, 1, 16, 64], strides = [1, 1, 1, 1]} : vector<2x8x16x64xf32> to vector<2x1x16x64xf32>
    %154 = vector.shape_cast %153 : vector<2x1x16x64xf32> to vector<2x16x64xf32>
    %155 = arith.mulf %154, %152 : vector<2x16x64xf32>
    %156 = vector.extract_strided_slice %108 {offsets = [0, 7, 0, 0], sizes = [2, 1, 16, 64], strides = [1, 1, 1, 1]} : vector<2x8x16x64xf32> to vector<2x1x16x64xf32>
    %157 = vector.shape_cast %156 : vector<2x1x16x64xf32> to vector<2x16x64xf32>
    %158 = arith.addf %155, %157 : vector<2x16x64xf32>
    %159 = vector.shape_cast %116 : vector<2x16x64xf32> to vector<2x1x16x64xf32>
    %160 = vector.shape_cast %122 : vector<2x16x64xf32> to vector<2x1x16x64xf32>
    %161 = vector.shape_cast %128 : vector<2x16x64xf32> to vector<2x1x16x64xf32>
    %162 = vector.shape_cast %134 : vector<2x16x64xf32> to vector<2x1x16x64xf32>
    %163 = vector.shape_cast %140 : vector<2x16x64xf32> to vector<2x1x16x64xf32>
    %164 = vector.shape_cast %146 : vector<2x16x64xf32> to vector<2x1x16x64xf32>
    %165 = vector.shape_cast %152 : vector<2x16x64xf32> to vector<2x1x16x64xf32>
    %166 = vector.shape_cast %158 : vector<2x16x64xf32> to vector<2x1x16x64xf32>
    %167 = tpu.concatenate %159, %160, %161, %162, %163, %164, %165, %166 in 1 : vector<2x1x16x64xf32>, vector<2x1x16x64xf32>, vector<2x1x16x64xf32>, vector<2x1x16x64xf32>, vector<2x1x16x64xf32>, vector<2x1x16x64xf32>, vector<2x1x16x64xf32>, vector<2x1x16x64xf32> -> vector<2x8x16x64xf32>
    %168 = vector.shape_cast %109 : vector<2x8x16xf32> to vector<2x8x16x1xf32>
    %169 = vector.broadcast %168 : vector<2x8x16x1xf32> to vector<2x8x16x64xf32>
    %170 = arith.mulf %167, %169 : vector<2x8x16x64xf32>
    %cst_58 = arith.constant dense<0.000000e+00> : vector<2x8x64xf32>
    %171 = vector.multi_reduction <add>, %170, %cst_58 [2] : vector<2x8x16x64xf32> to vector<2x8x64xf32>
    %172 = vector.shape_cast %171 : vector<2x8x64xf32> to vector<16x64xf32>
    %173 = vector.broadcast %44 : vector<1x64xf32> to vector<16x64xf32>
    %174 = arith.mulf %87, %173 : vector<16x64xf32>
    %175 = arith.addf %172, %174 : vector<16x64xf32>
    %cst_59 = arith.constant 0.000000e+00 : f32
    %176 = vector.broadcast %cst_59 : f32 to vector<16x64xf32>
    %177 = arith.subf %176, %48 : vector<16x64xf32>
    %178 = math.exp %177 : vector<16x64xf32>
    %cst_60 = arith.constant 1.000000e+00 : f32
    %179 = vector.broadcast %cst_60 : f32 to vector<16x64xf32>
    %180 = arith.addf %179, %178 : vector<16x64xf32>
    %181 = tpu.reciprocal %180 {approx = true} : vector<16x64xf32> -> vector<16x64xf32>
    %182 = arith.mulf %48, %181 : vector<16x64xf32>
    %183 = arith.mulf %175, %182 : vector<16x64xf32>
    %cst_61 = arith.constant dense<0.000000e+00> : vector<16x32xf32>
    %184 = tpu.matmul %183, %46, %cst_61 {dimension_numbers = #tpu.dot_dimension_numbers<[1], [0], [0], [1], [0, 0, 1, 1], [], []>} : vector<16x64xf32>, vector<64x32xf32>, vector<16x32xf32> -> vector<16x32xf32>
    %c1 = arith.constant 1 : index
    %c0_62 = arith.constant 0 : index
    %c0_63 = arith.constant 0 : index
    %185 = vector.load %arg5[%c1, %c0_62, %c0_63] : memref<2x32x64xf32, #tpu.memory_space<vmem>>, vector<1x32x64xf32>
    %186 = vector.shape_cast %185 : vector<1x32x64xf32> to vector<32x64xf32>
    %c1_64 = arith.constant 1 : index
    %c0_65 = arith.constant 0 : index
    %c0_66 = arith.constant 0 : index
    %187 = vector.load %arg6[%c1_64, %c0_65, %c0_66] : memref<2x32x64xf32, #tpu.memory_space<vmem>>, vector<1x32x64xf32>
    %188 = vector.shape_cast %187 : vector<1x32x64xf32> to vector<32x64xf32>
    %c1_67 = arith.constant 1 : index
    %c0_68 = arith.constant 0 : index
    %c0_69 = arith.constant 0 : index
    %189 = vector.load %arg7[%c1_67, %c0_68, %c0_69] : memref<2x4x64xf32, #tpu.memory_space<vmem>>, vector<1x4x64xf32>
    %190 = vector.shape_cast %189 : vector<1x4x64xf32> to vector<4x64xf32>
    %c1_70 = arith.constant 1 : index
    %c0_71 = arith.constant 0 : index
    %c0_72 = arith.constant 0 : index
    %191 = vector.load %arg8[%c1_70, %c0_71, %c0_72] : memref<2x1x64xf32, #tpu.memory_space<vmem>>, vector<1x1x64xf32>
    %192 = vector.shape_cast %191 : vector<1x1x64xf32> to vector<1x64xf32>
    %c1_73 = arith.constant 1 : index
    %c0_74 = arith.constant 0 : index
    %c0_75 = arith.constant 0 : index
    %193 = vector.load %arg9[%c1_73, %c0_74, %c0_75] : memref<2x64x16xf32, #tpu.memory_space<vmem>>, vector<1x64x16xf32>
    %194 = vector.shape_cast %193 : vector<1x64x16xf32> to vector<64x16xf32>
    %c1_76 = arith.constant 1 : index
    %c0_77 = arith.constant 0 : index
    %c0_78 = arith.constant 0 : index
    %195 = vector.load %arg10[%c1_76, %c0_77, %c0_78] : memref<2x64x16xf32, #tpu.memory_space<vmem>>, vector<1x64x16xf32>
    %196 = vector.shape_cast %195 : vector<1x64x16xf32> to vector<64x16xf32>
    %c1_79 = arith.constant 1 : index
    %c0_80 = arith.constant 0 : index
    %c0_81 = arith.constant 0 : index
    %197 = vector.load %arg11[%c1_79, %c0_80, %c0_81] : memref<2x64x64xf32, #tpu.memory_space<vmem>>, vector<1x64x64xf32>
    %198 = vector.shape_cast %197 : vector<1x64x64xf32> to vector<64x64xf32>
    %c1_82 = arith.constant 1 : index
    %c0_83 = arith.constant 0 : index
    %c0_84 = arith.constant 0 : index
    %199 = vector.load %arg12[%c1_82, %c0_83, %c0_84] : memref<2x1x64xf32, #tpu.memory_space<vmem>>, vector<1x1x64xf32>
    %200 = vector.shape_cast %199 : vector<1x1x64xf32> to vector<1x64xf32>
    %c1_85 = arith.constant 1 : index
    %c0_86 = arith.constant 0 : index
    %c0_87 = arith.constant 0 : index
    %201 = vector.load %arg13[%c1_85, %c0_86, %c0_87] : memref<2x16x64xf32, #tpu.memory_space<vmem>>, vector<1x16x64xf32>
    %202 = vector.shape_cast %201 : vector<1x16x64xf32> to vector<16x64xf32>
    %c1_88 = arith.constant 1 : index
    %c0_89 = arith.constant 0 : index
    %c0_90 = arith.constant 0 : index
    %203 = vector.load %arg14[%c1_88, %c0_89, %c0_90] : memref<2x1x64xf32, #tpu.memory_space<vmem>>, vector<1x1x64xf32>
    %204 = vector.shape_cast %203 : vector<1x1x64xf32> to vector<1x64xf32>
    %c1_91 = arith.constant 1 : index
    %c0_92 = arith.constant 0 : index
    %c0_93 = arith.constant 0 : index
    %205 = vector.load %arg15[%c1_91, %c0_92, %c0_93] : memref<2x64x32xf32, #tpu.memory_space<vmem>>, vector<1x64x32xf32>
    %206 = vector.shape_cast %205 : vector<1x64x32xf32> to vector<64x32xf32>
    %cst_94 = arith.constant dense<0.000000e+00> : vector<16x64xf32>
    %207 = tpu.matmul %184, %186, %cst_94 {dimension_numbers = #tpu.dot_dimension_numbers<[1], [0], [0], [1], [0, 0, 1, 1], [], []>} : vector<16x32xf32>, vector<32x64xf32>, vector<16x64xf32> -> vector<16x64xf32>
    %cst_95 = arith.constant dense<0.000000e+00> : vector<16x64xf32>
    %208 = tpu.matmul %184, %188, %cst_95 {dimension_numbers = #tpu.dot_dimension_numbers<[1], [0], [0], [1], [0, 0, 1, 1], [], []>} : vector<16x32xf32>, vector<32x64xf32>, vector<16x64xf32> -> vector<16x64xf32>
    %209 = vector.extract_strided_slice %190 {offsets = [3, 0], sizes = [1, 64], strides = [1, 1]} : vector<4x64xf32> to vector<1x64xf32>
    %210 = vector.broadcast %209 : vector<1x64xf32> to vector<16x64xf32>
    %211 = arith.mulf %207, %210 : vector<16x64xf32>
    %c1_i32_96 = arith.constant 1 : i32
    %212 = tpu.dynamic_rotate %207 by %c1_i32_96 dim 0 : vector<16x64xf32>, i32 -> vector<16x64xf32>
    %c1_i32_97 = arith.constant 1 : i32
    %213 = vector.broadcast %c1_i32_97 : i32 to vector<16x64xi32>
    %214 = arith.cmpi sge, %24, %213 : vector<16x64xi32>
    %cst_98 = arith.constant 0.000000e+00 : f32
    %215 = vector.broadcast %cst_98 : f32 to vector<16x64xf32>
    %216 = arith.select %214, %212, %215 : vector<16x64xi1>, vector<16x64xf32>
    %217 = vector.extract_strided_slice %190 {offsets = [2, 0], sizes = [1, 64], strides = [1, 1]} : vector<4x64xf32> to vector<1x64xf32>
    %218 = vector.broadcast %217 : vector<1x64xf32> to vector<16x64xf32>
    %219 = arith.mulf %216, %218 : vector<16x64xf32>
    %220 = arith.addf %211, %219 : vector<16x64xf32>
    %c2_i32_99 = arith.constant 2 : i32
    %221 = tpu.dynamic_rotate %207 by %c2_i32_99 dim 0 : vector<16x64xf32>, i32 -> vector<16x64xf32>
    %c2_i32_100 = arith.constant 2 : i32
    %222 = vector.broadcast %c2_i32_100 : i32 to vector<16x64xi32>
    %223 = arith.cmpi sge, %24, %222 : vector<16x64xi32>
    %cst_101 = arith.constant 0.000000e+00 : f32
    %224 = vector.broadcast %cst_101 : f32 to vector<16x64xf32>
    %225 = arith.select %223, %221, %224 : vector<16x64xi1>, vector<16x64xf32>
    %226 = vector.extract_strided_slice %190 {offsets = [1, 0], sizes = [1, 64], strides = [1, 1]} : vector<4x64xf32> to vector<1x64xf32>
    %227 = vector.broadcast %226 : vector<1x64xf32> to vector<16x64xf32>
    %228 = arith.mulf %225, %227 : vector<16x64xf32>
    %229 = arith.addf %220, %228 : vector<16x64xf32>
    %c3_i32_102 = arith.constant 3 : i32
    %230 = tpu.dynamic_rotate %207 by %c3_i32_102 dim 0 : vector<16x64xf32>, i32 -> vector<16x64xf32>
    %c3_i32_103 = arith.constant 3 : i32
    %231 = vector.broadcast %c3_i32_103 : i32 to vector<16x64xi32>
    %232 = arith.cmpi sge, %24, %231 : vector<16x64xi32>
    %cst_104 = arith.constant 0.000000e+00 : f32
    %233 = vector.broadcast %cst_104 : f32 to vector<16x64xf32>
    %234 = arith.select %232, %230, %233 : vector<16x64xi1>, vector<16x64xf32>
    %235 = vector.extract_strided_slice %190 {offsets = [0, 0], sizes = [1, 64], strides = [1, 1]} : vector<4x64xf32> to vector<1x64xf32>
    %236 = vector.broadcast %235 : vector<1x64xf32> to vector<16x64xf32>
    %237 = arith.mulf %234, %236 : vector<16x64xf32>
    %238 = arith.addf %229, %237 : vector<16x64xf32>
    %239 = vector.broadcast %192 : vector<1x64xf32> to vector<16x64xf32>
    %240 = arith.addf %238, %239 : vector<16x64xf32>
    %cst_105 = arith.constant 0.000000e+00 : f32
    %241 = vector.broadcast %cst_105 : f32 to vector<16x64xf32>
    %242 = arith.subf %241, %240 : vector<16x64xf32>
    %243 = math.exp %242 : vector<16x64xf32>
    %cst_106 = arith.constant 1.000000e+00 : f32
    %244 = vector.broadcast %cst_106 : f32 to vector<16x64xf32>
    %245 = arith.addf %244, %243 : vector<16x64xf32>
    %246 = tpu.reciprocal %245 {approx = true} : vector<16x64xf32> -> vector<16x64xf32>
    %247 = arith.mulf %240, %246 : vector<16x64xf32>
    %cst_107 = arith.constant dense<0.000000e+00> : vector<16x16xf32>
    %248 = tpu.matmul %247, %194, %cst_107 {dimension_numbers = #tpu.dot_dimension_numbers<[1], [0], [0], [1], [0, 0, 1, 1], [], []>} : vector<16x64xf32>, vector<64x16xf32>, vector<16x16xf32> -> vector<16x16xf32>
    %cst_108 = arith.constant dense<0.000000e+00> : vector<16x16xf32>
    %249 = tpu.matmul %247, %196, %cst_108 {dimension_numbers = #tpu.dot_dimension_numbers<[1], [0], [0], [1], [0, 0, 1, 1], [], []>} : vector<16x64xf32>, vector<64x16xf32>, vector<16x16xf32> -> vector<16x16xf32>
    %cst_109 = arith.constant dense<0.000000e+00> : vector<16x64xf32>
    %250 = tpu.matmul %247, %198, %cst_109 {dimension_numbers = #tpu.dot_dimension_numbers<[1], [0], [0], [1], [0, 0, 1, 1], [], []>} : vector<16x64xf32>, vector<64x64xf32>, vector<16x64xf32> -> vector<16x64xf32>
    %251 = vector.broadcast %200 : vector<1x64xf32> to vector<16x64xf32>
    %252 = arith.addf %250, %251 : vector<16x64xf32>
    %253 = math.exp %252 : vector<16x64xf32>
    %254 = math.log1p %253 : vector<16x64xf32>
    %255 = vector.shape_cast %254 : vector<16x64xf32> to vector<16x1x64xf32>
    %256 = vector.shape_cast %202 : vector<16x64xf32> to vector<1x16x64xf32>
    %257 = vector.broadcast %255 : vector<16x1x64xf32> to vector<16x16x64xf32>
    %258 = vector.broadcast %256 : vector<1x16x64xf32> to vector<16x16x64xf32>
    %259 = arith.mulf %257, %258 : vector<16x16x64xf32>
    %260 = math.exp %259 : vector<16x16x64xf32>
    %261 = arith.mulf %254, %247 : vector<16x64xf32>
    %262 = vector.shape_cast %261 : vector<16x64xf32> to vector<16x1x64xf32>
    %263 = vector.shape_cast %248 : vector<16x16xf32> to vector<16x16x1xf32>
    %264 = vector.broadcast %262 : vector<16x1x64xf32> to vector<16x16x64xf32>
    %265 = vector.broadcast %263 : vector<16x16x1xf32> to vector<16x16x64xf32>
    %266 = arith.mulf %264, %265 : vector<16x16x64xf32>
    %267 = vector.shape_cast %260 : vector<16x16x64xf32> to vector<2x8x16x64xf32>
    %268 = vector.shape_cast %266 : vector<16x16x64xf32> to vector<2x8x16x64xf32>
    %269 = vector.shape_cast %249 : vector<16x16xf32> to vector<2x8x16xf32>
    %cst_110 = arith.constant 0.000000e+00 : f32
    %270 = vector.broadcast %cst_110 : f32 to vector<2x16x64xf32>
    %271 = vector.extract_strided_slice %267 {offsets = [0, 0, 0, 0], sizes = [2, 1, 16, 64], strides = [1, 1, 1, 1]} : vector<2x8x16x64xf32> to vector<2x1x16x64xf32>
    %272 = vector.shape_cast %271 : vector<2x1x16x64xf32> to vector<2x16x64xf32>
    %273 = arith.mulf %272, %270 : vector<2x16x64xf32>
    %274 = vector.extract_strided_slice %268 {offsets = [0, 0, 0, 0], sizes = [2, 1, 16, 64], strides = [1, 1, 1, 1]} : vector<2x8x16x64xf32> to vector<2x1x16x64xf32>
    %275 = vector.shape_cast %274 : vector<2x1x16x64xf32> to vector<2x16x64xf32>
    %276 = arith.addf %273, %275 : vector<2x16x64xf32>
    %277 = vector.extract_strided_slice %267 {offsets = [0, 1, 0, 0], sizes = [2, 1, 16, 64], strides = [1, 1, 1, 1]} : vector<2x8x16x64xf32> to vector<2x1x16x64xf32>
    %278 = vector.shape_cast %277 : vector<2x1x16x64xf32> to vector<2x16x64xf32>
    %279 = arith.mulf %278, %276 : vector<2x16x64xf32>
    %280 = vector.extract_strided_slice %268 {offsets = [0, 1, 0, 0], sizes = [2, 1, 16, 64], strides = [1, 1, 1, 1]} : vector<2x8x16x64xf32> to vector<2x1x16x64xf32>
    %281 = vector.shape_cast %280 : vector<2x1x16x64xf32> to vector<2x16x64xf32>
    %282 = arith.addf %279, %281 : vector<2x16x64xf32>
    %283 = vector.extract_strided_slice %267 {offsets = [0, 2, 0, 0], sizes = [2, 1, 16, 64], strides = [1, 1, 1, 1]} : vector<2x8x16x64xf32> to vector<2x1x16x64xf32>
    %284 = vector.shape_cast %283 : vector<2x1x16x64xf32> to vector<2x16x64xf32>
    %285 = arith.mulf %284, %282 : vector<2x16x64xf32>
    %286 = vector.extract_strided_slice %268 {offsets = [0, 2, 0, 0], sizes = [2, 1, 16, 64], strides = [1, 1, 1, 1]} : vector<2x8x16x64xf32> to vector<2x1x16x64xf32>
    %287 = vector.shape_cast %286 : vector<2x1x16x64xf32> to vector<2x16x64xf32>
    %288 = arith.addf %285, %287 : vector<2x16x64xf32>
    %289 = vector.extract_strided_slice %267 {offsets = [0, 3, 0, 0], sizes = [2, 1, 16, 64], strides = [1, 1, 1, 1]} : vector<2x8x16x64xf32> to vector<2x1x16x64xf32>
    %290 = vector.shape_cast %289 : vector<2x1x16x64xf32> to vector<2x16x64xf32>
    %291 = arith.mulf %290, %288 : vector<2x16x64xf32>
    %292 = vector.extract_strided_slice %268 {offsets = [0, 3, 0, 0], sizes = [2, 1, 16, 64], strides = [1, 1, 1, 1]} : vector<2x8x16x64xf32> to vector<2x1x16x64xf32>
    %293 = vector.shape_cast %292 : vector<2x1x16x64xf32> to vector<2x16x64xf32>
    %294 = arith.addf %291, %293 : vector<2x16x64xf32>
    %295 = vector.extract_strided_slice %267 {offsets = [0, 4, 0, 0], sizes = [2, 1, 16, 64], strides = [1, 1, 1, 1]} : vector<2x8x16x64xf32> to vector<2x1x16x64xf32>
    %296 = vector.shape_cast %295 : vector<2x1x16x64xf32> to vector<2x16x64xf32>
    %297 = arith.mulf %296, %294 : vector<2x16x64xf32>
    %298 = vector.extract_strided_slice %268 {offsets = [0, 4, 0, 0], sizes = [2, 1, 16, 64], strides = [1, 1, 1, 1]} : vector<2x8x16x64xf32> to vector<2x1x16x64xf32>
    %299 = vector.shape_cast %298 : vector<2x1x16x64xf32> to vector<2x16x64xf32>
    %300 = arith.addf %297, %299 : vector<2x16x64xf32>
    %301 = vector.extract_strided_slice %267 {offsets = [0, 5, 0, 0], sizes = [2, 1, 16, 64], strides = [1, 1, 1, 1]} : vector<2x8x16x64xf32> to vector<2x1x16x64xf32>
    %302 = vector.shape_cast %301 : vector<2x1x16x64xf32> to vector<2x16x64xf32>
    %303 = arith.mulf %302, %300 : vector<2x16x64xf32>
    %304 = vector.extract_strided_slice %268 {offsets = [0, 5, 0, 0], sizes = [2, 1, 16, 64], strides = [1, 1, 1, 1]} : vector<2x8x16x64xf32> to vector<2x1x16x64xf32>
    %305 = vector.shape_cast %304 : vector<2x1x16x64xf32> to vector<2x16x64xf32>
    %306 = arith.addf %303, %305 : vector<2x16x64xf32>
    %307 = vector.extract_strided_slice %267 {offsets = [0, 6, 0, 0], sizes = [2, 1, 16, 64], strides = [1, 1, 1, 1]} : vector<2x8x16x64xf32> to vector<2x1x16x64xf32>
    %308 = vector.shape_cast %307 : vector<2x1x16x64xf32> to vector<2x16x64xf32>
    %309 = arith.mulf %308, %306 : vector<2x16x64xf32>
    %310 = vector.extract_strided_slice %268 {offsets = [0, 6, 0, 0], sizes = [2, 1, 16, 64], strides = [1, 1, 1, 1]} : vector<2x8x16x64xf32> to vector<2x1x16x64xf32>
    %311 = vector.shape_cast %310 : vector<2x1x16x64xf32> to vector<2x16x64xf32>
    %312 = arith.addf %309, %311 : vector<2x16x64xf32>
    %313 = vector.extract_strided_slice %267 {offsets = [0, 7, 0, 0], sizes = [2, 1, 16, 64], strides = [1, 1, 1, 1]} : vector<2x8x16x64xf32> to vector<2x1x16x64xf32>
    %314 = vector.shape_cast %313 : vector<2x1x16x64xf32> to vector<2x16x64xf32>
    %315 = arith.mulf %314, %312 : vector<2x16x64xf32>
    %316 = vector.extract_strided_slice %268 {offsets = [0, 7, 0, 0], sizes = [2, 1, 16, 64], strides = [1, 1, 1, 1]} : vector<2x8x16x64xf32> to vector<2x1x16x64xf32>
    %317 = vector.shape_cast %316 : vector<2x1x16x64xf32> to vector<2x16x64xf32>
    %318 = arith.addf %315, %317 : vector<2x16x64xf32>
    %319 = vector.shape_cast %276 : vector<2x16x64xf32> to vector<2x1x16x64xf32>
    %320 = vector.shape_cast %282 : vector<2x16x64xf32> to vector<2x1x16x64xf32>
    %321 = vector.shape_cast %288 : vector<2x16x64xf32> to vector<2x1x16x64xf32>
    %322 = vector.shape_cast %294 : vector<2x16x64xf32> to vector<2x1x16x64xf32>
    %323 = vector.shape_cast %300 : vector<2x16x64xf32> to vector<2x1x16x64xf32>
    %324 = vector.shape_cast %306 : vector<2x16x64xf32> to vector<2x1x16x64xf32>
    %325 = vector.shape_cast %312 : vector<2x16x64xf32> to vector<2x1x16x64xf32>
    %326 = vector.shape_cast %318 : vector<2x16x64xf32> to vector<2x1x16x64xf32>
    %327 = tpu.concatenate %319, %320, %321, %322, %323, %324, %325, %326 in 1 : vector<2x1x16x64xf32>, vector<2x1x16x64xf32>, vector<2x1x16x64xf32>, vector<2x1x16x64xf32>, vector<2x1x16x64xf32>, vector<2x1x16x64xf32>, vector<2x1x16x64xf32>, vector<2x1x16x64xf32> -> vector<2x8x16x64xf32>
    %328 = vector.shape_cast %269 : vector<2x8x16xf32> to vector<2x8x16x1xf32>
    %329 = vector.broadcast %328 : vector<2x8x16x1xf32> to vector<2x8x16x64xf32>
    %330 = arith.mulf %327, %329 : vector<2x8x16x64xf32>
    %cst_111 = arith.constant dense<0.000000e+00> : vector<2x8x64xf32>
    %331 = vector.multi_reduction <add>, %330, %cst_111 [2] : vector<2x8x16x64xf32> to vector<2x8x64xf32>
    %332 = vector.shape_cast %331 : vector<2x8x64xf32> to vector<16x64xf32>
    %333 = vector.broadcast %204 : vector<1x64xf32> to vector<16x64xf32>
    %334 = arith.mulf %247, %333 : vector<16x64xf32>
    %335 = arith.addf %332, %334 : vector<16x64xf32>
    %cst_112 = arith.constant 0.000000e+00 : f32
    %336 = vector.broadcast %cst_112 : f32 to vector<16x64xf32>
    %337 = arith.subf %336, %208 : vector<16x64xf32>
    %338 = math.exp %337 : vector<16x64xf32>
    %cst_113 = arith.constant 1.000000e+00 : f32
    %339 = vector.broadcast %cst_113 : f32 to vector<16x64xf32>
    %340 = arith.addf %339, %338 : vector<16x64xf32>
    %341 = tpu.reciprocal %340 {approx = true} : vector<16x64xf32> -> vector<16x64xf32>
    %342 = arith.mulf %208, %341 : vector<16x64xf32>
    %343 = arith.mulf %335, %342 : vector<16x64xf32>
    %cst_114 = arith.constant dense<0.000000e+00> : vector<16x32xf32>
    %344 = tpu.matmul %343, %206, %cst_114 {dimension_numbers = #tpu.dot_dimension_numbers<[1], [0], [0], [1], [0, 0, 1, 1], [], []>} : vector<16x64xf32>, vector<64x32xf32>, vector<16x32xf32> -> vector<16x32xf32>
    %c0_115 = arith.constant 0 : index
    %c0_116 = arith.constant 0 : index
    %345 = vector.load %arg16[%c0_115, %c0_116] : memref<32x32xf32, #tpu.memory_space<vmem>>, vector<32x32xf32>
    %cst_117 = arith.constant dense<0.000000e+00> : vector<16x32xf32>
    %346 = tpu.matmul %344, %345, %cst_117 {dimension_numbers = #tpu.dot_dimension_numbers<[1], [0], [0], [1], [0, 0, 1, 1], [], []>} : vector<16x32xf32>, vector<32x32xf32>, vector<16x32xf32> -> vector<16x32xf32>
    %c0_118 = arith.constant 0 : index
    %c0_119 = arith.constant 0 : index
    %347 = vector.load %arg17[%c0_118, %c0_119] : memref<1x32xf32, #tpu.memory_space<vmem>>, vector<1x32xf32>
    %348 = vector.broadcast %347 : vector<1x32xf32> to vector<16x32xf32>
    %349 = arith.addf %346, %348 : vector<16x32xf32>
    %cst_120 = arith.constant 0.000000e+00 : f32
    %350 = vector.broadcast %cst_120 : f32 to vector<16x32xf32>
    %351 = arith.maximumf %349, %350 : vector<16x32xf32>
    %c0_121 = arith.constant 0 : index
    %c0_122 = arith.constant 0 : index
    %352 = vector.load %arg18[%c0_121, %c0_122] : memref<32x128xf32, #tpu.memory_space<vmem>>, vector<32x128xf32>
    %cst_123 = arith.constant dense<0.000000e+00> : vector<16x128xf32>
    %353 = tpu.matmul %351, %352, %cst_123 {dimension_numbers = #tpu.dot_dimension_numbers<[1], [0], [0], [1], [0, 0, 1, 1], [], []>} : vector<16x32xf32>, vector<32x128xf32>, vector<16x128xf32> -> vector<16x128xf32>
    %c0_124 = arith.constant 0 : index
    %c0_125 = arith.constant 0 : index
    %354 = vector.load %arg19[%c0_124, %c0_125] : memref<1x128xf32, #tpu.memory_space<vmem>>, vector<1x128xf32>
    %355 = vector.broadcast %354 : vector<1x128xf32> to vector<16x128xf32>
    %356 = arith.addf %353, %355 : vector<16x128xf32>
    %c0_126 = arith.constant 0 : index
    %c0_127 = arith.constant 0 : index
    %357 = vector.load %arg20[%c0_126, %c0_127] : memref<16x128xf32, #tpu.memory_space<vmem>>, vector<16x128xf32>
    tpu.vector_store %arg20[%c0_126, %c0_127], %356 {strides = array<i32>} : memref<16x128xf32, #tpu.memory_space<vmem>>, vector<16x128xf32>,
    return
  }
  func.func @transform_0(%arg0: i32) -> (i32, i32) {
    %c0_i32 = arith.constant 0 : i32
    %c0_i32_0 = arith.constant 0 : i32
    %c0_i32_1 = arith.constant 0 : i32
    return %c0_i32, %c0_i32_0 : i32, i32
  }
  func.func @transform_1(%arg0: i32) -> (i32, i32) {
    %c0_i32 = arith.constant 0 : i32
    %c0_i32_0 = arith.constant 0 : i32
    %c0_i32_1 = arith.constant 0 : i32
    return %c0_i32, %c0_i32_0 : i32, i32
  }
  func.func @transform_2(%arg0: i32) -> (i32, i32) {
    %c0_i32 = arith.constant 0 : i32
    %c0_i32_0 = arith.constant 0 : i32
    %c0_i32_1 = arith.constant 0 : i32
    return %c0_i32, %c0_i32_0 : i32, i32
  }
  func.func @transform_3(%arg0: i32) -> (i32, i32) {
    %c0_i32 = arith.constant 0 : i32
    %c0_i32_0 = arith.constant 0 : i32
    %c0_i32_1 = arith.constant 0 : i32
    return %c0_i32, %c0_i32_0 : i32, i32
  }
  func.func @transform_4(%arg0: i32) -> (i32, i32, i32) {
    %c0_i32 = arith.constant 0 : i32
    %c0_i32_0 = arith.constant 0 : i32
    %c0_i32_1 = arith.constant 0 : i32
    %c0_i32_2 = arith.constant 0 : i32
    return %c0_i32, %c0_i32_0, %c0_i32_1 : i32, i32, i32
  }
  func.func @transform_5(%arg0: i32) -> (i32, i32, i32) {
    %c0_i32 = arith.constant 0 : i32
    %c0_i32_0 = arith.constant 0 : i32
    %c0_i32_1 = arith.constant 0 : i32
    %c0_i32_2 = arith.constant 0 : i32
    return %c0_i32, %c0_i32_0, %c0_i32_1 : i32, i32, i32
  }
  func.func @transform_6(%arg0: i32) -> (i32, i32, i32) {
    %c0_i32 = arith.constant 0 : i32
    %c0_i32_0 = arith.constant 0 : i32
    %c0_i32_1 = arith.constant 0 : i32
    %c0_i32_2 = arith.constant 0 : i32
    return %c0_i32, %c0_i32_0, %c0_i32_1 : i32, i32, i32
  }
  func.func @transform_7(%arg0: i32) -> (i32, i32, i32) {
    %c0_i32 = arith.constant 0 : i32
    %c0_i32_0 = arith.constant 0 : i32
    %c0_i32_1 = arith.constant 0 : i32
    %c0_i32_2 = arith.constant 0 : i32
    return %c0_i32, %c0_i32_0, %c0_i32_1 : i32, i32, i32
  }
  func.func @transform_8(%arg0: i32) -> (i32, i32, i32) {
    %c0_i32 = arith.constant 0 : i32
    %c0_i32_0 = arith.constant 0 : i32
    %c0_i32_1 = arith.constant 0 : i32
    %c0_i32_2 = arith.constant 0 : i32
    return %c0_i32, %c0_i32_0, %c0_i32_1 : i32, i32, i32
  }
  func.func @transform_9(%arg0: i32) -> (i32, i32, i32) {
    %c0_i32 = arith.constant 0 : i32
    %c0_i32_0 = arith.constant 0 : i32
    %c0_i32_1 = arith.constant 0 : i32
    %c0_i32_2 = arith.constant 0 : i32
    return %c0_i32, %c0_i32_0, %c0_i32_1 : i32, i32, i32
  }
  func.func @transform_10(%arg0: i32) -> (i32, i32, i32) {
    %c0_i32 = arith.constant 0 : i32
    %c0_i32_0 = arith.constant 0 : i32
    %c0_i32_1 = arith.constant 0 : i32
    %c0_i32_2 = arith.constant 0 : i32
    return %c0_i32, %c0_i32_0, %c0_i32_1 : i32, i32, i32
  }
  func.func @transform_11(%arg0: i32) -> (i32, i32, i32) {
    %c0_i32 = arith.constant 0 : i32
    %c0_i32_0 = arith.constant 0 : i32
    %c0_i32_1 = arith.constant 0 : i32
    %c0_i32_2 = arith.constant 0 : i32
    return %c0_i32, %c0_i32_0, %c0_i32_1 : i32, i32, i32
  }
  func.func @transform_12(%arg0: i32) -> (i32, i32, i32) {
    %c0_i32 = arith.constant 0 : i32
    %c0_i32_0 = arith.constant 0 : i32
    %c0_i32_1 = arith.constant 0 : i32
    %c0_i32_2 = arith.constant 0 : i32
    return %c0_i32, %c0_i32_0, %c0_i32_1 : i32, i32, i32
  }
  func.func @transform_13(%arg0: i32) -> (i32, i32, i32) {
    %c0_i32 = arith.constant 0 : i32
    %c0_i32_0 = arith.constant 0 : i32
    %c0_i32_1 = arith.constant 0 : i32
    %c0_i32_2 = arith.constant 0 : i32
    return %c0_i32, %c0_i32_0, %c0_i32_1 : i32, i32, i32
  }
  func.func @transform_14(%arg0: i32) -> (i32, i32, i32) {
    %c0_i32 = arith.constant 0 : i32
    %c0_i32_0 = arith.constant 0 : i32
    %c0_i32_1 = arith.constant 0 : i32
    %c0_i32_2 = arith.constant 0 : i32
    return %c0_i32, %c0_i32_0, %c0_i32_1 : i32, i32, i32
  }
  func.func @transform_15(%arg0: i32) -> (i32, i32) {
    %c0_i32 = arith.constant 0 : i32
    %c0_i32_0 = arith.constant 0 : i32
    %c0_i32_1 = arith.constant 0 : i32
    return %c0_i32, %c0_i32_0 : i32, i32
  }
  func.func @transform_16(%arg0: i32) -> (i32, i32) {
    %c0_i32 = arith.constant 0 : i32
    %c0_i32_0 = arith.constant 0 : i32
    %c0_i32_1 = arith.constant 0 : i32
    return %c0_i32, %c0_i32_0 : i32, i32
  }
  func.func @transform_17(%arg0: i32) -> (i32, i32) {
    %c0_i32 = arith.constant 0 : i32
    %c0_i32_0 = arith.constant 0 : i32
    %c0_i32_1 = arith.constant 0 : i32
    return %c0_i32, %c0_i32_0 : i32, i32
  }
  func.func @transform_18(%arg0: i32) -> (i32, i32) {
    %c0_i32 = arith.constant 0 : i32
    %c0_i32_0 = arith.constant 0 : i32
    %c0_i32_1 = arith.constant 0 : i32
    return %c0_i32, %c0_i32_0 : i32, i32
  }
  func.func @transform_19(%arg0: i32) -> (i32, i32) {
    %c0_i32 = arith.constant 0 : i32
    %c0_i32_0 = arith.constant 0 : i32
    %c0_i32_1 = arith.constant 0 : i32
    return %c0_i32, %c0_i32_0 : i32, i32
  }
}

</mosaic_0001>

<llo_original>
// kernel: tpu_custom_call.1
$region0: #{tpu_custom_call.1}
  #allocation0 [shape = 'u32[]', space=smem, size = 0x4, offset = 0x4, fixed_abs, tag = 'smem constant byte address 0x4 - core index']
  #allocation1 [shape = 'u32[144,128]{1,0:T(1,128)}', space=vmem, size = 0x12000, scoped, tag = 'internal scratch']
  %s0 = inlined_call_operand.vmem [shape: f32[16,20], index: 0, kind: input, shape index: {}]
  %s1 = inlined_call_operand.vmem [shape: f32[16,32], index: 1, kind: input, shape index: {}]
  %s2 = inlined_call_operand.vmem [shape: f32[20,32], index: 2, kind: input, shape index: {}]
  %s3 = inlined_call_operand.vmem [shape: f32[1,32], index: 3, kind: input, shape index: {}]
  %s4 = inlined_call_operand.vmem [shape: f32[2,32,64], index: 4, kind: input, shape index: {}]
  %s5 = inlined_call_operand.vmem [shape: f32[2,32,64], index: 5, kind: input, shape index: {}]
  %s6 = inlined_call_operand.vmem [shape: f32[2,4,64], index: 6, kind: input, shape index: {}]
  %s7 = inlined_call_operand.vmem [shape: f32[2,1,64], index: 7, kind: input, shape index: {}]
  %s8 = inlined_call_operand.vmem [shape: f32[2,64,16], index: 8, kind: input, shape index: {}]
  %s9 = inlined_call_operand.vmem [shape: f32[2,64,16], index: 9, kind: input, shape index: {}]
  %s10 = inlined_call_operand.vmem [shape: f32[2,64,64], index: 10, kind: input, shape index: {}]
  %s11 = inlined_call_operand.vmem [shape: f32[2,1,64], index: 11, kind: input, shape index: {}]
  %s12 = inlined_call_operand.vmem [shape: f32[2,16,64], index: 12, kind: input, shape index: {}]
  %s13 = inlined_call_operand.vmem [shape: f32[2,1,64], index: 13, kind: input, shape index: {}]
  %s14 = inlined_call_operand.vmem [shape: f32[2,64,32], index: 14, kind: input, shape index: {}]
  %s15 = inlined_call_operand.vmem [shape: f32[32,32], index: 15, kind: input, shape index: {}]
  %s16 = inlined_call_operand.vmem [shape: f32[1,32], index: 16, kind: input, shape index: {}]
  %s17 = inlined_call_operand.vmem [shape: f32[32,128], index: 17, kind: input, shape index: {}]
  %s18 = inlined_call_operand.vmem [shape: f32[1,128], index: 18, kind: input, shape index: {}]
  %s19 = inlined_call_operand.hbm [shape: f32[16,128], index: 19, kind: output, shape index: {}]
  %s20 = sld [smem:[#allocation0]]
  $region86: #{tpu_custom_call.1} parent=0
    _
  %s22 = ssub.s32 1, %s20
  %s23 = scalar_select 0, %s22, %s20
  $region1: #{tpu_custom_call.1} parent=0
    #allocation2 [shape = 'u8[8192]{0}', space=vmem, size = 0x2000, scoped, tag = 'output window, operand 0, single buffered']
    #allocation3 [shape = 's32[1]{0}', space=sflag, size = 0x4, scoped, tag = 'scoped memory for tpu_custom_call.1']
    %24 = vsyncpa [#allocation3], 0
    // Predicated region
    $region2: #{tpu_custom_call.1} parent=1 // pred_check
      _
    $region3: #{tpu_custom_call.1} parent=1 // pred_check_branch
      %26 = sbr.rel (0) target = $region5
    $region4: #{tpu_custom_call.1} parent=1 // pred_region
      _
    $region5: #{tpu_custom_call.1} parent=1 // pred_fallthru
      _
    // Predicated region
    $region6: #{tpu_custom_call.1} parent=1 // pred_check
      _
    $region7: #{tpu_custom_call.1} parent=1 // pred_check_branch
      %28 = sbr.rel (0) target = $region9
    $region8: #{tpu_custom_call.1} parent=1 // pred_region
      _
    $region9: #{tpu_custom_call.1} parent=1 // pred_fallthru
      _
    // Predicated region
    $region10: #{tpu_custom_call.1} parent=1 // pred_check
      _
    $region11: #{tpu_custom_call.1} parent=1 // pred_check_branch
      %30 = sbr.rel (0) target = $region13
    $region12: #{tpu_custom_call.1} parent=1 // pred_region
      _
    $region13: #{tpu_custom_call.1} parent=1 // pred_fallthru
      _
    // Predicated region
    $region14: #{tpu_custom_call.1} parent=1 // pred_check
      _
    $region15: #{tpu_custom_call.1} parent=1 // pred_check_branch
      %32 = sbr.rel (0) target = $region17
    $region16: #{tpu_custom_call.1} parent=1 // pred_region
      _
    $region17: #{tpu_custom_call.1} parent=1 // pred_fallthru
      _
    // Predicated region
    $region18: #{tpu_custom_call.1} parent=1 // pred_check
      _
    $region19: #{tpu_custom_call.1} parent=1 // pred_check_branch
      %34 = sbr.rel (0) target = $region21
    $region20: #{tpu_custom_call.1} parent=1 // pred_region
      _
    $region21: #{tpu_custom_call.1} parent=1 // pred_fallthru
      _
    // Predicated region
    $region22: #{tpu_custom_call.1} parent=1 // pred_check
      _
    $region23: #{tpu_custom_call.1} parent=1 // pred_check_branch
      %36 = sbr.rel (0) target = $region25
    $region24: #{tpu_custom_call.1} parent=1 // pred_region
      _
    $region25: #{tpu_custom_call.1} parent=1 // pred_fallthru
      _
    // Predicated region
    $region26: #{tpu_custom_call.1} parent=1 // pred_check
      _
    $region27: #{tpu_custom_call.1} parent=1 // pred_check_branch
      %38 = sbr.rel (0) target = $region29
    $region28: #{tpu_custom_call.1} parent=1 // pred_region
      _
    $region29: #{tpu_custom_call.1} parent=1 // pred_fallthru
      _
    // Predicated region
    $region30: #{tpu_custom_call.1} parent=1 // pred_check
      _
    $region31: #{tpu_custom_call.1} parent=1 // pred_check_branch
      %40 = sbr.rel (0) target = $region33
    $region32: #{tpu_custom_call.1} parent=1 // pred_region
      _
    $region33: #{tpu_custom_call.1} parent=1 // pred_fallthru
      _
    // Predicated region
    $region34: #{tpu_custom_call.1} parent=1 // pred_check
      _
    $region35: #{tpu_custom_call.1} parent=1 // pred_check_branch
      %42 = sbr.rel (0) target = $region37
    $region36: #{tpu_custom_call.1} parent=1 // pred_region
      _
    $region37: #{tpu_custom_call.1} parent=1 // pred_fallthru
      _
    // Predicated region
    $region38: #{tpu_custom_call.1} parent=1 // pred_check
      _
    $region39: #{tpu_custom_call.1} parent=1 // pred_check_branch
      %44 = sbr.rel (0) target = $region41
    $region40: #{tpu_custom_call.1} parent=1 // pred_region
      _
    $region41: #{tpu_custom_call.1} parent=1 // pred_fallthru
      _
    // Predicated region
    $region42: #{tpu_custom_call.1} parent=1 // pred_check
      _
    $region43: #{tpu_custom_call.1} parent=1 // pred_check_branch
      %46 = sbr.rel (0) target = $region45
    $region44: #{tpu_custom_call.1} parent=1 // pred_region
      _
    $region45: #{tpu_custom_call.1} parent=1 // pred_fallthru
      _
    // Predicated region
    $region46: #{tpu_custom_call.1} parent=1 // pred_check
      _
    $region47: #{tpu_custom_call.1} parent=1 // pred_check_branch
      %48 = sbr.rel (0) target = $region49
    $region48: #{tpu_custom_call.1} parent=1 // pred_region
      _
    $region49: #{tpu_custom_call.1} parent=1 // pred_fallthru
      _
    // Predicated region
    $region50: #{tpu_custom_call.1} parent=1 // pred_check
      _
    $region51: #{tpu_custom_call.1} parent=1 // pred_check_branch
      %50 = sbr.rel (0) target = $region53
    $region52: #{tpu_custom_call.1} parent=1 // pred_region
      _
    $region53: #{tpu_custom_call.1} parent=1 // pred_fallthru
      _
    // Predicated region
    $region54: #{tpu_custom_call.1} parent=1 // pred_check
      _
    $region55: #{tpu_custom_call.1} parent=1 // pred_check_branch
      %52 = sbr.rel (0) target = $region57
    $region56: #{tpu_custom_call.1} parent=1 // pred_region
      _
    $region57: #{tpu_custom_call.1} parent=1 // pred_fallthru
      _
    // Predicated region
    $region58: #{tpu_custom_call.1} parent=1 // pred_check
      _
    $region59: #{tpu_custom_call.1} parent=1 // pred_check_branch
      %54 = sbr.rel (0) target = $region61
    $region60: #{tpu_custom_call.1} parent=1 // pred_region
      _
    $region61: #{tpu_custom_call.1} parent=1 // pred_fallthru
      _
    // Predicated region
    $region62: #{tpu_custom_call.1} parent=1 // pred_check
      _
    $region63: #{tpu_custom_call.1} parent=1 // pred_check_branch
      %56 = sbr.rel (0) target = $region65
    $region64: #{tpu_custom_call.1} parent=1 // pred_region
      _
    $region65: #{tpu_custom_call.1} parent=1 // pred_fallthru
      _
    // Predicated region
    $region66: #{tpu_custom_call.1} parent=1 // pred_check
      _
    $region67: #{tpu_custom_call.1} parent=1 // pred_check_branch
      %58 = sbr.rel (0) target = $region69
    $region68: #{tpu_custom_call.1} parent=1 // pred_region
      _
    $region69: #{tpu_custom_call.1} parent=1 // pred_fallthru
      _
    // Predicated region
    $region70: #{tpu_custom_call.1} parent=1 // pred_check
      _
    $region71: #{tpu_custom_call.1} parent=1 // pred_check_branch
      %60 = sbr.rel (0) target = $region73
    $region72: #{tpu_custom_call.1} parent=1 // pred_region
      _
    $region73: #{tpu_custom_call.1} parent=1 // pred_fallthru
      _
    // Predicated region
    $region74: #{tpu_custom_call.1} parent=1 // pred_check
      _
    $region75: #{tpu_custom_call.1} parent=1 // pred_check_branch
      %62 = sbr.rel (0) target = $region77
    $region76: #{tpu_custom_call.1} parent=1 // pred_region
      _
    $region77: #{tpu_custom_call.1} parent=1 // pred_fallthru
      _
    %v63 = vld [vmem:[%s0] sm:$0xff]
    %v64 = vld [vmem:[%s0 + $0x8] sm:$0xff]
    %v65 = vld [vmem:[%s2] sm:$0xff]
    %v66 = vld [vmem:[%s2 + $0x8] sm:$0xff]
    %v67 = vld [vmem:[%s2 + $0x10] sm:$0xf]
    %v68 = vld [vmem:[%s3] sm:$0x1]
    %v70 = vlaneseq
    %v71 = vshrl.u32 %v70, 7
    %v72 = vsub.s32 0, %v71
    %v73 = vrot.slane %v68, %v72
    %vm75 = vcmask 162816
    %v77 = vsel %vm75, %v63, 0
    %v80 = vsel %vm75, %v64, 0
    %vm82 = vcmask 1043456
    %v84 = vsel %vm82, %v67, 0
    %86 = vmatprep.subr.mxu0 0.0
    %87 = vmatpush1.msra.mxu0 0.0
    %88 = vmatprep.subr.mxu0 0.0
    %89 = vmatpush1.msra.mxu0 0.0
    %90 = vmatprep.subr.mxu0 0.0
    %91 = vmatpush1.msra.mxu0 0.0
    %92 = vmatprep.subr.mxu0 0.0
    %93 = vmatpush1.msra.mxu0 0.0
    %94 = vmatprep.subr.mxu0 0.0
    %95 = vmatpush1.msra.mxu0 0.0
    %96 = vmatprep.subr.mxu0 0.0
    %97 = vmatpush1.msra.mxu0 0.0
    %98 = vmatprep.subr.mxu0 0.0
    %99 = vmatpush1.msra.mxu0 0.0
    %100 = vmatprep.subr.mxu0 0.0
    %101 = vmatpush1.msra.mxu0 0.0
    %102 = vmatprep.subr.mxu0 0.0
    %103 = vmatpush1.msra.mxu0 0.0
    %104 = vmatprep.subr.mxu0 0.0
    %105 = vmatpush1.msra.mxu0 0.0
    %106 = vmatprep.subr.mxu0 0.0
    %107 = vmatpush1.msra.mxu0 0.0
    %108 = vmatprep.subr.mxu0 0.0
    %109 = vmatpush1.msra.mxu0 0.0
    %110 = vmatprep.subr.mxu0 0.0
    %111 = vmatpush1.msra.mxu0 0.0
    %112 = vmatprep.subr.mxu0 0.0
    %113 = vmatpush1.msra.mxu0 %v84
    %114 = vmatprep.subr.mxu0 0.0
    %115 = vmatpush1.msra.mxu0 %v66
    %116 = vmatprep.subr.mxu0 0.0
    %117 = vmatpush1.msra.mxu0 %v65
    %118 = vmatprep.subr.mxu0 0.0
    %119 = vmatpush2.msra.mxu0 0.0
    %120 = vmatprep.subr.mxu0 0.0
    %121 = vmatpush2.msra.mxu0 0.0
    %122 = vmatprep.subr.mxu0 0.0
    %123 = vmatpush2.msra.mxu0 0.0
    %124 = vmatprep.subr.mxu0 0.0
    %125 = vmatpush2.msra.mxu0 0.0
    %126 = vmatprep.subr.mxu0 0.0
    %127 = vmatpush2.msra.mxu0 0.0
    %128 = vmatprep.subr.mxu0 0.0
    %129 = vmatpush2.msra.mxu0 0.0
    %130 = vmatprep.subr.mxu0 0.0
    %131 = vmatpush2.msra.mxu0 0.0
    %132 = vmatprep.subr.mxu0 0.0
    %133 = vmatpush2.msra.mxu0 0.0
    %134 = vmatprep.subr.mxu0 0.0
    %135 = vmatpush2.msra.mxu0 0.0
    %136 = vmatprep.subr.mxu0 0.0
    %137 = vmatpush2.msra.mxu0 0.0
    %138 = vmatprep.subr.mxu0 0.0
    %139 = vmatpush2.msra.mxu0 0.0
    %140 = vmatprep.subr.mxu0 0.0
    %141 = vmatpush2.msra.mxu0 0.0
    %142 = vmatprep.subr.mxu0 0.0
    %143 = vmatpush2.msra.mxu0 0.0
    %144 = vmatprep.subr.mxu0 0.0
    %145 = vmatpush2.msra.mxu0 0.0
    %146 = vmatprep.subr.mxu0 0.0
    %147 = vmatpush2.msra.mxu0 0.0
    %148 = vmatprep.subr.mxu0 0.0
    %149 = vmatpush2.msra.mxu0 0.0
    %150 = vmatprep.mubr.f32.mxu0 0.0
    %151 = vmatmul.mubr.f32.gmra.mxu0 %v77
    %v152 = vpop.f32.mrf.mxu0
    %v153 = vadd.f32 %v73, %v152
    %v154 = vpop.f32.mrf.mxu0
    %155 = vmatprep.mubr.f32.mxu0 0.0
    %156 = vmatmul.mubr.f32.gmra.mxu0 %v80
    %v157 = vpop.f32.mrf.mxu0
    %v158 = vadd.f32 %v73, %v157
    %v159 = vpop.f32.mrf.mxu0
    %160 = vdwg.mxu0
    %v161 = vld [vmem:[%s1] sm:$0xff]
    %v162 = vld [vmem:[%s1 + $0x8] sm:$0xff]
    %v163 = vadd.f32 %v153, %v161
    %v164 = vadd.f32 %v158, %v162
    %v165 = vlaneseq
    %v166 = vshrl.u32 %v165, 7
    %v167 = vadd.s32 %v166, 8
    %vm168 = vcmp.lt.s32.totalorder %v166, 0
    %v169 = vsub.s32 0, %v166
    %v170 = vsel %vm168, %v169, %v166
    %v171 = vshrl.u32 %v170, 3
    %v172 = vand.u32 %v170, 7
    %v173 = vsub.s32 0, %v172
    %v174 = vsel %vm168, %v173, %v172
    %vm175 = vcmp.lt.s32.totalorder %v167, 0
    %v176 = vsub.s32 0, %v167
    %v177 = vsel %vm175, %v176, %v167
    %v178 = vshrl.u32 %v177, 3
    %v179 = vand.u32 %v177, 7
    %v180 = vsub.s32 0, %v179
    %v181 = vsel %vm175, %v180, %v179
    %vm182 = vcmp.ne.s32.totalorder %v174, 0
    %vm183 = vcmp.ne.s32.totalorder %v181, 0
    %vm184 = vcmp.lt.s32.totalorder %v174, 0
    %vm185 = vcmp.lt.s32.totalorder %v181, 0
    %vm186 = vmand %vm184, %vm182
    %vm187 = vmand %vm185, %vm183
    %v188 = vadd.s32 %v174, 8
    %v189 = vadd.s32 %v181, 8
    %v190 = vsel %vm186, %v188, %v174
    %v191 = vsel %vm187, %v189, %v181
    %v192 = vld [vmem:[%s4] sm:$0xff]
    %v193 = vld [vmem:[%s4 + $0x8] sm:$0xff]
    %v194 = vld [vmem:[%s4 + $0x10] sm:$0xff]
    %v195 = vld [vmem:[%s4 + $0x18] sm:$0xff]
    %v196 = vld [vmem:[%s5] sm:$0xff]
    %v197 = vld [vmem:[%s5 + $0x8] sm:$0xff]
    %v198 = vld [vmem:[%s5 + $0x10] sm:$0xff]
    %v199 = vld [vmem:[%s5 + $0x18] sm:$0xff]
    %v200 = vld [vmem:[%s6] sm:$0xf]
    %v201 = vld [vmem:[%s7] sm:$0x1]
    %v202 = vld [vmem:[%s8] sm:$0xff]
    %v203 = vld [vmem:[%s8 + $0x8] sm:$0xff]
    %v204 = vld [vmem:[%s8 + $0x10] sm:$0xff]
    %v205 = vld [vmem:[%s8 + $0x18] sm:$0xff]
    %v206 = vld [vmem:[%s8 + $0x20] sm:$0xff]
    %v207 = vld [vmem:[%s8 + $0x28] sm:$0xff]
    %v208 = vld [vmem:[%s8 + $0x30] sm:$0xff]
    %v209 = vld [vmem:[%s8 + $0x38] sm:$0xff]
    %v210 = vld [vmem:[%s9] sm:$0xff]
    %v211 = vld [vmem:[%s9 + $0x8] sm:$0xff]
    %v212 = vld [vmem:[%s9 + $0x10] sm:$0xff]
    %v213 = vld [vmem:[%s9 + $0x18] sm:$0xff]
    %v214 = vld [vmem:[%s9 + $0x20] sm:$0xff]
    %v215 = vld [vmem:[%s9 + $0x28] sm:$0xff]
    %v216 = vld [vmem:[%s9 + $0x30] sm:$0xff]
    %v217 = vld [vmem:[%s9 + $0x38] sm:$0xff]
    %v218 = vld [vmem:[%s10] sm:$0xff]
    %v219 = vld [vmem:[%s10 + $0x8] sm:$0xff]
    %v220 = vld [vmem:[%s10 + $0x10] sm:$0xff]
    %v221 = vld [vmem:[%s10 + $0x18] sm:$0xff]
    %v222 = vld [vmem:[%s10 + $0x20] sm:$0xff]
    %v223 = vld [vmem:[%s10 + $0x28] sm:$0xff]
    %v224 = vld [vmem:[%s10 + $0x30] sm:$0xff]
    %v225 = vld [vmem:[%s10 + $0x38] sm:$0xff]
    %v226 = vld [vmem:[%s11] sm:$0x1]
    %v227 = vld [vmem:[%s12] sm:$0xff]
    %v228 = vld [vmem:[%s12 + $0x8] sm:$0xff]
    %v229 = vld [vmem:[%s13] sm:$0x1]
    %v230 = vld [vmem:[%s14] sm:$0xff]
    %v231 = vld [vmem:[%s14 + $0x8] sm:$0xff]
    %v232 = vld [vmem:[%s14 + $0x10] sm:$0xff]
    %v233 = vld [vmem:[%s14 + $0x18] sm:$0xff]
    %v234 = vld [vmem:[%s14 + $0x20] sm:$0xff]
    %v235 = vld [vmem:[%s14 + $0x28] sm:$0xff]
    %v236 = vld [vmem:[%s14 + $0x30] sm:$0xff]
    %v237 = vld [vmem:[%s14 + $0x38] sm:$0xff]
    %vm238 = vcmask 261120
    %v240 = vsel %vm238, %v163, 0
    %v243 = vsel %vm238, %v164, 0
    %245 = vmatprep.subr.mxu0 0.0
    %246 = vmatpush1.msra.mxu0 0.0
    %247 = vmatprep.subr.mxu0 0.0
    %248 = vmatpush1.msra.mxu0 0.0
    %249 = vmatprep.subr.mxu0 0.0
    %250 = vmatpush1.msra.mxu0 0.0
    %251 = vmatprep.subr.mxu0 0.0
    %252 = vmatpush1.msra.mxu0 0.0
    %253 = vmatprep.subr.mxu0 0.0
    %254 = vmatpush1.msra.mxu0 0.0
    %255 = vmatprep.subr.mxu0 0.0
    %256 = vmatpush1.msra.mxu0 0.0
    %257 = vmatprep.subr.mxu0 0.0
    %258 = vmatpush1.msra.mxu0 0.0
    %259 = vmatprep.subr.mxu0 0.0
    %260 = vmatpush1.msra.mxu0 0.0
    %261 = vmatprep.subr.mxu0 0.0
    %262 = vmatpush1.msra.mxu0 0.0
    %263 = vmatprep.subr.mxu0 0.0
    %264 = vmatpush1.msra.mxu0 0.0
    %265 = vmatprep.subr.mxu0 0.0
    %266 = vmatpush1.msra.mxu0 0.0
    %267 = vmatprep.subr.mxu0 0.0
    %268 = vmatpush1.msra.mxu0 0.0
    %269 = vmatprep.subr.mxu0 0.0
    %270 = vmatpush1.msra.mxu0 %v195
    %271 = vmatprep.subr.mxu0 0.0
    %272 = vmatpush1.msra.mxu0 %v194
    %273 = vmatprep.subr.mxu0 0.0
    %274 = vmatpush1.msra.mxu0 %v193
    %275 = vmatprep.subr.mxu0 0.0
    %276 = vmatpush1.msra.mxu0 %v192
    %277 = vmatprep.subr.mxu0 0.0
    %278 = vmatpush2.msra.mxu0 0.0
    %279 = vmatprep.subr.mxu0 0.0
    %280 = vmatpush2.msra.mxu0 0.0
    %281 = vmatprep.subr.mxu0 0.0
    %282 = vmatpush2.msra.mxu0 0.0
    %283 = vmatprep.subr.mxu0 0.0
    %284 = vmatpush2.msra.mxu0 0.0
    %285 = vmatprep.subr.mxu0 0.0
    %286 = vmatpush2.msra.mxu0 0.0
    %287 = vmatprep.subr.mxu0 0.0
    %288 = vmatpush2.msra.mxu0 0.0
    %289 = vmatprep.subr.mxu0 0.0
    %290 = vmatpush2.msra.mxu0 0.0
    %291 = vmatprep.subr.mxu0 0.0
    %292 = vmatpush2.msra.mxu0 0.0
    %293 = vmatprep.subr.mxu0 0.0
    %294 = vmatpush2.msra.mxu0 0.0
    %295 = vmatprep.subr.mxu0 0.0
    %296 = vmatpush2.msra.mxu0 0.0
    %297 = vmatprep.subr.mxu0 0.0
    %298 = vmatpush2.msra.mxu0 0.0
    %299 = vmatprep.subr.mxu0 0.0
    %300 = vmatpush2.msra.mxu0 0.0
    %301 = vmatprep.subr.mxu0 0.0
    %302 = vmatpush2.msra.mxu0 0.0
    %303 = vmatprep.subr.mxu0 0.0
    %304 = vmatpush2.msra.mxu0 0.0
    %305 = vmatprep.subr.mxu0 0.0
    %306 = vmatpush2.msra.mxu0 0.0
    %307 = vmatprep.subr.mxu0 0.0
    %308 = vmatpush2.msra.mxu0 0.0
    %309 = vmatprep.mubr.f32.mxu0 0.0
    %310 = vmatmul.mubr.f32.gmra.mxu0 %v240
    %v311 = vpop.f32.mrf.mxu0
    %v312 = vadd.f32 0.0, %v311
    %v313 = vpop.f32.mrf.mxu0
    %314 = vmatprep.mubr.f32.mxu0 0.0
    %315 = vmatmul.mubr.f32.gmra.mxu0 %v243
    %v316 = vpop.f32.mrf.mxu0
    %v317 = vadd.f32 0.0, %v316
    %v318 = vpop.f32.mrf.mxu0
    %319 = vdwg.mxu0
    %320 = vmatprep.subr.mxu0 0.0
    %321 = vmatpush1.msra.mxu0 0.0
    %322 = vmatprep.subr.mxu0 0.0
    %323 = vmatpush1.msra.mxu0 0.0
    %324 = vmatprep.subr.mxu0 0.0
    %325 = vmatpush1.msra.mxu0 0.0
    %326 = vmatprep.subr.mxu0 0.0
    %327 = vmatpush1.msra.mxu0 0.0
    %328 = vmatprep.subr.mxu0 0.0
    %329 = vmatpush1.msra.mxu0 0.0
    %330 = vmatprep.subr.mxu0 0.0
    %331 = vmatpush1.msra.mxu0 0.0
    %332 = vmatprep.subr.mxu0 0.0
    %333 = vmatpush1.msra.mxu0 0.0
    %334 = vmatprep.subr.mxu0 0.0
    %335 = vmatpush1.msra.mxu0 0.0
    %336 = vmatprep.subr.mxu0 0.0
    %337 = vmatpush1.msra.mxu0 0.0
    %338 = vmatprep.subr.mxu0 0.0
    %339 = vmatpush1.msra.mxu0 0.0
    %340 = vmatprep.subr.mxu0 0.0
    %341 = vmatpush1.msra.mxu0 0.0
    %342 = vmatprep.subr.mxu0 0.0
    %343 = vmatpush1.msra.mxu0 0.0
    %344 = vmatprep.subr.mxu0 0.0
    %345 = vmatpush1.msra.mxu0 %v199
    %346 = vmatprep.subr.mxu0 0.0
    %347 = vmatpush1.msra.mxu0 %v198
    %348 = vmatprep.subr.mxu0 0.0
    %349 = vmatpush1.msra.mxu0 %v197
    %350 = vmatprep.subr.mxu0 0.0
    %351 = vmatpush1.msra.mxu0 %v196
    %352 = vmatprep.subr.mxu0 0.0
    %353 = vmatpush2.msra.mxu0 0.0
    %354 = vmatprep.subr.mxu0 0.0
    %355 = vmatpush2.msra.mxu0 0.0
    %356 = vmatprep.subr.mxu0 0.0
    %357 = vmatpush2.msra.mxu0 0.0
    %358 = vmatprep.subr.mxu0 0.0
    %359 = vmatpush2.msra.mxu0 0.0
    %360 = vmatprep.subr.mxu0 0.0
    %361 = vmatpush2.msra.mxu0 0.0
    %362 = vmatprep.subr.mxu0 0.0
    %363 = vmatpush2.msra.mxu0 0.0
    %364 = vmatprep.subr.mxu0 0.0
    %365 = vmatpush2.msra.mxu0 0.0
    %366 = vmatprep.subr.mxu0 0.0
    %367 = vmatpush2.msra.mxu0 0.0
    %368 = vmatprep.subr.mxu0 0.0
    %369 = vmatpush2.msra.mxu0 0.0
    %370 = vmatprep.subr.mxu0 0.0
    %371 = vmatpush2.msra.mxu0 0.0
    %372 = vmatprep.subr.mxu0 0.0
    %373 = vmatpush2.msra.mxu0 0.0
    %374 = vmatprep.subr.mxu0 0.0
    %375 = vmatpush2.msra.mxu0 0.0
    %376 = vmatprep.subr.mxu0 0.0
    %377 = vmatpush2.msra.mxu0 0.0
    %378 = vmatprep.subr.mxu0 0.0
    %379 = vmatpush2.msra.mxu0 0.0
    %380 = vmatprep.subr.mxu0 0.0
    %381 = vmatpush2.msra.mxu0 0.0
    %382 = vmatprep.subr.mxu0 0.0
    %383 = vmatpush2.msra.mxu0 0.0
    %384 = vmatprep.mubr.f32.mxu0 0.0
    %385 = vmatmul.mubr.f32.gmra.mxu0 %v240
    %v386 = vpop.f32.mrf.mxu0
    %v387 = vadd.f32 0.0, %v386
    %v388 = vpop.f32.mrf.mxu0
    %389 = vmatprep.mubr.f32.mxu0 0.0
    %390 = vmatmul.mubr.f32.gmra.mxu0 %v243
    %v391 = vpop.f32.mrf.mxu0
    %v392 = vadd.f32 0.0, %v391
    %v393 = vpop.f32.mrf.mxu0
    %394 = vdwg.mxu0
    %v395 = vlaneseq
    %v396 = vshrl.u32 %v395, 7
    %v397 = vsub.s32 3, %v396
    %v398 = vrot.slane %v200, %v397
    %v399 = vmul.f32 %v312, %v398
    %v400 = vmul.f32 %v317, %v398
    %v401 = vrot.slane %v312, 7
    %v402 = vrot.slane %v317, 7
    %vm403 = vcmp.lt.s32.totalorder %v166, 1
    %v404 = vsel %vm403, %v401, %v402
    %v405 = vsel %vm403, %v402, %v401
    %vm406 = vcmp.ge.s32.totalorder %v190, 1
    %vm407 = vcmp.ge.s32.totalorder %v191, 1
    %v408 = vsel %vm406, %v405, 0.0
    %v409 = vsel %vm407, %v404, 0.0
    %v410 = vlaneseq
    %v411 = vshrl.u32 %v410, 7
    %v412 = vsub.s32 2, %v411
    %v413 = vrot.slane %v200, %v412
    %v414 = vmul.f32 %v408, %v413
    %v415 = vmul.f32 %v409, %v413
    %v416 = vadd.f32 %v399, %v414
    %v417 = vadd.f32 %v400, %v415
    %v418 = vrot.slane %v312, 6
    %v419 = vrot.slane %v317, 6
    %vm420 = vcmp.lt.s32.totalorder %v166, 2
    %v421 = vsel %vm420, %v418, %v419
    %v422 = vsel %vm420, %v419, %v418
    %vm423 = vcmp.ge.s32.totalorder %v190, 2
    %vm424 = vcmp.ge.s32.totalorder %v191, 2
    %v425 = vsel %vm423, %v422, 0.0
    %v426 = vsel %vm424, %v421, 0.0
    %v427 = vlaneseq
    %v428 = vshrl.u32 %v427, 7
    %v429 = vsub.s32 1, %v428
    %v430 = vrot.slane %v200, %v429
    %v431 = vmul.f32 %v425, %v430
    %v432 = vmul.f32 %v426, %v430
    %v433 = vadd.f32 %v416, %v431
    %v434 = vadd.f32 %v417, %v432
    %v435 = vrot.slane %v312, 5
    %v436 = vrot.slane %v317, 5
    %vm437 = vcmp.lt.s32.totalorder %v166, 3
    %v438 = vsel %vm437, %v435, %v436
    %v439 = vsel %vm437, %v436, %v435
    %vm440 = vcmp.ge.s32.totalorder %v190, 3
    %vm441 = vcmp.ge.s32.totalorder %v191, 3
    %v442 = vsel %vm440, %v439, 0.0
    %v443 = vsel %vm441, %v438, 0.0
    %v444 = vlaneseq
    %v445 = vshrl.u32 %v444, 7
    %v446 = vsub.s32 0, %v445
    %v447 = vrot.slane %v200, %v446
    %v448 = vmul.f32 %v442, %v447
    %v449 = vmul.f32 %v443, %v447
    %v450 = vadd.f32 %v433, %v448
    %v451 = vadd.f32 %v434, %v449
    %v453 = vlaneseq
    %v454 = vshrl.u32 %v453, 7
    %v455 = vsub.s32 0, %v454
    %v456 = vrot.slane %v201, %v455
    %v458 = vadd.f32 %v450, %v456
    %v459 = vadd.f32 %v451, %v456
    %v460 = vsub.f32 0.0, %v458
    %v461 = vsub.f32 0.0, %v459
    %v462 = vmul.f32 %v460, 1.442695
    %v463 = vpow.pop %v462
    %v464 = vmul.f32 %v461, 1.442695
    %v465 = vpow.pop %v464
    %v466 = vadd.f32 %v463, 1.0
    %v467 = vadd.f32 %v465, 1.0
    %v468 = vrcp.pop %v466
    %v469 = vrcp.pop %v467
    %v470 = vmul.f32 %v458, %v468
    %v471 = vmul.f32 %v459, %v469
    %vm472 = vcmask 523264
    %v474 = vsel %vm472, %v470, 0
    %v477 = vsel %vm472, %v471, 0
    %479 = vmatprep.subr.mxu0 0.0
    %480 = vmatpush1.msra.mxu0 0.0
    %481 = vmatprep.subr.mxu0 0.0
    %482 = vmatpush1.msra.mxu0 0.0
    %483 = vmatprep.subr.mxu0 0.0
    %484 = vmatpush1.msra.mxu0 0.0
    %485 = vmatprep.subr.mxu0 0.0
    %486 = vmatpush1.msra.mxu0 0.0
    %487 = vmatprep.subr.mxu0 0.0
    %488 = vmatpush1.msra.mxu0 0.0
    %489 = vmatprep.subr.mxu0 0.0
    %490 = vmatpush1.msra.mxu0 0.0
    %491 = vmatprep.subr.mxu0 0.0
    %492 = vmatpush1.msra.mxu0 0.0
    %493 = vmatprep.subr.mxu0 0.0
    %494 = vmatpush1.msra.mxu0 0.0
    %495 = vmatprep.subr.mxu0 0.0
    %496 = vmatpush1.msra.mxu0 %v209
    %497 = vmatprep.subr.mxu0 0.0
    %498 = vmatpush1.msra.mxu0 %v208
    %499 = vmatprep.subr.mxu0 0.0
    %500 = vmatpush1.msra.mxu0 %v207
    %501 = vmatprep.subr.mxu0 0.0
    %502 = vmatpush1.msra.mxu0 %v206
    %503 = vmatprep.subr.mxu0 0.0
    %504 = vmatpush1.msra.mxu0 %v205
    %505 = vmatprep.subr.mxu0 0.0
    %506 = vmatpush1.msra.mxu0 %v204
    %507 = vmatprep.subr.mxu0 0.0
    %508 = vmatpush1.msra.mxu0 %v203
    %509 = vmatprep.subr.mxu0 0.0
    %510 = vmatpush1.msra.mxu0 %v202
    %511 = vmatprep.subr.mxu0 0.0
    %512 = vmatpush2.msra.mxu0 0.0
    %513 = vmatprep.subr.mxu0 0.0
    %514 = vmatpush2.msra.mxu0 0.0
    %515 = vmatprep.subr.mxu0 0.0
    %516 = vmatpush2.msra.mxu0 0.0
    %517 = vmatprep.subr.mxu0 0.0
    %518 = vmatpush2.msra.mxu0 0.0
    %519 = vmatprep.subr.mxu0 0.0
    %520 = vmatpush2.msra.mxu0 0.0
    %521 = vmatprep.subr.mxu0 0.0
    %522 = vmatpush2.msra.mxu0 0.0
    %523 = vmatprep.subr.mxu0 0.0
    %524 = vmatpush2.msra.mxu0 0.0
    %525 = vmatprep.subr.mxu0 0.0
    %526 = vmatpush2.msra.mxu0 0.0
    %527 = vmatprep.subr.mxu0 0.0
    %528 = vmatpush2.msra.mxu0 0.0
    %529 = vmatprep.subr.mxu0 0.0
    %530 = vmatpush2.msra.mxu0 0.0
    %531 = vmatprep.subr.mxu0 0.0
    %532 = vmatpush2.msra.mxu0 0.0
    %533 = vmatprep.subr.mxu0 0.0
    %534 = vmatpush2.msra.mxu0 0.0
    %535 = vmatprep.subr.mxu0 0.0
    %536 = vmatpush2.msra.mxu0 0.0
    %537 = vmatprep.subr.mxu0 0.0
    %538 = vmatpush2.msra.mxu0 0.0
    %539 = vmatprep.subr.mxu0 0.0
    %540 = vmatpush2.msra.mxu0 0.0
    %541 = vmatprep.subr.mxu0 0.0
    %542 = vmatpush2.msra.mxu0 0.0
    %543 = vmatprep.mubr.f32.mxu0 0.0
    %544 = vmatmul.mubr.f32.gmra.mxu0 %v474
    %v545 = vpop.f32.mrf.mxu0
    %v546 = vadd.f32 0.0, %v545
    %v547 = vpop.f32.mrf.mxu0
    %548 = vmatprep.mubr.f32.mxu0 0.0
    %549 = vmatmul.mubr.f32.gmra.mxu0 %v477
    %v550 = vpop.f32.mrf.mxu0
    %v551 = vadd.f32 0.0, %v550
    %v552 = vpop.f32.mrf.mxu0
    %553 = vdwg.mxu0
    %554 = vmatprep.subr.mxu0 0.0
    %555 = vmatpush1.msra.mxu0 0.0
    %556 = vmatprep.subr.mxu0 0.0
    %557 = vmatpush1.msra.mxu0 0.0
    %558 = vmatprep.subr.mxu0 0.0
    %559 = vmatpush1.msra.mxu0 0.0
    %560 = vmatprep.subr.mxu0 0.0
    %561 = vmatpush1.msra.mxu0 0.0
    %562 = vmatprep.subr.mxu0 0.0
    %563 = vmatpush1.msra.mxu0 0.0
    %564 = vmatprep.subr.mxu0 0.0
    %565 = vmatpush1.msra.mxu0 0.0
    %566 = vmatprep.subr.mxu0 0.0
    %567 = vmatpush1.msra.mxu0 0.0
    %568 = vmatprep.subr.mxu0 0.0
    %569 = vmatpush1.msra.mxu0 0.0
    %570 = vmatprep.subr.mxu0 0.0
    %571 = vmatpush1.msra.mxu0 %v217
    %572 = vmatprep.subr.mxu0 0.0
    %573 = vmatpush1.msra.mxu0 %v216
    %574 = vmatprep.subr.mxu0 0.0
    %575 = vmatpush1.msra.mxu0 %v215
    %576 = vmatprep.subr.mxu0 0.0
    %577 = vmatpush1.msra.mxu0 %v214
    %578 = vmatprep.subr.mxu0 0.0
    %579 = vmatpush1.msra.mxu0 %v213
    %580 = vmatprep.subr.mxu0 0.0
    %581 = vmatpush1.msra.mxu0 %v212
    %582 = vmatprep.subr.mxu0 0.0
    %583 = vmatpush1.msra.mxu0 %v211
    %584 = vmatprep.subr.mxu0 0.0
    %585 = vmatpush1.msra.mxu0 %v210
    %586 = vmatprep.subr.mxu0 0.0
    %587 = vmatpush2.msra.mxu0 0.0
    %588 = vmatprep.subr.mxu0 0.0
    %589 = vmatpush2.msra.mxu0 0.0
    %590 = vmatprep.subr.mxu0 0.0
    %591 = vmatpush2.msra.mxu0 0.0
    %592 = vmatprep.subr.mxu0 0.0
    %593 = vmatpush2.msra.mxu0 0.0
    %594 = vmatprep.subr.mxu0 0.0
    %595 = vmatpush2.msra.mxu0 0.0
    %596 = vmatprep.subr.mxu0 0.0
    %597 = vmatpush2.msra.mxu0 0.0
    %598 = vmatprep.subr.mxu0 0.0
    %599 = vmatpush2.msra.mxu0 0.0
    %600 = vmatprep.subr.mxu0 0.0
    %601 = vmatpush2.msra.mxu0 0.0
    %602 = vmatprep.subr.mxu0 0.0
    %603 = vmatpush2.msra.mxu0 0.0
    %604 = vmatprep.subr.mxu0 0.0
    %605 = vmatpush2.msra.mxu0 0.0
    %606 = vmatprep.subr.mxu0 0.0
    %607 = vmatpush2.msra.mxu0 0.0
    %608 = vmatprep.subr.mxu0 0.0
    %609 = vmatpush2.msra.mxu0 0.0
    %610 = vmatprep.subr.mxu0 0.0
    %611 = vmatpush2.msra.mxu0 0.0
    %612 = vmatprep.subr.mxu0 0.0
    %613 = vmatpush2.msra.mxu0 0.0
    %614 = vmatprep.subr.mxu0 0.0
    %615 = vmatpush2.msra.mxu0 0.0
    %616 = vmatprep.subr.mxu0 0.0
    %617 = vmatpush2.msra.mxu0 0.0
    %618 = vmatprep.mubr.f32.mxu0 0.0
    %619 = vmatmul.mubr.f32.gmra.mxu0 %v474
    %v620 = vpop.f32.mrf.mxu0
    %v621 = vadd.f32 0.0, %v620
    %v622 = vpop.f32.mrf.mxu0
    %623 = vmatprep.mubr.f32.mxu0 0.0
    %624 = vmatmul.mubr.f32.gmra.mxu0 %v477
    %v625 = vpop.f32.mrf.mxu0
    %v626 = vadd.f32 0.0, %v625
    %v627 = vpop.f32.mrf.mxu0
    %628 = vdwg.mxu0
    %v630 = vlaneseq
    %v631 = vshrl.u32 %v630, 7
    %v632 = vsub.s32 0, %v631
    %v633 = vrot.slane %v226, %v632
    %635 = vmatprep.subr.mxu0 0.0
    %636 = vmatpush1.msra.mxu0 0.0
    %637 = vmatprep.subr.mxu0 0.0
    %638 = vmatpush1.msra.mxu0 0.0
    %639 = vmatprep.subr.mxu0 0.0
    %640 = vmatpush1.msra.mxu0 0.0
    %641 = vmatprep.subr.mxu0 0.0
    %642 = vmatpush1.msra.mxu0 0.0
    %643 = vmatprep.subr.mxu0 0.0
    %644 = vmatpush1.msra.mxu0 0.0
    %645 = vmatprep.subr.mxu0 0.0
    %646 = vmatpush1.msra.mxu0 0.0
    %647 = vmatprep.subr.mxu0 0.0
    %648 = vmatpush1.msra.mxu0 0.0
    %649 = vmatprep.subr.mxu0 0.0
    %650 = vmatpush1.msra.mxu0 0.0
    %651 = vmatprep.subr.mxu0 0.0
    %652 = vmatpush1.msra.mxu0 %v225
    %653 = vmatprep.subr.mxu0 0.0
    %654 = vmatpush1.msra.mxu0 %v224
    %655 = vmatprep.subr.mxu0 0.0
    %656 = vmatpush1.msra.mxu0 %v223
    %657 = vmatprep.subr.mxu0 0.0
    %658 = vmatpush1.msra.mxu0 %v222
    %659 = vmatprep.subr.mxu0 0.0
    %660 = vmatpush1.msra.mxu0 %v221
    %661 = vmatprep.subr.mxu0 0.0
    %662 = vmatpush1.msra.mxu0 %v220
    %663 = vmatprep.subr.mxu0 0.0
    %664 = vmatpush1.msra.mxu0 %v219
    %665 = vmatprep.subr.mxu0 0.0
    %666 = vmatpush1.msra.mxu0 %v218
    %667 = vmatprep.subr.mxu0 0.0
    %668 = vmatpush2.msra.mxu0 0.0
    %669 = vmatprep.subr.mxu0 0.0
    %670 = vmatpush2.msra.mxu0 0.0
    %671 = vmatprep.subr.mxu0 0.0
    %672 = vmatpush2.msra.mxu0 0.0
    %673 = vmatprep.subr.mxu0 0.0
    %674 = vmatpush2.msra.mxu0 0.0
    %675 = vmatprep.subr.mxu0 0.0
    %676 = vmatpush2.msra.mxu0 0.0
    %677 = vmatprep.subr.mxu0 0.0
    %678 = vmatpush2.msra.mxu0 0.0
    %679 = vmatprep.subr.mxu0 0.0
    %680 = vmatpush2.msra.mxu0 0.0
    %681 = vmatprep.subr.mxu0 0.0
    %682 = vmatpush2.msra.mxu0 0.0
    %683 = vmatprep.subr.mxu0 0.0
    %684 = vmatpush2.msra.mxu0 0.0
    %685 = vmatprep.subr.mxu0 0.0
    %686 = vmatpush2.msra.mxu0 0.0
    %687 = vmatprep.subr.mxu0 0.0
    %688 = vmatpush2.msra.mxu0 0.0
    %689 = vmatprep.subr.mxu0 0.0
    %690 = vmatpush2.msra.mxu0 0.0
    %691 = vmatprep.subr.mxu0 0.0
    %692 = vmatpush2.msra.mxu0 0.0
    %693 = vmatprep.subr.mxu0 0.0
    %694 = vmatpush2.msra.mxu0 0.0
    %695 = vmatprep.subr.mxu0 0.0
    %696 = vmatpush2.msra.mxu0 0.0
    %697 = vmatprep.subr.mxu0 0.0
    %698 = vmatpush2.msra.mxu0 0.0
    %699 = vmatprep.mubr.f32.mxu0 0.0
    %700 = vmatmul.mubr.f32.gmra.mxu0 %v474
    %v701 = vpop.f32.mrf.mxu0
    %v702 = vadd.f32 %v633, %v701
    %v703 = vpop.f32.mrf.mxu0
    %704 = vmatprep.mubr.f32.mxu0 0.0
    %705 = vmatmul.mubr.f32.gmra.mxu0 %v477
    %v706 = vpop.f32.mrf.mxu0
    %v707 = vadd.f32 %v633, %v706
    %v708 = vpop.f32.mrf.mxu0
    %709 = vdwg.mxu0
    %v710 = vmul.f32 %v702, 1.442695
    %v711 = vpow.pop %v710
    %v712 = vmul.f32 %v707, 1.442695
    %v713 = vpow.pop %v712
    %v714 = vadd.f32 %v711, 1.0
    %v715 = vlog2.pop %v714
    %v716 = vmul.f32 %v715, 0.6931472
    %v717 = vmul.f32 -0.5, %v711
    %v718 = vadd.f32 %v717, 1.0
    %v719 = vmul.f32 %v718, %v711
    %v720 = vand.u32 2147483647, %v711
    %vm721 = vcmp.lt.f32.partialorder %v720, 0.0004427343
    %v722 = vsel %vm721, %v719, %v716
    %v723 = vadd.f32 %v713, 1.0
    %v724 = vlog2.pop %v723
    %v725 = vmul.f32 %v724, 0.6931472
    %v726 = vmul.f32 -0.5, %v713
    %v727 = vadd.f32 %v726, 1.0
    %v728 = vmul.f32 %v727, %v713
    %v729 = vand.u32 2147483647, %v713
    %vm730 = vcmp.lt.f32.partialorder %v729, 0.0004427343
    %v731 = vsel %vm730, %v728, %v725
    %v734 = vcombine.high %v722, %v722
    %v736 = vunpack.c.l.s4 1966171168
    %v737 = vunpack.c.0.s8 %v736
    %v738 = vlaneseq
    %v739 = vshrl.u32 %v738, 7
    %v740 = vsub.s32 %v737, %v739
    %v741 = vrot.slane %v722, %v740
    %v743 = vunpack.c.l.s4 1966171168
    %v744 = vunpack.c.0.s8 %v743
    %v745 = vlaneseq
    %v746 = vshrl.u32 %v745, 7
    %v747 = vsub.s32 %v744, %v746
    %v748 = vrot.slane %v734, %v747
    %v749 = vcombine.high %v741, %v741
    %v750 = vcombine.high %v748, %v748
    %v752 = vunpack.c.l.s4 1966171168
    %v753 = vunpack.c.0.s8 %v752
    %v754 = vlaneseq
    %v755 = vshrl.u32 %v754, 7
    %v756 = vsub.s32 %v753, %v755
    %v757 = vrot.slane %v741, %v756
    %v759 = vunpack.c.l.s4 1966171168
    %v760 = vunpack.c.0.s8 %v759
    %v761 = vlaneseq
    %v762 = vshrl.u32 %v761, 7
    %v763 = vsub.s32 %v760, %v762
    %v764 = vrot.slane %v748, %v763
    %v766 = vunpack.c.l.s4 1966171168
    %v767 = vunpack.c.0.s8 %v766
    %v768 = vlaneseq
    %v769 = vshrl.u32 %v768, 7
    %v770 = vsub.s32 %v767, %v769
    %v771 = vrot.slane %v749, %v770
    %v773 = vunpack.c.l.s4 1966171168
    %v774 = vunpack.c.0.s8 %v773
    %v775 = vlaneseq
    %v776 = vshrl.u32 %v775, 7
    %v777 = vsub.s32 %v774, %v776
    %v778 = vrot.slane %v750, %v777
    %v779 = vcombine.high %v757, %v757
    %v780 = vcombine.high %v764, %v764
    %v781 = vcombine.high %v771, %v771
    %v782 = vcombine.high %v778, %v778
    %v783 = vcombine.high %v731, %v731
    %v785 = vunpack.c.l.s4 1966171168
    %v786 = vunpack.c.0.s8 %v785
    %v787 = vlaneseq
    %v788 = vshrl.u32 %v787, 7
    %v789 = vsub.s32 %v786, %v788
    %v790 = vrot.slane %v731, %v789
    %v792 = vunpack.c.l.s4 1966171168
    %v793 = vunpack.c.0.s8 %v792
    %v794 = vlaneseq
    %v795 = vshrl.u32 %v794, 7
    %v796 = vsub.s32 %v793, %v795
    %v797 = vrot.slane %v783, %v796
    %v798 = vcombine.high %v790, %v790
    %v799 = vcombine.high %v797, %v797
    %v801 = vunpack.c.l.s4 1966171168
    %v802 = vunpack.c.0.s8 %v801
    %v803 = vlaneseq
    %v804 = vshrl.u32 %v803, 7
    %v805 = vsub.s32 %v802, %v804
    %v806 = vrot.slane %v790, %v805
    %v808 = vunpack.c.l.s4 1966171168
    %v809 = vunpack.c.0.s8 %v808
    %v810 = vlaneseq
    %v811 = vshrl.u32 %v810, 7
    %v812 = vsub.s32 %v809, %v811
    %v813 = vrot.slane %v797, %v812
    %v815 = vunpack.c.l.s4 1966171168
    %v816 = vunpack.c.0.s8 %v815
    %v817 = vlaneseq
    %v818 = vshrl.u32 %v817, 7
    %v819 = vsub.s32 %v816, %v818
    %v820 = vrot.slane %v798, %v819
    %v822 = vunpack.c.l.s4 1966171168
    %v823 = vunpack.c.0.s8 %v822
    %v824 = vlaneseq
    %v825 = vshrl.u32 %v824, 7
    %v826 = vsub.s32 %v823, %v825
    %v827 = vrot.slane %v799, %v826
    %v828 = vcombine.high %v806, %v806
    %v829 = vcombine.high %v813, %v813
    %v830 = vcombine.high %v820, %v820
    %v831 = vcombine.high %v827, %v827
    %v832 = vlaneseq
    %v833 = vshrl.u32 %v832, 7
    %v834 = vsub.s32 0, %v833
    %v835 = vrot.slane %v757, %v834
    %v836 = vlaneseq
    %v837 = vshrl.u32 %v836, 7
    %v838 = vsub.s32 0, %v837
    %v839 = vrot.slane %v771, %v838
    %v840 = vlaneseq
    %v841 = vshrl.u32 %v840, 7
    %v842 = vsub.s32 0, %v841
    %v843 = vrot.slane %v779, %v842
    %v844 = vlaneseq
    %v845 = vshrl.u32 %v844, 7
    %v846 = vsub.s32 0, %v845
    %v847 = vrot.slane %v781, %v846
    %v848 = vlaneseq
    %v849 = vshrl.u32 %v848, 7
    %v850 = vsub.s32 0, %v849
    %v851 = vrot.slane %v764, %v850
    %v852 = vlaneseq
    %v853 = vshrl.u32 %v852, 7
    %v854 = vsub.s32 0, %v853
    %v855 = vrot.slane %v778, %v854
    %v856 = vlaneseq
    %v857 = vshrl.u32 %v856, 7
    %v858 = vsub.s32 0, %v857
    %v859 = vrot.slane %v780, %v858
    %v860 = vlaneseq
    %v861 = vshrl.u32 %v860, 7
    %v862 = vsub.s32 0, %v861
    %v863 = vrot.slane %v782, %v862
    %v864 = vlaneseq
    %v865 = vshrl.u32 %v864, 7
    %v866 = vsub.s32 0, %v865
    %v867 = vrot.slane %v806, %v866
    %v868 = vlaneseq
    %v869 = vshrl.u32 %v868, 7
    %v870 = vsub.s32 0, %v869
    %v871 = vrot.slane %v820, %v870
    %v872 = vlaneseq
    %v873 = vshrl.u32 %v872, 7
    %v874 = vsub.s32 0, %v873
    %v875 = vrot.slane %v828, %v874
    %v876 = vlaneseq
    %v877 = vshrl.u32 %v876, 7
    %v878 = vsub.s32 0, %v877
    %v879 = vrot.slane %v830, %v878
    %v880 = vlaneseq
    %v881 = vshrl.u32 %v880, 7
    %v882 = vsub.s32 0, %v881
    %v883 = vrot.slane %v813, %v882
    %v884 = vlaneseq
    %v885 = vshrl.u32 %v884, 7
    %v886 = vsub.s32 0, %v885
    %v887 = vrot.slane %v827, %v886
    %v888 = vlaneseq
    %v889 = vshrl.u32 %v888, 7
    %v890 = vsub.s32 0, %v889
    %v891 = vrot.slane %v829, %v890
    %v892 = vlaneseq
    %v893 = vshrl.u32 %v892, 7
    %v894 = vsub.s32 0, %v893
    %v895 = vrot.slane %v831, %v894
    %v912 = vmul.f32 %v835, %v227
    %v913 = vmul.f32 %v835, %v228
    %v914 = vmul.f32 %v839, %v227
    %v915 = vmul.f32 %v839, %v228
    %v916 = vmul.f32 %v843, %v227
    %v917 = vmul.f32 %v843, %v228
    %v918 = vmul.f32 %v847, %v227
    %v919 = vmul.f32 %v847, %v228
    %v920 = vmul.f32 %v851, %v227
    %v921 = vmul.f32 %v851, %v228
    %v922 = vmul.f32 %v855, %v227
    %v923 = vmul.f32 %v855, %v228
    %v924 = vmul.f32 %v859, %v227
    %v925 = vmul.f32 %v859, %v228
    %v926 = vmul.f32 %v863, %v227
    %v927 = vmul.f32 %v863, %v228
    %v928 = vmul.f32 %v867, %v227
    %v929 = vmul.f32 %v867, %v228
    %v930 = vmul.f32 %v871, %v227
    %v931 = vmul.f32 %v871, %v228
    %v932 = vmul.f32 %v875, %v227
    %v933 = vmul.f32 %v875, %v228
    %v934 = vmul.f32 %v879, %v227
    %v935 = vmul.f32 %v879, %v228
    %v936 = vmul.f32 %v883, %v227
    %v937 = vmul.f32 %v883, %v228
    %v938 = vmul.f32 %v887, %v227
    %v939 = vmul.f32 %v887, %v228
    %v940 = vmul.f32 %v891, %v227
    %v941 = vmul.f32 %v891, %v228
    %v942 = vmul.f32 %v895, %v227
    %v943 = vmul.f32 %v895, %v228
    %v944 = vmul.f32 %v912, 1.442695
    %v945 = vpow.pop %v944
    %v946 = vmul.f32 %v913, 1.442695
    %v947 = vpow.pop %v946
    %v948 = vmul.f32 %v914, 1.442695
    %v949 = vpow.pop %v948
    %v950 = vmul.f32 %v915, 1.442695
    %v951 = vpow.pop %v950
    %v952 = vmul.f32 %v916, 1.442695
    %v953 = vpow.pop %v952
    %v954 = vmul.f32 %v917, 1.442695
    %v955 = vpow.pop %v954
    %v956 = vmul.f32 %v918, 1.442695
    %v957 = vpow.pop %v956
    %v958 = vmul.f32 %v919, 1.442695
    %v959 = vpow.pop %v958
    %v960 = vmul.f32 %v920, 1.442695
    %v961 = vpow.pop %v960
    %v962 = vmul.f32 %v921, 1.442695
    %v963 = vpow.pop %v962
    %v964 = vmul.f32 %v922, 1.442695
    %v965 = vpow.pop %v964
    %v966 = vmul.f32 %v923, 1.442695
    %v967 = vpow.pop %v966
    %v968 = vmul.f32 %v924, 1.442695
    %v969 = vpow.pop %v968
    %v970 = vmul.f32 %v925, 1.442695
    %v971 = vpow.pop %v970
    %v972 = vmul.f32 %v926, 1.442695
    %v973 = vpow.pop %v972
    %v974 = vmul.f32 %v927, 1.442695
    %v975 = vpow.pop %v974
    %v976 = vmul.f32 %v928, 1.442695
    %v977 = vpow.pop %v976
    %v978 = vmul.f32 %v929, 1.442695
    %v979 = vpow.pop %v978
    %v980 = vmul.f32 %v930, 1.442695
    %v981 = vpow.pop %v980
    %v982 = vmul.f32 %v931, 1.442695
    %v983 = vpow.pop %v982
    %v984 = vmul.f32 %v932, 1.442695
    %v985 = vpow.pop %v984
    %v986 = vmul.f32 %v933, 1.442695
    %v987 = vpow.pop %v986
    %v988 = vmul.f32 %v934, 1.442695
    %v989 = vpow.pop %v988
    %v990 = vmul.f32 %v935, 1.442695
    %v991 = vpow.pop %v990
    %v992 = vmul.f32 %v936, 1.442695
    %v993 = vpow.pop %v992
    %v994 = vmul.f32 %v937, 1.442695
    %v995 = vpow.pop %v994
    %v996 = vmul.f32 %v938, 1.442695
    %v997 = vpow.pop %v996
    %v998 = vmul.f32 %v939, 1.442695
    %v999 = vpow.pop %v998
    %v1000 = vmul.f32 %v940, 1.442695
    %v1001 = vpow.pop %v1000
    %v1002 = vmul.f32 %v941, 1.442695
    %v1003 = vpow.pop %v1002
    %v1004 = vmul.f32 %v942, 1.442695
    %v1005 = vpow.pop %v1004
    %v1006 = vmul.f32 %v943, 1.442695
    %v1007 = vpow.pop %v1006
    %v1008 = vmul.f32 %v722, %v470
    %v1009 = vmul.f32 %v731, %v471
    %v1012 = vcombine.high %v1008, %v1008
    %v1014 = vunpack.c.l.s4 1966171168
    %v1015 = vunpack.c.0.s8 %v1014
    %v1016 = vlaneseq
    %v1017 = vshrl.u32 %v1016, 7
    %v1018 = vsub.s32 %v1015, %v1017
    %v1019 = vrot.slane %v1008, %v1018
    %v1021 = vunpack.c.l.s4 1966171168
    %v1022 = vunpack.c.0.s8 %v1021
    %v1023 = vlaneseq
    %v1024 = vshrl.u32 %v1023, 7
    %v1025 = vsub.s32 %v1022, %v1024
    %v1026 = vrot.slane %v1012, %v1025
    %v1027 = vcombine.high %v1019, %v1019
    %v1028 = vcombine.high %v1026, %v1026
    %v1030 = vunpack.c.l.s4 1966171168
    %v1031 = vunpack.c.0.s8 %v1030
    %v1032 = vlaneseq
    %v1033 = vshrl.u32 %v1032, 7
    %v1034 = vsub.s32 %v1031, %v1033
    %v1035 = vrot.slane %v1019, %v1034
    %v1037 = vunpack.c.l.s4 1966171168
    %v1038 = vunpack.c.0.s8 %v1037
    %v1039 = vlaneseq
    %v1040 = vshrl.u32 %v1039, 7
    %v1041 = vsub.s32 %v1038, %v1040
    %v1042 = vrot.slane %v1026, %v1041
    %v1044 = vunpack.c.l.s4 1966171168
    %v1045 = vunpack.c.0.s8 %v1044
    %v1046 = vlaneseq
    %v1047 = vshrl.u32 %v1046, 7
    %v1048 = vsub.s32 %v1045, %v1047
    %v1049 = vrot.slane %v1027, %v1048
    %v1051 = vunpack.c.l.s4 1966171168
    %v1052 = vunpack.c.0.s8 %v1051
    %v1053 = vlaneseq
    %v1054 = vshrl.u32 %v1053, 7
    %v1055 = vsub.s32 %v1052, %v1054
    %v1056 = vrot.slane %v1028, %v1055
    %v1057 = vcombine.high %v1035, %v1035
    %v1058 = vcombine.high %v1042, %v1042
    %v1059 = vcombine.high %v1049, %v1049
    %v1060 = vcombine.high %v1056, %v1056
    %v1061 = vcombine.high %v1009, %v1009
    %v1063 = vunpack.c.l.s4 1966171168
    %v1064 = vunpack.c.0.s8 %v1063
    %v1065 = vlaneseq
    %v1066 = vshrl.u32 %v1065, 7
    %v1067 = vsub.s32 %v1064, %v1066
    %v1068 = vrot.slane %v1009, %v1067
    %v1070 = vunpack.c.l.s4 1966171168
    %v1071 = vunpack.c.0.s8 %v1070
    %v1072 = vlaneseq
    %v1073 = vshrl.u32 %v1072, 7
    %v1074 = vsub.s32 %v1071, %v1073
    %v1075 = vrot.slane %v1061, %v1074
    %v1076 = vcombine.high %v1068, %v1068
    %v1077 = vcombine.high %v1075, %v1075
    %v1079 = vunpack.c.l.s4 1966171168
    %v1080 = vunpack.c.0.s8 %v1079
    %v1081 = vlaneseq
    %v1082 = vshrl.u32 %v1081, 7
    %v1083 = vsub.s32 %v1080, %v1082
    %v1084 = vrot.slane %v1068, %v1083
    %v1086 = vunpack.c.l.s4 1966171168
    %v1087 = vunpack.c.0.s8 %v1086
    %v1088 = vlaneseq
    %v1089 = vshrl.u32 %v1088, 7
    %v1090 = vsub.s32 %v1087, %v1089
    %v1091 = vrot.slane %v1075, %v1090
    %v1093 = vunpack.c.l.s4 1966171168
    %v1094 = vunpack.c.0.s8 %v1093
    %v1095 = vlaneseq
    %v1096 = vshrl.u32 %v1095, 7
    %v1097 = vsub.s32 %v1094, %v1096
    %v1098 = vrot.slane %v1076, %v1097
    %v1100 = vunpack.c.l.s4 1966171168
    %v1101 = vunpack.c.0.s8 %v1100
    %v1102 = vlaneseq
    %v1103 = vshrl.u32 %v1102, 7
    %v1104 = vsub.s32 %v1101, %v1103
    %v1105 = vrot.slane %v1077, %v1104
    %v1106 = vcombine.high %v1084, %v1084
    %v1107 = vcombine.high %v1091, %v1091
    %v1108 = vcombine.high %v1098, %v1098
    %v1109 = vcombine.high %v1105, %v1105
    %v1110 = vlaneseq
    %v1111 = vshrl.u32 %v1110, 7
    %v1112 = vsub.s32 0, %v1111
    %v1113 = vrot.slane %v546, %v1112
    %1115 = vbcast.lane.b32.xlu0 %v1113, 256
    %v1116 = vpop.permute.xlu0 %1115
    %s1118 = sor.u32 256, 8
    %1119 = vbcast.lane.b32.xlu0 %v1113, %s1118
    %v1120 = vpop.permute.xlu0 %1119
    %v1121 = vlaneseq
    %v1122 = vshrl.u32 %v1121, 7
    %v1123 = vsub.s32 1, %v1122
    %v1124 = vrot.slane %v546, %v1123
    %1126 = vbcast.lane.b32.xlu0 %v1124, 256
    %v1127 = vpop.permute.xlu0 %1126
    %s1129 = sor.u32 256, 8
    %1130 = vbcast.lane.b32.xlu0 %v1124, %s1129
    %v1131 = vpop.permute.xlu0 %1130
    %v1132 = vlaneseq
    %v1133 = vshrl.u32 %v1132, 7
    %v1134 = vsub.s32 2, %v1133
    %v1135 = vrot.slane %v546, %v1134
    %1137 = vbcast.lane.b32.xlu0 %v1135, 256
    %v1138 = vpop.permute.xlu0 %1137
    %s1140 = sor.u32 256, 8
    %1141 = vbcast.lane.b32.xlu0 %v1135, %s1140
    %v1142 = vpop.permute.xlu0 %1141
    %v1143 = vlaneseq
    %v1144 = vshrl.u32 %v1143, 7
    %v1145 = vsub.s32 3, %v1144
    %v1146 = vrot.slane %v546, %v1145
    %1148 = vbcast.lane.b32.xlu0 %v1146, 256
    %v1149 = vpop.permute.xlu0 %1148
    %s1151 = sor.u32 256, 8
    %1152 = vbcast.lane.b32.xlu0 %v1146, %s1151
    %v1153 = vpop.permute.xlu0 %1152
    %v1154 = vlaneseq
    %v1155 = vshrl.u32 %v1154, 7
    %v1156 = vsub.s32 4, %v1155
    %v1157 = vrot.slane %v546, %v1156
    %1159 = vbcast.lane.b32.xlu0 %v1157, 256
    %v1160 = vpop.permute.xlu0 %1159
    %s1162 = sor.u32 256, 8
    %1163 = vbcast.lane.b32.xlu0 %v1157, %s1162
    %v1164 = vpop.permute.xlu0 %1163
    %v1165 = vlaneseq
    %v1166 = vshrl.u32 %v1165, 7
    %v1167 = vsub.s32 5, %v1166
    %v1168 = vrot.slane %v546, %v1167
    %1170 = vbcast.lane.b32.xlu0 %v1168, 256
    %v1171 = vpop.permute.xlu0 %1170
    %s1173 = sor.u32 256, 8
    %1174 = vbcast.lane.b32.xlu0 %v1168, %s1173
    %v1175 = vpop.permute.xlu0 %1174
    %v1176 = vlaneseq
    %v1177 = vshrl.u32 %v1176, 7
    %v1178 = vsub.s32 6, %v1177
    %v1179 = vrot.slane %v546, %v1178
    %1181 = vbcast.lane.b32.xlu0 %v1179, 256
    %v1182 = vpop.permute.xlu0 %1181
    %s1184 = sor.u32 256, 8
    %1185 = vbcast.lane.b32.xlu0 %v1179, %s1184
    %v1186 = vpop.permute.xlu0 %1185
    %v1187 = vlaneseq
    %v1188 = vshrl.u32 %v1187, 7
    %v1189 = vsub.s32 7, %v1188
    %v1190 = vrot.slane %v546, %v1189
    %1192 = vbcast.lane.b32.xlu0 %v1190, 256
    %v1193 = vpop.permute.xlu0 %1192
    %s1195 = sor.u32 256, 8
    %1196 = vbcast.lane.b32.xlu0 %v1190, %s1195
    %v1197 = vpop.permute.xlu0 %1196
    %v1198 = vlaneseq
    %v1199 = vshrl.u32 %v1198, 7
    %v1200 = vsub.s32 0, %v1199
    %v1201 = vrot.slane %v551, %v1200
    %1203 = vbcast.lane.b32.xlu0 %v1201, 256
    %v1204 = vpop.permute.xlu0 %1203
    %s1206 = sor.u32 256, 8
    %1207 = vbcast.lane.b32.xlu0 %v1201, %s1206
    %v1208 = vpop.permute.xlu0 %1207
    %v1209 = vlaneseq
    %v1210 = vshrl.u32 %v1209, 7
    %v1211 = vsub.s32 1, %v1210
    %v1212 = vrot.slane %v551, %v1211
    %1214 = vbcast.lane.b32.xlu0 %v1212, 256
    %v1215 = vpop.permute.xlu0 %1214
    %s1217 = sor.u32 256, 8
    %1218 = vbcast.lane.b32.xlu0 %v1212, %s1217
    %v1219 = vpop.permute.xlu0 %1218
    %v1220 = vlaneseq
    %v1221 = vshrl.u32 %v1220, 7
    %v1222 = vsub.s32 2, %v1221
    %v1223 = vrot.slane %v551, %v1222
    %1225 = vbcast.lane.b32.xlu0 %v1223, 256
    %v1226 = vpop.permute.xlu0 %1225
    %s1228 = sor.u32 256, 8
    %1229 = vbcast.lane.b32.xlu0 %v1223, %s1228
    %v1230 = vpop.permute.xlu0 %1229
    %v1231 = vlaneseq
    %v1232 = vshrl.u32 %v1231, 7
    %v1233 = vsub.s32 3, %v1232
    %v1234 = vrot.slane %v551, %v1233
    %1236 = vbcast.lane.b32.xlu0 %v1234, 256
    %v1237 = vpop.permute.xlu0 %1236
    %s1239 = sor.u32 256, 8
    %1240 = vbcast.lane.b32.xlu0 %v1234, %s1239
    %v1241 = vpop.permute.xlu0 %1240
    %v1242 = vlaneseq
    %v1243 = vshrl.u32 %v1242, 7
    %v1244 = vsub.s32 4, %v1243
    %v1245 = vrot.slane %v551, %v1244
    %1247 = vbcast.lane.b32.xlu0 %v1245, 256
    %v1248 = vpop.permute.xlu0 %1247
    %s1250 = sor.u32 256, 8
    %1251 = vbcast.lane.b32.xlu0 %v1245, %s1250
    %v1252 = vpop.permute.xlu0 %1251
    %v1253 = vlaneseq
    %v1254 = vshrl.u32 %v1253, 7
    %v1255 = vsub.s32 5, %v1254
    %v1256 = vrot.slane %v551, %v1255
    %1258 = vbcast.lane.b32.xlu0 %v1256, 256
    %v1259 = vpop.permute.xlu0 %1258
    %s1261 = sor.u32 256, 8
    %1262 = vbcast.lane.b32.xlu0 %v1256, %s1261
    %v1263 = vpop.permute.xlu0 %1262
    %v1264 = vlaneseq
    %v1265 = vshrl.u32 %v1264, 7
    %v1266 = vsub.s32 6, %v1265
    %v1267 = vrot.slane %v551, %v1266
    %1269 = vbcast.lane.b32.xlu0 %v1267, 256
    %v1270 = vpop.permute.xlu0 %1269
    %s1272 = sor.u32 256, 8
    %1273 = vbcast.lane.b32.xlu0 %v1267, %s1272
    %v1274 = vpop.permute.xlu0 %1273
    %v1275 = vlaneseq
    %v1276 = vshrl.u32 %v1275, 7
    %v1277 = vsub.s32 7, %v1276
    %v1278 = vrot.slane %v551, %v1277
    %1280 = vbcast.lane.b32.xlu0 %v1278, 256
    %v1281 = vpop.permute.xlu0 %1280
    %s1283 = sor.u32 256, 8
    %1284 = vbcast.lane.b32.xlu0 %v1278, %s1283
    %v1285 = vpop.permute.xlu0 %1284
    %v1286 = vlaneseq
    %v1287 = vshrl.u32 %v1286, 7
    %v1288 = vsub.s32 0, %v1287
    %v1289 = vrot.slane %v1035, %v1288
    %v1290 = vlaneseq
    %v1291 = vshrl.u32 %v1290, 7
    %v1292 = vsub.s32 0, %v1291
    %v1293 = vrot.slane %v1049, %v1292
    %v1294 = vlaneseq
    %v1295 = vshrl.u32 %v1294, 7
    %v1296 = vsub.s32 0, %v1295
    %v1297 = vrot.slane %v1057, %v1296
    %v1298 = vlaneseq
    %v1299 = vshrl.u32 %v1298, 7
    %v1300 = vsub.s32 0, %v1299
    %v1301 = vrot.slane %v1059, %v1300
    %v1302 = vlaneseq
    %v1303 = vshrl.u32 %v1302, 7
    %v1304 = vsub.s32 0, %v1303
    %v1305 = vrot.slane %v1042, %v1304
    %v1306 = vlaneseq
    %v1307 = vshrl.u32 %v1306, 7
    %v1308 = vsub.s32 0, %v1307
    %v1309 = vrot.slane %v1056, %v1308
    %v1310 = vlaneseq
    %v1311 = vshrl.u32 %v1310, 7
    %v1312 = vsub.s32 0, %v1311
    %v1313 = vrot.slane %v1058, %v1312
    %v1314 = vlaneseq
    %v1315 = vshrl.u32 %v1314, 7
    %v1316 = vsub.s32 0, %v1315
    %v1317 = vrot.slane %v1060, %v1316
    %v1318 = vlaneseq
    %v1319 = vshrl.u32 %v1318, 7
    %v1320 = vsub.s32 0, %v1319
    %v1321 = vrot.slane %v1084, %v1320
    %v1322 = vlaneseq
    %v1323 = vshrl.u32 %v1322, 7
    %v1324 = vsub.s32 0, %v1323
    %v1325 = vrot.slane %v1098, %v1324
    %v1326 = vlaneseq
    %v1327 = vshrl.u32 %v1326, 7
    %v1328 = vsub.s32 0, %v1327
    %v1329 = vrot.slane %v1106, %v1328
    %v1330 = vlaneseq
    %v1331 = vshrl.u32 %v1330, 7
    %v1332 = vsub.s32 0, %v1331
    %v1333 = vrot.slane %v1108, %v1332
    %v1334 = vlaneseq
    %v1335 = vshrl.u32 %v1334, 7
    %v1336 = vsub.s32 0, %v1335
    %v1337 = vrot.slane %v1091, %v1336
    %v1338 = vlaneseq
    %v1339 = vshrl.u32 %v1338, 7
    %v1340 = vsub.s32 0, %v1339
    %v1341 = vrot.slane %v1105, %v1340
    %v1342 = vlaneseq
    %v1343 = vshrl.u32 %v1342, 7
    %v1344 = vsub.s32 0, %v1343
    %v1345 = vrot.slane %v1107, %v1344
    %v1346 = vlaneseq
    %v1347 = vshrl.u32 %v1346, 7
    %v1348 = vsub.s32 0, %v1347
    %v1349 = vrot.slane %v1109, %v1348
    %v1366 = vmul.f32 %v1289, %v1116
    %v1367 = vmul.f32 %v1289, %v1120
    %v1368 = vmul.f32 %v1293, %v1127
    %v1369 = vmul.f32 %v1293, %v1131
    %v1370 = vmul.f32 %v1297, %v1138
    %v1371 = vmul.f32 %v1297, %v1142
    %v1372 = vmul.f32 %v1301, %v1149
    %v1373 = vmul.f32 %v1301, %v1153
    %v1374 = vmul.f32 %v1305, %v1160
    %v1375 = vmul.f32 %v1305, %v1164
    %v1376 = vmul.f32 %v1309, %v1171
    %v1377 = vmul.f32 %v1309, %v1175
    %v1378 = vmul.f32 %v1313, %v1182
    %v1379 = vmul.f32 %v1313, %v1186
    %v1380 = vmul.f32 %v1317, %v1193
    %v1381 = vmul.f32 %v1317, %v1197
    %v1382 = vmul.f32 %v1321, %v1204
    %v1383 = vmul.f32 %v1321, %v1208
    %v1384 = vmul.f32 %v1325, %v1215
    %v1385 = vmul.f32 %v1325, %v1219
    %v1386 = vmul.f32 %v1329, %v1226
    %v1387 = vmul.f32 %v1329, %v1230
    %v1388 = vmul.f32 %v1333, %v1237
    %v1389 = vmul.f32 %v1333, %v1241
    %v1390 = vmul.f32 %v1337, %v1248
    %v1391 = vmul.f32 %v1337, %v1252
    %v1392 = vmul.f32 %v1341, %v1259
    %v1393 = vmul.f32 %v1341, %v1263
    %v1394 = vmul.f32 %v1345, %v1270
    %v1395 = vmul.f32 %v1345, %v1274
    %v1396 = vmul.f32 %v1349, %v1281
    %v1397 = vmul.f32 %v1349, %v1285
    %v1398 = vmul.f32 %v945, 0.0
    %v1399 = vmul.f32 %v947, 0.0
    %v1400 = vmul.f32 %v977, 0.0
    %v1401 = vmul.f32 %v979, 0.0
    %v1402 = vadd.f32 %v1398, %v1366
    %v1403 = vadd.f32 %v1399, %v1367
    %v1404 = vadd.f32 %v1400, %v1382
    %v1405 = vadd.f32 %v1401, %v1383
    %v1406 = vmul.f32 %v949, %v1402
    %v1407 = vmul.f32 %v951, %v1403
    %v1408 = vmul.f32 %v981, %v1404
    %v1409 = vmul.f32 %v983, %v1405
    %v1410 = vadd.f32 %v1406, %v1368
    %v1411 = vadd.f32 %v1407, %v1369
    %v1412 = vadd.f32 %v1408, %v1384
    %v1413 = vadd.f32 %v1409, %v1385
    %v1414 = vmul.f32 %v953, %v1410
    %v1415 = vmul.f32 %v955, %v1411
    %v1416 = vmul.f32 %v985, %v1412
    %v1417 = vmul.f32 %v987, %v1413
    %v1418 = vadd.f32 %v1414, %v1370
    %v1419 = vadd.f32 %v1415, %v1371
    %v1420 = vadd.f32 %v1416, %v1386
    %v1421 = vadd.f32 %v1417, %v1387
    %v1422 = vmul.f32 %v957, %v1418
    %v1423 = vmul.f32 %v959, %v1419
    %v1424 = vmul.f32 %v989, %v1420
    %v1425 = vmul.f32 %v991, %v1421
    %v1426 = vadd.f32 %v1422, %v1372
    %v1427 = vadd.f32 %v1423, %v1373
    %v1428 = vadd.f32 %v1424, %v1388
    %v1429 = vadd.f32 %v1425, %v1389
    %v1430 = vmul.f32 %v961, %v1426
    %v1431 = vmul.f32 %v963, %v1427
    %v1432 = vmul.f32 %v993, %v1428
    %v1433 = vmul.f32 %v995, %v1429
    %v1434 = vadd.f32 %v1430, %v1374
    %v1435 = vadd.f32 %v1431, %v1375
    %v1436 = vadd.f32 %v1432, %v1390
    %v1437 = vadd.f32 %v1433, %v1391
    %v1438 = vmul.f32 %v965, %v1434
    %v1439 = vmul.f32 %v967, %v1435
    %v1440 = vmul.f32 %v997, %v1436
    %v1441 = vmul.f32 %v999, %v1437
    %v1442 = vadd.f32 %v1438, %v1376
    %v1443 = vadd.f32 %v1439, %v1377
    %v1444 = vadd.f32 %v1440, %v1392
    %v1445 = vadd.f32 %v1441, %v1393
    %v1446 = vmul.f32 %v969, %v1442
    %v1447 = vmul.f32 %v971, %v1443
    %v1448 = vmul.f32 %v1001, %v1444
    %v1449 = vmul.f32 %v1003, %v1445
    %v1450 = vadd.f32 %v1446, %v1378
    %v1451 = vadd.f32 %v1447, %v1379
    %v1452 = vadd.f32 %v1448, %v1394
    %v1453 = vadd.f32 %v1449, %v1395
    %v1454 = vmul.f32 %v973, %v1450
    %v1455 = vmul.f32 %v975, %v1451
    %v1456 = vmul.f32 %v1005, %v1452
    %v1457 = vmul.f32 %v1007, %v1453
    %v1458 = vadd.f32 %v1454, %v1380
    %v1459 = vadd.f32 %v1455, %v1381
    %v1460 = vadd.f32 %v1456, %v1396
    %v1461 = vadd.f32 %v1457, %v1397
    %v1462 = vlaneseq
    %v1463 = vshrl.u32 %v1462, 7
    %v1464 = vsub.s32 0, %v1463
    %v1465 = vrot.slane %v621, %v1464
    %1467 = vbcast.lane.b32.xlu0 %v1465, 256
    %v1468 = vpop.permute.xlu0 %1467
    %s1470 = sor.u32 256, 8
    %1471 = vbcast.lane.b32.xlu0 %v1465, %s1470
    %v1472 = vpop.permute.xlu0 %1471
    %v1473 = vlaneseq
    %v1474 = vshrl.u32 %v1473, 7
    %v1475 = vsub.s32 1, %v1474
    %v1476 = vrot.slane %v621, %v1475
    %1478 = vbcast.lane.b32.xlu0 %v1476, 256
    %v1479 = vpop.permute.xlu0 %1478
    %s1481 = sor.u32 256, 8
    %1482 = vbcast.lane.b32.xlu0 %v1476, %s1481
    %v1483 = vpop.permute.xlu0 %1482
    %v1484 = vlaneseq
    %v1485 = vshrl.u32 %v1484, 7
    %v1486 = vsub.s32 2, %v1485
    %v1487 = vrot.slane %v621, %v1486
    %1489 = vbcast.lane.b32.xlu0 %v1487, 256
    %v1490 = vpop.permute.xlu0 %1489
    %s1492 = sor.u32 256, 8
    %1493 = vbcast.lane.b32.xlu0 %v1487, %s1492
    %v1494 = vpop.permute.xlu0 %1493
    %v1495 = vlaneseq
    %v1496 = vshrl.u32 %v1495, 7
    %v1497 = vsub.s32 3, %v1496
    %v1498 = vrot.slane %v621, %v1497
    %1500 = vbcast.lane.b32.xlu0 %v1498, 256
    %v1501 = vpop.permute.xlu0 %1500
    %s1503 = sor.u32 256, 8
    %1504 = vbcast.lane.b32.xlu0 %v1498, %s1503
    %v1505 = vpop.permute.xlu0 %1504
    %v1506 = vlaneseq
    %v1507 = vshrl.u32 %v1506, 7
    %v1508 = vsub.s32 4, %v1507
    %v1509 = vrot.slane %v621, %v1508
    %1511 = vbcast.lane.b32.xlu0 %v1509, 256
    %v1512 = vpop.permute.xlu0 %1511
    %s1514 = sor.u32 256, 8
    %1515 = vbcast.lane.b32.xlu0 %v1509, %s1514
    %v1516 = vpop.permute.xlu0 %1515
    %v1517 = vlaneseq
    %v1518 = vshrl.u32 %v1517, 7
    %v1519 = vsub.s32 5, %v1518
    %v1520 = vrot.slane %v621, %v1519
    %1522 = vbcast.lane.b32.xlu0 %v1520, 256
    %v1523 = vpop.permute.xlu0 %1522
    %s1525 = sor.u32 256, 8
    %1526 = vbcast.lane.b32.xlu0 %v1520, %s1525
    %v1527 = vpop.permute.xlu0 %1526
    %v1528 = vlaneseq
    %v1529 = vshrl.u32 %v1528, 7
    %v1530 = vsub.s32 6, %v1529
    %v1531 = vrot.slane %v621, %v1530
    %1533 = vbcast.lane.b32.xlu0 %v1531, 256
    %v1534 = vpop.permute.xlu0 %1533
    %s1536 = sor.u32 256, 8
    %1537 = vbcast.lane.b32.xlu0 %v1531, %s1536
    %v1538 = vpop.permute.xlu0 %1537
    %v1539 = vlaneseq
    %v1540 = vshrl.u32 %v1539, 7
    %v1541 = vsub.s32 7, %v1540
    %v1542 = vrot.slane %v621, %v1541
    %1544 = vbcast.lane.b32.xlu0 %v1542, 256
    %v1545 = vpop.permute.xlu0 %1544
    %s1547 = sor.u32 256, 8
    %1548 = vbcast.lane.b32.xlu0 %v1542, %s1547
    %v1549 = vpop.permute.xlu0 %1548
    %v1550 = vlaneseq
    %v1551 = vshrl.u32 %v1550, 7
    %v1552 = vsub.s32 0, %v1551
    %v1553 = vrot.slane %v626, %v1552
    %1555 = vbcast.lane.b32.xlu0 %v1553, 256
    %v1556 = vpop.permute.xlu0 %1555
    %s1558 = sor.u32 256, 8
    %1559 = vbcast.lane.b32.xlu0 %v1553, %s1558
    %v1560 = vpop.permute.xlu0 %1559
    %v1561 = vlaneseq
    %v1562 = vshrl.u32 %v1561, 7
    %v1563 = vsub.s32 1, %v1562
    %v1564 = vrot.slane %v626, %v1563
    %1566 = vbcast.lane.b32.xlu0 %v1564, 256
    %v1567 = vpop.permute.xlu0 %1566
    %s1569 = sor.u32 256, 8
    %1570 = vbcast.lane.b32.xlu0 %v1564, %s1569
    %v1571 = vpop.permute.xlu0 %1570
    %v1572 = vlaneseq
    %v1573 = vshrl.u32 %v1572, 7
    %v1574 = vsub.s32 2, %v1573
    %v1575 = vrot.slane %v626, %v1574
    %1577 = vbcast.lane.b32.xlu0 %v1575, 256
    %v1578 = vpop.permute.xlu0 %1577
    %s1580 = sor.u32 256, 8
    %1581 = vbcast.lane.b32.xlu0 %v1575, %s1580
    %v1582 = vpop.permute.xlu0 %1581
    %v1583 = vlaneseq
    %v1584 = vshrl.u32 %v1583, 7
    %v1585 = vsub.s32 3, %v1584
    %v1586 = vrot.slane %v626, %v1585
    %1588 = vbcast.lane.b32.xlu0 %v1586, 256
    %v1589 = vpop.permute.xlu0 %1588
    %s1591 = sor.u32 256, 8
    %1592 = vbcast.lane.b32.xlu0 %v1586, %s1591
    %v1593 = vpop.permute.xlu0 %1592
    %v1594 = vlaneseq
    %v1595 = vshrl.u32 %v1594, 7
    %v1596 = vsub.s32 4, %v1595
    %v1597 = vrot.slane %v626, %v1596
    %1599 = vbcast.lane.b32.xlu0 %v1597, 256
    %v1600 = vpop.permute.xlu0 %1599
    %s1602 = sor.u32 256, 8
    %1603 = vbcast.lane.b32.xlu0 %v1597, %s1602
    %v1604 = vpop.permute.xlu0 %1603
    %v1605 = vlaneseq
    %v1606 = vshrl.u32 %v1605, 7
    %v1607 = vsub.s32 5, %v1606
    %v1608 = vrot.slane %v626, %v1607
    %1610 = vbcast.lane.b32.xlu0 %v1608, 256
    %v1611 = vpop.permute.xlu0 %1610
    %s1613 = sor.u32 256, 8
    %1614 = vbcast.lane.b32.xlu0 %v1608, %s1613
    %v1615 = vpop.permute.xlu0 %1614
    %v1616 = vlaneseq
    %v1617 = vshrl.u32 %v1616, 7
    %v1618 = vsub.s32 6, %v1617
    %v1619 = vrot.slane %v626, %v1618
    %1621 = vbcast.lane.b32.xlu0 %v1619, 256
    %v1622 = vpop.permute.xlu0 %1621
    %s1624 = sor.u32 256, 8
    %1625 = vbcast.lane.b32.xlu0 %v1619, %s1624
    %v1626 = vpop.permute.xlu0 %1625
    %v1627 = vlaneseq
    %v1628 = vshrl.u32 %v1627, 7
    %v1629 = vsub.s32 7, %v1628
    %v1630 = vrot.slane %v626, %v1629
    %1632 = vbcast.lane.b32.xlu0 %v1630, 256
    %v1633 = vpop.permute.xlu0 %1632
    %s1635 = sor.u32 256, 8
    %1636 = vbcast.lane.b32.xlu0 %v1630, %s1635
    %v1637 = vpop.permute.xlu0 %1636
    %v1638 = vmul.f32 %v1402, %v1468
    %v1639 = vmul.f32 %v1403, %v1472
    %v1640 = vmul.f32 %v1410, %v1479
    %v1641 = vmul.f32 %v1411, %v1483
    %v1642 = vmul.f32 %v1418, %v1490
    %v1643 = vmul.f32 %v1419, %v1494
    %v1644 = vmul.f32 %v1426, %v1501
    %v1645 = vmul.f32 %v1427, %v1505
    %v1646 = vmul.f32 %v1434, %v1512
    %v1647 = vmul.f32 %v1435, %v1516
    %v1648 = vmul.f32 %v1442, %v1523
    %v1649 = vmul.f32 %v1443, %v1527
    %v1650 = vmul.f32 %v1450, %v1534
    %v1651 = vmul.f32 %v1451, %v1538
    %v1652 = vmul.f32 %v1458, %v1545
    %v1653 = vmul.f32 %v1459, %v1549
    %v1654 = vmul.f32 %v1404, %v1556
    %v1655 = vmul.f32 %v1405, %v1560
    %v1656 = vmul.f32 %v1412, %v1567
    %v1657 = vmul.f32 %v1413, %v1571
    %v1658 = vmul.f32 %v1420, %v1578
    %v1659 = vmul.f32 %v1421, %v1582
    %v1660 = vmul.f32 %v1428, %v1589
    %v1661 = vmul.f32 %v1429, %v1593
    %v1662 = vmul.f32 %v1436, %v1600
    %v1663 = vmul.f32 %v1437, %v1604
    %v1664 = vmul.f32 %v1444, %v1611
    %v1665 = vmul.f32 %v1445, %v1615
    %v1666 = vmul.f32 %v1452, %v1622
    %v1667 = vmul.f32 %v1453, %v1626
    %v1668 = vmul.f32 %v1460, %v1633
    %v1669 = vmul.f32 %v1461, %v1637
    %v1670 = vsel %vm472, %v1638, 0.0
    %v1671 = vsel %vm472, %v1639, 0.0
    %v1672 = vadd.f32 %v1670, %v1671
    %v1673 = vrot.slane %v1672, 4
    %v1674 = vadd.f32 %v1672, %v1673
    %v1675 = vrot.slane %v1674, 2
    %v1676 = vadd.f32 %v1674, %v1675
    %v1677 = vrot.slane %v1676, 1
    %v1678 = vadd.f32 %v1676, %v1677
    %v1679 = vsel %vm472, %v1640, 0.0
    %v1680 = vsel %vm472, %v1641, 0.0
    %v1681 = vadd.f32 %v1679, %v1680
    %v1682 = vrot.slane %v1681, 4
    %v1683 = vadd.f32 %v1681, %v1682
    %v1684 = vrot.slane %v1683, 2
    %v1685 = vadd.f32 %v1683, %v1684
    %v1686 = vrot.slane %v1685, 1
    %v1687 = vadd.f32 %v1685, %v1686
    %v1688 = vsel %vm472, %v1642, 0.0
    %v1689 = vsel %vm472, %v1643, 0.0
    %v1690 = vadd.f32 %v1688, %v1689
    %v1691 = vrot.slane %v1690, 4
    %v1692 = vadd.f32 %v1690, %v1691
    %v1693 = vrot.slane %v1692, 2
    %v1694 = vadd.f32 %v1692, %v1693
    %v1695 = vrot.slane %v1694, 1
    %v1696 = vadd.f32 %v1694, %v1695
    %v1697 = vsel %vm472, %v1644, 0.0
    %v1698 = vsel %vm472, %v1645, 0.0
    %v1699 = vadd.f32 %v1697, %v1698
    %v1700 = vrot.slane %v1699, 4
    %v1701 = vadd.f32 %v1699, %v1700
    %v1702 = vrot.slane %v1701, 2
    %v1703 = vadd.f32 %v1701, %v1702
    %v1704 = vrot.slane %v1703, 1
    %v1705 = vadd.f32 %v1703, %v1704
    %v1706 = vsel %vm472, %v1646, 0.0
    %v1707 = vsel %vm472, %v1647, 0.0
    %v1708 = vadd.f32 %v1706, %v1707
    %v1709 = vrot.slane %v1708, 4
    %v1710 = vadd.f32 %v1708, %v1709
    %v1711 = vrot.slane %v1710, 2
    %v1712 = vadd.f32 %v1710, %v1711
    %v1713 = vrot.slane %v1712, 1
    %v1714 = vadd.f32 %v1712, %v1713
    %v1715 = vsel %vm472, %v1648, 0.0
    %v1716 = vsel %vm472, %v1649, 0.0
    %v1717 = vadd.f32 %v1715, %v1716
    %v1718 = vrot.slane %v1717, 4
    %v1719 = vadd.f32 %v1717, %v1718
    %v1720 = vrot.slane %v1719, 2
    %v1721 = vadd.f32 %v1719, %v1720
    %v1722 = vrot.slane %v1721, 1
    %v1723 = vadd.f32 %v1721, %v1722
    %v1724 = vsel %vm472, %v1650, 0.0
    %v1725 = vsel %vm472, %v1651, 0.0
    %v1726 = vadd.f32 %v1724, %v1725
    %v1727 = vrot.slane %v1726, 4
    %v1728 = vadd.f32 %v1726, %v1727
    %v1729 = vrot.slane %v1728, 2
    %v1730 = vadd.f32 %v1728, %v1729
    %v1731 = vrot.slane %v1730, 1
    %v1732 = vadd.f32 %v1730, %v1731
    %v1733 = vsel %vm472, %v1652, 0.0
    %v1734 = vsel %vm472, %v1653, 0.0
    %v1735 = vadd.f32 %v1733, %v1734
    %v1736 = vrot.slane %v1735, 4
    %v1737 = vadd.f32 %v1735, %v1736
    %v1738 = vrot.slane %v1737, 2
    %v1739 = vadd.f32 %v1737, %v1738
    %v1740 = vrot.slane %v1739, 1
    %v1741 = vadd.f32 %v1739, %v1740
    %v1742 = vsel %vm472, %v1654, 0.0
    %v1743 = vsel %vm472, %v1655, 0.0
    %v1744 = vadd.f32 %v1742, %v1743
    %v1745 = vrot.slane %v1744, 4
    %v1746 = vadd.f32 %v1744, %v1745
    %v1747 = vrot.slane %v1746, 2
    %v1748 = vadd.f32 %v1746, %v1747
    %v1749 = vrot.slane %v1748, 1
    %v1750 = vadd.f32 %v1748, %v1749
    %v1751 = vsel %vm472, %v1656, 0.0
    %v1752 = vsel %vm472, %v1657, 0.0
    %v1753 = vadd.f32 %v1751, %v1752
    %v1754 = vrot.slane %v1753, 4
    %v1755 = vadd.f32 %v1753, %v1754
    %v1756 = vrot.slane %v1755, 2
    %v1757 = vadd.f32 %v1755, %v1756
    %v1758 = vrot.slane %v1757, 1
    %v1759 = vadd.f32 %v1757, %v1758
    %v1760 = vsel %vm472, %v1658, 0.0
    %v1761 = vsel %vm472, %v1659, 0.0
    %v1762 = vadd.f32 %v1760, %v1761
    %v1763 = vrot.slane %v1762, 4
    %v1764 = vadd.f32 %v1762, %v1763
    %v1765 = vrot.slane %v1764, 2
    %v1766 = vadd.f32 %v1764, %v1765
    %v1767 = vrot.slane %v1766, 1
    %v1768 = vadd.f32 %v1766, %v1767
    %v1769 = vsel %vm472, %v1660, 0.0
    %v1770 = vsel %vm472, %v1661, 0.0
    %v1771 = vadd.f32 %v1769, %v1770
    %v1772 = vrot.slane %v1771, 4
    %v1773 = vadd.f32 %v1771, %v1772
    %v1774 = vrot.slane %v1773, 2
    %v1775 = vadd.f32 %v1773, %v1774
    %v1776 = vrot.slane %v1775, 1
    %v1777 = vadd.f32 %v1775, %v1776
    %v1778 = vsel %vm472, %v1662, 0.0
    %v1779 = vsel %vm472, %v1663, 0.0
    %v1780 = vadd.f32 %v1778, %v1779
    %v1781 = vrot.slane %v1780, 4
    %v1782 = vadd.f32 %v1780, %v1781
    %v1783 = vrot.slane %v1782, 2
    %v1784 = vadd.f32 %v1782, %v1783
    %v1785 = vrot.slane %v1784, 1
    %v1786 = vadd.f32 %v1784, %v1785
    %v1787 = vsel %vm472, %v1664, 0.0
    %v1788 = vsel %vm472, %v1665, 0.0
    %v1789 = vadd.f32 %v1787, %v1788
    %v1790 = vrot.slane %v1789, 4
    %v1791 = vadd.f32 %v1789, %v1790
    %v1792 = vrot.slane %v1791, 2
    %v1793 = vadd.f32 %v1791, %v1792
    %v1794 = vrot.slane %v1793, 1
    %v1795 = vadd.f32 %v1793, %v1794
    %v1796 = vsel %vm472, %v1666, 0.0
    %v1797 = vsel %vm472, %v1667, 0.0
    %v1798 = vadd.f32 %v1796, %v1797
    %v1799 = vrot.slane %v1798, 4
    %v1800 = vadd.f32 %v1798, %v1799
    %v1801 = vrot.slane %v1800, 2
    %v1802 = vadd.f32 %v1800, %v1801
    %v1803 = vrot.slane %v1802, 1
    %v1804 = vadd.f32 %v1802, %v1803
    %v1805 = vsel %vm472, %v1668, 0.0
    %v1806 = vsel %vm472, %v1669, 0.0
    %v1807 = vadd.f32 %v1805, %v1806
    %v1808 = vrot.slane %v1807, 4
    %v1809 = vadd.f32 %v1807, %v1808
    %v1810 = vrot.slane %v1809, 2
    %v1811 = vadd.f32 %v1809, %v1810
    %v1812 = vrot.slane %v1811, 1
    %v1813 = vadd.f32 %v1811, %v1812
    %v1815 = vlaneseq
    %v1816 = vshrl.u32 %v1815, 7
    %v1817 = vsub.s32 0, %v1816
    %v1818 = vrot.slane %v229, %v1817
    %v1820 = vmul.f32 %v470, %v1818
    %v1821 = vmul.f32 %v471, %v1818
    %v1824 = vrot.slane %v1820, 1
    %v1825 = vrot.slane %v1820, 2
    %v1826 = vrot.slane %v1820, 3
    %v1827 = vrot.slane %v1820, 4
    %v1828 = vrot.slane %v1820, 5
    %v1829 = vrot.slane %v1820, 6
    %v1830 = vrot.slane %v1820, 7
    %v1831 = vrot.slane %v1821, 1
    %v1832 = vrot.slane %v1821, 2
    %v1833 = vrot.slane %v1821, 3
    %v1834 = vrot.slane %v1821, 4
    %v1835 = vrot.slane %v1821, 5
    %v1836 = vrot.slane %v1821, 6
    %v1837 = vrot.slane %v1821, 7
    %v1854 = vadd.f32 %v1678, %v1820
    %v1855 = vadd.f32 %v1687, %v1824
    %v1856 = vadd.f32 %v1696, %v1825
    %v1857 = vadd.f32 %v1705, %v1826
    %v1858 = vadd.f32 %v1714, %v1827
    %v1859 = vadd.f32 %v1723, %v1828
    %v1860 = vadd.f32 %v1732, %v1829
    %v1861 = vadd.f32 %v1741, %v1830
    %v1862 = vadd.f32 %v1750, %v1821
    %v1863 = vadd.f32 %v1759, %v1831
    %v1864 = vadd.f32 %v1768, %v1832
    %v1865 = vadd.f32 %v1777, %v1833
    %v1866 = vadd.f32 %v1786, %v1834
    %v1867 = vadd.f32 %v1795, %v1835
    %v1868 = vadd.f32 %v1804, %v1836
    %v1869 = vadd.f32 %v1813, %v1837
    %v1870 = vsub.f32 0.0, %v387
    %v1871 = vsub.f32 0.0, %v392
    %v1872 = vmul.f32 %v1870, 1.442695
    %v1873 = vpow.pop %v1872
    %v1874 = vmul.f32 %v1871, 1.442695
    %v1875 = vpow.pop %v1874
    %v1876 = vadd.f32 %v1873, 1.0
    %v1877 = vadd.f32 %v1875, 1.0
    %v1878 = vrcp.pop %v1876
    %v1879 = vrcp.pop %v1877
    %v1880 = vmul.f32 %v387, %v1878
    %v1881 = vmul.f32 %v392, %v1879
    %v1884 = vrot.slane %v1880, 1
    %v1885 = vrot.slane %v1880, 2
    %v1886 = vrot.slane %v1880, 3
    %v1887 = vrot.slane %v1880, 4
    %v1888 = vrot.slane %v1880, 5
    %v1889 = vrot.slane %v1880, 6
    %v1890 = vrot.slane %v1880, 7
    %v1891 = vrot.slane %v1881, 1
    %v1892 = vrot.slane %v1881, 2
    %v1893 = vrot.slane %v1881, 3
    %v1894 = vrot.slane %v1881, 4
    %v1895 = vrot.slane %v1881, 5
    %v1896 = vrot.slane %v1881, 6
    %v1897 = vrot.slane %v1881, 7
    %v1914 = vmul.f32 %v1854, %v1880
    %v1915 = vmul.f32 %v1855, %v1884
    %v1916 = vmul.f32 %v1856, %v1885
    %v1917 = vmul.f32 %v1857, %v1886
    %v1918 = vmul.f32 %v1858, %v1887
    %v1919 = vmul.f32 %v1859, %v1888
    %v1920 = vmul.f32 %v1860, %v1889
    %v1921 = vmul.f32 %v1861, %v1890
    %v1922 = vmul.f32 %v1862, %v1881
    %v1923 = vmul.f32 %v1863, %v1891
    %v1924 = vmul.f32 %v1864, %v1892
    %v1925 = vmul.f32 %v1865, %v1893
    %v1926 = vmul.f32 %v1866, %v1894
    %v1927 = vmul.f32 %v1867, %v1895
    %v1928 = vmul.f32 %v1868, %v1896
    %v1929 = vmul.f32 %v1869, %v1897
    %v1946 = vrot.slane %v1915, 7
    %vm1947 = vcmask 1041409
    %v1948 = vsel %vm1947, %v1946, %v1914
    %v1949 = vrot.slane %v1916, 6
    %vm1950 = vcmask 1042434
    %v1951 = vsel %vm1950, %v1949, %v1948
    %v1952 = vrot.slane %v1917, 5
    %vm1953 = vcmask 1043459
    %v1954 = vsel %vm1953, %v1952, %v1951
    %v1955 = vrot.slane %v1918, 4
    %vm1956 = vcmask 1044484
    %v1957 = vsel %vm1956, %v1955, %v1954
    %v1958 = vrot.slane %v1919, 3
    %vm1959 = vcmask 1045509
    %v1960 = vsel %vm1959, %v1958, %v1957
    %v1961 = vrot.slane %v1920, 2
    %vm1962 = vcmask 1046534
    %v1963 = vsel %vm1962, %v1961, %v1960
    %v1964 = vrot.slane %v1921, 1
    %vm1965 = vcmask 1047559
    %v1966 = vsel %vm1965, %v1964, %v1963
    %v1967 = vrot.slane %v1923, 7
    %v1968 = vsel %vm1947, %v1967, %v1922
    %v1969 = vrot.slane %v1924, 6
    %v1970 = vsel %vm1950, %v1969, %v1968
    %v1971 = vrot.slane %v1925, 5
    %v1972 = vsel %vm1953, %v1971, %v1970
    %v1973 = vrot.slane %v1926, 4
    %v1974 = vsel %vm1956, %v1973, %v1972
    %v1975 = vrot.slane %v1927, 3
    %v1976 = vsel %vm1959, %v1975, %v1974
    %v1977 = vrot.slane %v1928, 2
    %v1978 = vsel %vm1962, %v1977, %v1976
    %v1979 = vrot.slane %v1929, 1
    %v1980 = vsel %vm1965, %v1979, %v1978
    %v1981 = vsel %vm472, %v1966, 0
    %v1983 = vsel %vm472, %v1980, 0
    %1985 = vmatprep.subr.mxu0 0.0
    %1986 = vmatpush1.msra.mxu0 0.0
    %1987 = vmatprep.subr.mxu0 0.0
    %1988 = vmatpush1.msra.mxu0 0.0
    %1989 = vmatprep.subr.mxu0 0.0
    %1990 = vmatpush1.msra.mxu0 0.0
    %1991 = vmatprep.subr.mxu0 0.0
    %1992 = vmatpush1.msra.mxu0 0.0
    %1993 = vmatprep.subr.mxu0 0.0
    %1994 = vmatpush1.msra.mxu0 0.0
    %1995 = vmatprep.subr.mxu0 0.0
    %1996 = vmatpush1.msra.mxu0 0.0
    %1997 = vmatprep.subr.mxu0 0.0
    %1998 = vmatpush1.msra.mxu0 0.0
    %1999 = vmatprep.subr.mxu0 0.0
    %2000 = vmatpush1.msra.mxu0 0.0
    %2001 = vmatprep.subr.mxu0 0.0
    %2002 = vmatpush1.msra.mxu0 %v237
    %2003 = vmatprep.subr.mxu0 0.0
    %2004 = vmatpush1.msra.mxu0 %v236
    %2005 = vmatprep.subr.mxu0 0.0
    %2006 = vmatpush1.msra.mxu0 %v235
    %2007 = vmatprep.subr.mxu0 0.0
    %2008 = vmatpush1.msra.mxu0 %v234
    %2009 = vmatprep.subr.mxu0 0.0
    %2010 = vmatpush1.msra.mxu0 %v233
    %2011 = vmatprep.subr.mxu0 0.0
    %2012 = vmatpush1.msra.mxu0 %v232
    %2013 = vmatprep.subr.mxu0 0.0
    %2014 = vmatpush1.msra.mxu0 %v231
    %2015 = vmatprep.subr.mxu0 0.0
    %2016 = vmatpush1.msra.mxu0 %v230
    %2017 = vmatprep.subr.mxu0 0.0
    %2018 = vmatpush2.msra.mxu0 0.0
    %2019 = vmatprep.subr.mxu0 0.0
    %2020 = vmatpush2.msra.mxu0 0.0
    %2021 = vmatprep.subr.mxu0 0.0
    %2022 = vmatpush2.msra.mxu0 0.0
    %2023 = vmatprep.subr.mxu0 0.0
    %2024 = vmatpush2.msra.mxu0 0.0
    %2025 = vmatprep.subr.mxu0 0.0
    %2026 = vmatpush2.msra.mxu0 0.0
    %2027 = vmatprep.subr.mxu0 0.0
    %2028 = vmatpush2.msra.mxu0 0.0
    %2029 = vmatprep.subr.mxu0 0.0
    %2030 = vmatpush2.msra.mxu0 0.0
    %2031 = vmatprep.subr.mxu0 0.0
    %2032 = vmatpush2.msra.mxu0 0.0
    %2033 = vmatprep.subr.mxu0 0.0
    %2034 = vmatpush2.msra.mxu0 0.0
    %2035 = vmatprep.subr.mxu0 0.0
    %2036 = vmatpush2.msra.mxu0 0.0
    %2037 = vmatprep.subr.mxu0 0.0
    %2038 = vmatpush2.msra.mxu0 0.0
    %2039 = vmatprep.subr.mxu0 0.0
    %2040 = vmatpush2.msra.mxu0 0.0
    %2041 = vmatprep.subr.mxu0 0.0
    %2042 = vmatpush2.msra.mxu0 0.0
    %2043 = vmatprep.subr.mxu0 0.0
    %2044 = vmatpush2.msra.mxu0 0.0
    %2045 = vmatprep.subr.mxu0 0.0
    %2046 = vmatpush2.msra.mxu0 0.0
    %2047 = vmatprep.subr.mxu0 0.0
    %2048 = vmatpush2.msra.mxu0 0.0
    %2049 = vmatprep.mubr.f32.mxu0 0.0
    %2050 = vmatmul.mubr.f32.gmra.mxu0 %v1981
    %v2051 = vpop.f32.mrf.mxu0
    %v2052 = vadd.f32 0.0, %v2051
    %v2053 = vpop.f32.mrf.mxu0
    %2054 = vmatprep.mubr.f32.mxu0 0.0
    %2055 = vmatmul.mubr.f32.gmra.mxu0 %v1983
    %v2056 = vpop.f32.mrf.mxu0
    %v2057 = vadd.f32 0.0, %v2056
    %v2058 = vpop.f32.mrf.mxu0
    %2059 = vdwg.mxu0
    %s2060 = scalar_lea.vmem %s4, 32
    %v2061 = vld [vmem:[%s2060] sm:$0xff]
    %v2062 = vld [vmem:[%s2060 + $0x8] sm:$0xff]
    %v2063 = vld [vmem:[%s2060 + $0x10] sm:$0xff]
    %v2064 = vld [vmem:[%s2060 + $0x18] sm:$0xff]
    %s2065 = scalar_lea.vmem %s5, 32
    %v2066 = vld [vmem:[%s2065] sm:$0xff]
    %v2067 = vld [vmem:[%s2065 + $0x8] sm:$0xff]
    %v2068 = vld [vmem:[%s2065 + $0x10] sm:$0xff]
    %v2069 = vld [vmem:[%s2065 + $0x18] sm:$0xff]
    %s2070 = scalar_lea.vmem %s6, 4
    %v2071 = vld [vmem:[%s2070] sm:$0xf]
    %s2072 = scalar_lea.vmem %s7, 1
    %v2073 = vld [vmem:[%s2072] sm:$0x1]
    %s2074 = scalar_lea.vmem %s8, 64
    %v2075 = vld [vmem:[%s2074] sm:$0xff]
    %v2076 = vld [vmem:[%s2074 + $0x8] sm:$0xff]
    %v2077 = vld [vmem:[%s2074 + $0x10] sm:$0xff]
    %v2078 = vld [vmem:[%s2074 + $0x18] sm:$0xff]
    %v2079 = vld [vmem:[%s2074 + $0x20] sm:$0xff]
    %v2080 = vld [vmem:[%s2074 + $0x28] sm:$0xff]
    %v2081 = vld [vmem:[%s2074 + $0x30] sm:$0xff]
    %v2082 = vld [vmem:[%s2074 + $0x38] sm:$0xff]
    %s2083 = scalar_lea.vmem %s9, 64
    %v2084 = vld [vmem:[%s2083] sm:$0xff]
    %v2085 = vld [vmem:[%s2083 + $0x8] sm:$0xff]
    %v2086 = vld [vmem:[%s2083 + $0x10] sm:$0xff]
    %v2087 = vld [vmem:[%s2083 + $0x18] sm:$0xff]
    %v2088 = vld [vmem:[%s2083 + $0x20] sm:$0xff]
    %v2089 = vld [vmem:[%s2083 + $0x28] sm:$0xff]
    %v2090 = vld [vmem:[%s2083 + $0x30] sm:$0xff]
    %v2091 = vld [vmem:[%s2083 + $0x38] sm:$0xff]
    %s2092 = scalar_lea.vmem %s10, 64
    %v2093 = vld [vmem:[%s2092] sm:$0xff]
    %v2094 = vld [vmem:[%s2092 + $0x8] sm:$0xff]
    %v2095 = vld [vmem:[%s2092 + $0x10] sm:$0xff]
    %v2096 = vld [vmem:[%s2092 + $0x18] sm:$0xff]
    %v2097 = vld [vmem:[%s2092 + $0x20] sm:$0xff]
    %v2098 = vld [vmem:[%s2092 + $0x28] sm:$0xff]
    %v2099 = vld [vmem:[%s2092 + $0x30] sm:$0xff]
    %v2100 = vld [vmem:[%s2092 + $0x38] sm:$0xff]
    %s2101 = scalar_lea.vmem %s11, 1
    %v2102 = vld [vmem:[%s2101] sm:$0x1]
    %s2103 = scalar_lea.vmem %s12, 16
    %v2104 = vld [vmem:[%s2103] sm:$0xff]
    %v2105 = vld [vmem:[%s2103 + $0x8] sm:$0xff]
    %s2106 = scalar_lea.vmem %s13, 1
    %v2107 = vld [vmem:[%s2106] sm:$0x1]
    %s2108 = scalar_lea.vmem %s14, 64
    %v2109 = vld [vmem:[%s2108] sm:$0xff]
    %v2110 = vld [vmem:[%s2108 + $0x8] sm:$0xff]
    %v2111 = vld [vmem:[%s2108 + $0x10] sm:$0xff]
    %v2112 = vld [vmem:[%s2108 + $0x18] sm:$0xff]
    %v2113 = vld [vmem:[%s2108 + $0x20] sm:$0xff]
    %v2114 = vld [vmem:[%s2108 + $0x28] sm:$0xff]
    %v2115 = vld [vmem:[%s2108 + $0x30] sm:$0xff]
    %v2116 = vld [vmem:[%s2108 + $0x38] sm:$0xff]
    %v2118 = vsel %vm238, %v2052, 0
    %v2121 = vsel %vm238, %v2057, 0
    %2123 = vmatprep.subr.mxu0 0.0
    %2124 = vmatpush1.msra.mxu0 0.0
    %2125 = vmatprep.subr.mxu0 0.0
    %2126 = vmatpush1.msra.mxu0 0.0
    %2127 = vmatprep.subr.mxu0 0.0
    %2128 = vmatpush1.msra.mxu0 0.0
    %2129 = vmatprep.subr.mxu0 0.0
    %2130 = vmatpush1.msra.mxu0 0.0
    %2131 = vmatprep.subr.mxu0 0.0
    %2132 = vmatpush1.msra.mxu0 0.0
    %2133 = vmatprep.subr.mxu0 0.0
    %2134 = vmatpush1.msra.mxu0 0.0
    %2135 = vmatprep.subr.mxu0 0.0
    %2136 = vmatpush1.msra.mxu0 0.0
    %2137 = vmatprep.subr.mxu0 0.0
    %2138 = vmatpush1.msra.mxu0 0.0
    %2139 = vmatprep.subr.mxu0 0.0
    %2140 = vmatpush1.msra.mxu0 0.0
    %2141 = vmatprep.subr.mxu0 0.0
    %2142 = vmatpush1.msra.mxu0 0.0
    %2143 = vmatprep.subr.mxu0 0.0
    %2144 = vmatpush1.msra.mxu0 0.0
    %2145 = vmatprep.subr.mxu0 0.0
    %2146 = vmatpush1.msra.mxu0 0.0
    %2147 = vmatprep.subr.mxu0 0.0
    %2148 = vmatpush1.msra.mxu0 %v2064
    %2149 = vmatprep.subr.mxu0 0.0
    %2150 = vmatpush1.msra.mxu0 %v2063
    %2151 = vmatprep.subr.mxu0 0.0
    %2152 = vmatpush1.msra.mxu0 %v2062
    %2153 = vmatprep.subr.mxu0 0.0
    %2154 = vmatpush1.msra.mxu0 %v2061
    %2155 = vmatprep.subr.mxu0 0.0
    %2156 = vmatpush2.msra.mxu0 0.0
    %2157 = vmatprep.subr.mxu0 0.0
    %2158 = vmatpush2.msra.mxu0 0.0
    %2159 = vmatprep.subr.mxu0 0.0
    %2160 = vmatpush2.msra.mxu0 0.0
    %2161 = vmatprep.subr.mxu0 0.0
    %2162 = vmatpush2.msra.mxu0 0.0
    %2163 = vmatprep.subr.mxu0 0.0
    %2164 = vmatpush2.msra.mxu0 0.0
    %2165 = vmatprep.subr.mxu0 0.0
    %2166 = vmatpush2.msra.mxu0 0.0
    %2167 = vmatprep.subr.mxu0 0.0
    %2168 = vmatpush2.msra.mxu0 0.0
    %2169 = vmatprep.subr.mxu0 0.0
    %2170 = vmatpush2.msra.mxu0 0.0
    %2171 = vmatprep.subr.mxu0 0.0
    %2172 = vmatpush2.msra.mxu0 0.0
    %2173 = vmatprep.subr.mxu0 0.0
    %2174 = vmatpush2.msra.mxu0 0.0
    %2175 = vmatprep.subr.mxu0 0.0
    %2176 = vmatpush2.msra.mxu0 0.0
    %2177 = vmatprep.subr.mxu0 0.0
    %2178 = vmatpush2.msra.mxu0 0.0
    %2179 = vmatprep.subr.mxu0 0.0
    %2180 = vmatpush2.msra.mxu0 0.0
    %2181 = vmatprep.subr.mxu0 0.0
    %2182 = vmatpush2.msra.mxu0 0.0
    %2183 = vmatprep.subr.mxu0 0.0
    %2184 = vmatpush2.msra.mxu0 0.0
    %2185 = vmatprep.subr.mxu0 0.0
    %2186 = vmatpush2.msra.mxu0 0.0
    %2187 = vmatprep.mubr.f32.mxu0 0.0
    %2188 = vmatmul.mubr.f32.gmra.mxu0 %v2118
    %v2189 = vpop.f32.mrf.mxu0
    %v2190 = vadd.f32 0.0, %v2189
    %v2191 = vpop.f32.mrf.mxu0
    %2192 = vmatprep.mubr.f32.mxu0 0.0
    %2193 = vmatmul.mubr.f32.gmra.mxu0 %v2121
    %v2194 = vpop.f32.mrf.mxu0
    %v2195 = vadd.f32 0.0, %v2194
    %v2196 = vpop.f32.mrf.mxu0
    %2197 = vdwg.mxu0
    %2198 = vmatprep.subr.mxu0 0.0
    %2199 = vmatpush1.msra.mxu0 0.0
    %2200 = vmatprep.subr.mxu0 0.0
    %2201 = vmatpush1.msra.mxu0 0.0
    %2202 = vmatprep.subr.mxu0 0.0
    %2203 = vmatpush1.msra.mxu0 0.0
    %2204 = vmatprep.subr.mxu0 0.0
    %2205 = vmatpush1.msra.mxu0 0.0
    %2206 = vmatprep.subr.mxu0 0.0
    %2207 = vmatpush1.msra.mxu0 0.0
    %2208 = vmatprep.subr.mxu0 0.0
    %2209 = vmatpush1.msra.mxu0 0.0
    %2210 = vmatprep.subr.mxu0 0.0
    %2211 = vmatpush1.msra.mxu0 0.0
    %2212 = vmatprep.subr.mxu0 0.0
    %2213 = vmatpush1.msra.mxu0 0.0
    %2214 = vmatprep.subr.mxu0 0.0
    %2215 = vmatpush1.msra.mxu0 0.0
    %2216 = vmatprep.subr.mxu0 0.0
    %2217 = vmatpush1.msra.mxu0 0.0
    %2218 = vmatprep.subr.mxu0 0.0
    %2219 = vmatpush1.msra.mxu0 0.0
    %2220 = vmatprep.subr.mxu0 0.0
    %2221 = vmatpush1.msra.mxu0 0.0
    %2222 = vmatprep.subr.mxu0 0.0
    %2223 = vmatpush1.msra.mxu0 %v2069
    %2224 = vmatprep.subr.mxu0 0.0
    %2225 = vmatpush1.msra.mxu0 %v2068
    %2226 = vmatprep.subr.mxu0 0.0
    %2227 = vmatpush1.msra.mxu0 %v2067
    %2228 = vmatprep.subr.mxu0 0.0
    %2229 = vmatpush1.msra.mxu0 %v2066
    %2230 = vmatprep.subr.mxu0 0.0
    %2231 = vmatpush2.msra.mxu0 0.0
    %2232 = vmatprep.subr.mxu0 0.0
    %2233 = vmatpush2.msra.mxu0 0.0
    %2234 = vmatprep.subr.mxu0 0.0
    %2235 = vmatpush2.msra.mxu0 0.0
    %2236 = vmatprep.subr.mxu0 0.0
    %2237 = vmatpush2.msra.mxu0 0.0
    %2238 = vmatprep.subr.mxu0 0.0
    %2239 = vmatpush2.msra.mxu0 0.0
    %2240 = vmatprep.subr.mxu0 0.0
    %2241 = vmatpush2.msra.mxu0 0.0
    %2242 = vmatprep.subr.mxu0 0.0
    %2243 = vmatpush2.msra.mxu0 0.0
    %2244 = vmatprep.subr.mxu0 0.0
    %2245 = vmatpush2.msra.mxu0 0.0
    %2246 = vmatprep.subr.mxu0 0.0
    %2247 = vmatpush2.msra.mxu0 0.0
    %2248 = vmatprep.subr.mxu0 0.0
    %2249 = vmatpush2.msra.mxu0 0.0
    %2250 = vmatprep.subr.mxu0 0.0
    %2251 = vmatpush2.msra.mxu0 0.0
    %2252 = vmatprep.subr.mxu0 0.0
    %2253 = vmatpush2.msra.mxu0 0.0
    %2254 = vmatprep.subr.mxu0 0.0
    %2255 = vmatpush2.msra.mxu0 0.0
    %2256 = vmatprep.subr.mxu0 0.0
    %2257 = vmatpush2.msra.mxu0 0.0
    %2258 = vmatprep.subr.mxu0 0.0
    %2259 = vmatpush2.msra.mxu0 0.0
    %2260 = vmatprep.subr.mxu0 0.0
    %2261 = vmatpush2.msra.mxu0 0.0
    %2262 = vmatprep.mubr.f32.mxu0 0.0
    %2263 = vmatmul.mubr.f32.gmra.mxu0 %v2118
    %v2264 = vpop.f32.mrf.mxu0
    %v2265 = vadd.f32 0.0, %v2264
    %v2266 = vpop.f32.mrf.mxu0
    %2267 = vmatprep.mubr.f32.mxu0 0.0
    %2268 = vmatmul.mubr.f32.gmra.mxu0 %v2121
    %v2269 = vpop.f32.mrf.mxu0
    %v2270 = vadd.f32 0.0, %v2269
    %v2271 = vpop.f32.mrf.mxu0
    %2272 = vdwg.mxu0
    %v2273 = vlaneseq
    %v2274 = vshrl.u32 %v2273, 7
    %v2275 = vsub.s32 3, %v2274
    %v2276 = vrot.slane %v2071, %v2275
    %v2277 = vmul.f32 %v2190, %v2276
    %v2278 = vmul.f32 %v2195, %v2276
    %v2279 = vrot.slane %v2190, 7
    %v2280 = vrot.slane %v2195, 7
    %v2281 = vsel %vm403, %v2279, %v2280
    %v2282 = vsel %vm403, %v2280, %v2279
    %v2283 = vsel %vm406, %v2282, 0.0
    %v2284 = vsel %vm407, %v2281, 0.0
    %v2285 = vlaneseq
    %v2286 = vshrl.u32 %v2285, 7
    %v2287 = vsub.s32 2, %v2286
    %v2288 = vrot.slane %v2071, %v2287
    %v2289 = vmul.f32 %v2283, %v2288
    %v2290 = vmul.f32 %v2284, %v2288
    %v2291 = vadd.f32 %v2277, %v2289
    %v2292 = vadd.f32 %v2278, %v2290
    %v2293 = vrot.slane %v2190, 6
    %v2294 = vrot.slane %v2195, 6
    %v2295 = vsel %vm420, %v2293, %v2294
    %v2296 = vsel %vm420, %v2294, %v2293
    %v2297 = vsel %vm423, %v2296, 0.0
    %v2298 = vsel %vm424, %v2295, 0.0
    %v2299 = vlaneseq
    %v2300 = vshrl.u32 %v2299, 7
    %v2301 = vsub.s32 1, %v2300
    %v2302 = vrot.slane %v2071, %v2301
    %v2303 = vmul.f32 %v2297, %v2302
    %v2304 = vmul.f32 %v2298, %v2302
    %v2305 = vadd.f32 %v2291, %v2303
    %v2306 = vadd.f32 %v2292, %v2304
    %v2307 = vrot.slane %v2190, 5
    %v2308 = vrot.slane %v2195, 5
    %v2309 = vsel %vm437, %v2307, %v2308
    %v2310 = vsel %vm437, %v2308, %v2307
    %v2311 = vsel %vm440, %v2310, 0.0
    %v2312 = vsel %vm441, %v2309, 0.0
    %v2313 = vlaneseq
    %v2314 = vshrl.u32 %v2313, 7
    %v2315 = vsub.s32 0, %v2314
    %v2316 = vrot.slane %v2071, %v2315
    %v2317 = vmul.f32 %v2311, %v2316
    %v2318 = vmul.f32 %v2312, %v2316
    %v2319 = vadd.f32 %v2305, %v2317
    %v2320 = vadd.f32 %v2306, %v2318
    %v2322 = vlaneseq
    %v2323 = vshrl.u32 %v2322, 7
    %v2324 = vsub.s32 0, %v2323
    %v2325 = vrot.slane %v2073, %v2324
    %v2327 = vadd.f32 %v2319, %v2325
    %v2328 = vadd.f32 %v2320, %v2325
    %v2329 = vsub.f32 0.0, %v2327
    %v2330 = vsub.f32 0.0, %v2328
    %v2331 = vmul.f32 %v2329, 1.442695
    %v2332 = vpow.pop %v2331
    %v2333 = vmul.f32 %v2330, 1.442695
    %v2334 = vpow.pop %v2333
    %v2335 = vadd.f32 %v2332, 1.0
    %v2336 = vadd.f32 %v2334, 1.0
    %v2337 = vrcp.pop %v2335
    %v2338 = vrcp.pop %v2336
    %v2339 = vmul.f32 %v2327, %v2337
    %v2340 = vmul.f32 %v2328, %v2338
    %v2342 = vsel %vm472, %v2339, 0
    %v2345 = vsel %vm472, %v2340, 0
    %2347 = vmatprep.subr.mxu0 0.0
    %2348 = vmatpush1.msra.mxu0 0.0
    %2349 = vmatprep.subr.mxu0 0.0
    %2350 = vmatpush1.msra.mxu0 0.0
    %2351 = vmatprep.subr.mxu0 0.0
    %2352 = vmatpush1.msra.mxu0 0.0
    %2353 = vmatprep.subr.mxu0 0.0
    %2354 = vmatpush1.msra.mxu0 0.0
    %2355 = vmatprep.subr.mxu0 0.0
    %2356 = vmatpush1.msra.mxu0 0.0
    %2357 = vmatprep.subr.mxu0 0.0
    %2358 = vmatpush1.msra.mxu0 0.0
    %2359 = vmatprep.subr.mxu0 0.0
    %2360 = vmatpush1.msra.mxu0 0.0
    %2361 = vmatprep.subr.mxu0 0.0
    %2362 = vmatpush1.msra.mxu0 0.0
    %2363 = vmatprep.subr.mxu0 0.0
    %2364 = vmatpush1.msra.mxu0 %v2082
    %2365 = vmatprep.subr.mxu0 0.0
    %2366 = vmatpush1.msra.mxu0 %v2081
    %2367 = vmatprep.subr.mxu0 0.0
    %2368 = vmatpush1.msra.mxu0 %v2080
    %2369 = vmatprep.subr.mxu0 0.0
    %2370 = vmatpush1.msra.mxu0 %v2079
    %2371 = vmatprep.subr.mxu0 0.0
    %2372 = vmatpush1.msra.mxu0 %v2078
    %2373 = vmatprep.subr.mxu0 0.0
    %2374 = vmatpush1.msra.mxu0 %v2077
    %2375 = vmatprep.subr.mxu0 0.0
    %2376 = vmatpush1.msra.mxu0 %v2076
    %2377 = vmatprep.subr.mxu0 0.0
    %2378 = vmatpush1.msra.mxu0 %v2075
    %2379 = vmatprep.subr.mxu0 0.0
    %2380 = vmatpush2.msra.mxu0 0.0
    %2381 = vmatprep.subr.mxu0 0.0
    %2382 = vmatpush2.msra.mxu0 0.0
    %2383 = vmatprep.subr.mxu0 0.0
    %2384 = vmatpush2.msra.mxu0 0.0
    %2385 = vmatprep.subr.mxu0 0.0
    %2386 = vmatpush2.msra.mxu0 0.0
    %2387 = vmatprep.subr.mxu0 0.0
    %2388 = vmatpush2.msra.mxu0 0.0
    %2389 = vmatprep.subr.mxu0 0.0
    %2390 = vmatpush2.msra.mxu0 0.0
    %2391 = vmatprep.subr.mxu0 0.0
    %2392 = vmatpush2.msra.mxu0 0.0
    %2393 = vmatprep.subr.mxu0 0.0
    %2394 = vmatpush2.msra.mxu0 0.0
    %2395 = vmatprep.subr.mxu0 0.0
    %2396 = vmatpush2.msra.mxu0 0.0
    %2397 = vmatprep.subr.mxu0 0.0
    %2398 = vmatpush2.msra.mxu0 0.0
    %2399 = vmatprep.subr.mxu0 0.0
    %2400 = vmatpush2.msra.mxu0 0.0
    %2401 = vmatprep.subr.mxu0 0.0
    %2402 = vmatpush2.msra.mxu0 0.0
    %2403 = vmatprep.subr.mxu0 0.0
    %2404 = vmatpush2.msra.mxu0 0.0
    %2405 = vmatprep.subr.mxu0 0.0
    %2406 = vmatpush2.msra.mxu0 0.0
    %2407 = vmatprep.subr.mxu0 0.0
    %2408 = vmatpush2.msra.mxu0 0.0
    %2409 = vmatprep.subr.mxu0 0.0
    %2410 = vmatpush2.msra.mxu0 0.0
    %2411 = vmatprep.mubr.f32.mxu0 0.0
    %2412 = vmatmul.mubr.f32.gmra.mxu0 %v2342
    %v2413 = vpop.f32.mrf.mxu0
    %v2414 = vadd.f32 0.0, %v2413
    %v2415 = vpop.f32.mrf.mxu0
    %2416 = vmatprep.mubr.f32.mxu0 0.0
    %2417 = vmatmul.mubr.f32.gmra.mxu0 %v2345
    %v2418 = vpop.f32.mrf.mxu0
    %v2419 = vadd.f32 0.0, %v2418
    %v2420 = vpop.f32.mrf.mxu0
    %2421 = vdwg.mxu0
    %2422 = vmatprep.subr.mxu0 0.0
    %2423 = vmatpush1.msra.mxu0 0.0
    %2424 = vmatprep.subr.mxu0 0.0
    %2425 = vmatpush1.msra.mxu0 0.0
    %2426 = vmatprep.subr.mxu0 0.0
    %2427 = vmatpush1.msra.mxu0 0.0
    %2428 = vmatprep.subr.mxu0 0.0
    %2429 = vmatpush1.msra.mxu0 0.0
    %2430 = vmatprep.subr.mxu0 0.0
    %2431 = vmatpush1.msra.mxu0 0.0
    %2432 = vmatprep.subr.mxu0 0.0
    %2433 = vmatpush1.msra.mxu0 0.0
    %2434 = vmatprep.subr.mxu0 0.0
    %2435 = vmatpush1.msra.mxu0 0.0
    %2436 = vmatprep.subr.mxu0 0.0
    %2437 = vmatpush1.msra.mxu0 0.0
    %2438 = vmatprep.subr.mxu0 0.0
    %2439 = vmatpush1.msra.mxu0 %v2091
    %2440 = vmatprep.subr.mxu0 0.0
    %2441 = vmatpush1.msra.mxu0 %v2090
    %2442 = vmatprep.subr.mxu0 0.0
    %2443 = vmatpush1.msra.mxu0 %v2089
    %2444 = vmatprep.subr.mxu0 0.0
    %2445 = vmatpush1.msra.mxu0 %v2088
    %2446 = vmatprep.subr.mxu0 0.0
    %2447 = vmatpush1.msra.mxu0 %v2087
    %2448 = vmatprep.subr.mxu0 0.0
    %2449 = vmatpush1.msra.mxu0 %v2086
    %2450 = vmatprep.subr.mxu0 0.0
    %2451 = vmatpush1.msra.mxu0 %v2085
    %2452 = vmatprep.subr.mxu0 0.0
    %2453 = vmatpush1.msra.mxu0 %v2084
    %2454 = vmatprep.subr.mxu0 0.0
    %2455 = vmatpush2.msra.mxu0 0.0
    %2456 = vmatprep.subr.mxu0 0.0
    %2457 = vmatpush2.msra.mxu0 0.0
    %2458 = vmatprep.subr.mxu0 0.0
    %2459 = vmatpush2.msra.mxu0 0.0
    %2460 = vmatprep.subr.mxu0 0.0
    %2461 = vmatpush2.msra.mxu0 0.0
    %2462 = vmatprep.subr.mxu0 0.0
    %2463 = vmatpush2.msra.mxu0 0.0
    %2464 = vmatprep.subr.mxu0 0.0
    %2465 = vmatpush2.msra.mxu0 0.0
    %2466 = vmatprep.subr.mxu0 0.0
    %2467 = vmatpush2.msra.mxu0 0.0
    %2468 = vmatprep.subr.mxu0 0.0
    %2469 = vmatpush2.msra.mxu0 0.0
    %2470 = vmatprep.subr.mxu0 0.0
    %2471 = vmatpush2.msra.mxu0 0.0
    %2472 = vmatprep.subr.mxu0 0.0
    %2473 = vmatpush2.msra.mxu0 0.0
    %2474 = vmatprep.subr.mxu0 0.0
    %2475 = vmatpush2.msra.mxu0 0.0
    %2476 = vmatprep.subr.mxu0 0.0
    %2477 = vmatpush2.msra.mxu0 0.0
    %2478 = vmatprep.subr.mxu0 0.0
    %2479 = vmatpush2.msra.mxu0 0.0
    %2480 = vmatprep.subr.mxu0 0.0
    %2481 = vmatpush2.msra.mxu0 0.0
    %2482 = vmatprep.subr.mxu0 0.0
    %2483 = vmatpush2.msra.mxu0 0.0
    %2484 = vmatprep.subr.mxu0 0.0
    %2485 = vmatpush2.msra.mxu0 0.0
    %2486 = vmatprep.mubr.f32.mxu0 0.0
    %2487 = vmatmul.mubr.f32.gmra.mxu0 %v2342
    %v2488 = vpop.f32.mrf.mxu0
    %v2489 = vadd.f32 0.0, %v2488
    %v2490 = vpop.f32.mrf.mxu0
    %2491 = vmatprep.mubr.f32.mxu0 0.0
    %2492 = vmatmul.mubr.f32.gmra.mxu0 %v2345
    %v2493 = vpop.f32.mrf.mxu0
    %v2494 = vadd.f32 0.0, %v2493
    %v2495 = vpop.f32.mrf.mxu0
    %2496 = vdwg.mxu0
    %v2498 = vlaneseq
    %v2499 = vshrl.u32 %v2498, 7
    %v2500 = vsub.s32 0, %v2499
    %v2501 = vrot.slane %v2102, %v2500
    %2503 = vmatprep.subr.mxu0 0.0
    %2504 = vmatpush1.msra.mxu0 0.0
    %2505 = vmatprep.subr.mxu0 0.0
    %2506 = vmatpush1.msra.mxu0 0.0
    %2507 = vmatprep.subr.mxu0 0.0
    %2508 = vmatpush1.msra.mxu0 0.0
    %2509 = vmatprep.subr.mxu0 0.0
    %2510 = vmatpush1.msra.mxu0 0.0
    %2511 = vmatprep.subr.mxu0 0.0
    %2512 = vmatpush1.msra.mxu0 0.0
    %2513 = vmatprep.subr.mxu0 0.0
    %2514 = vmatpush1.msra.mxu0 0.0
    %2515 = vmatprep.subr.mxu0 0.0
    %2516 = vmatpush1.msra.mxu0 0.0
    %2517 = vmatprep.subr.mxu0 0.0
    %2518 = vmatpush1.msra.mxu0 0.0
    %2519 = vmatprep.subr.mxu0 0.0
    %2520 = vmatpush1.msra.mxu0 %v2100
    %2521 = vmatprep.subr.mxu0 0.0
    %2522 = vmatpush1.msra.mxu0 %v2099
    %2523 = vmatprep.subr.mxu0 0.0
    %2524 = vmatpush1.msra.mxu0 %v2098
    %2525 = vmatprep.subr.mxu0 0.0
    %2526 = vmatpush1.msra.mxu0 %v2097
    %2527 = vmatprep.subr.mxu0 0.0
    %2528 = vmatpush1.msra.mxu0 %v2096
    %2529 = vmatprep.subr.mxu0 0.0
    %2530 = vmatpush1.msra.mxu0 %v2095
    %2531 = vmatprep.subr.mxu0 0.0
    %2532 = vmatpush1.msra.mxu0 %v2094
    %2533 = vmatprep.subr.mxu0 0.0
    %2534 = vmatpush1.msra.mxu0 %v2093
    %2535 = vmatprep.subr.mxu0 0.0
    %2536 = vmatpush2.msra.mxu0 0.0
    %2537 = vmatprep.subr.mxu0 0.0
    %2538 = vmatpush2.msra.mxu0 0.0
    %2539 = vmatprep.subr.mxu0 0.0
    %2540 = vmatpush2.msra.mxu0 0.0
    %2541 = vmatprep.subr.mxu0 0.0
    %2542 = vmatpush2.msra.mxu0 0.0
    %2543 = vmatprep.subr.mxu0 0.0
    %2544 = vmatpush2.msra.mxu0 0.0
    %2545 = vmatprep.subr.mxu0 0.0
    %2546 = vmatpush2.msra.mxu0 0.0
    %2547 = vmatprep.subr.mxu0 0.0
    %2548 = vmatpush2.msra.mxu0 0.0
    %2549 = vmatprep.subr.mxu0 0.0
    %2550 = vmatpush2.msra.mxu0 0.0
    %2551 = vmatprep.subr.mxu0 0.0
    %2552 = vmatpush2.msra.mxu0 0.0
    %2553 = vmatprep.subr.mxu0 0.0
    %2554 = vmatpush2.msra.mxu0 0.0
    %2555 = vmatprep.subr.mxu0 0.0
    %2556 = vmatpush2.msra.mxu0 0.0
    %2557 = vmatprep.subr.mxu0 0.0
    %2558 = vmatpush2.msra.mxu0 0.0
    %2559 = vmatprep.subr.mxu0 0.0
    %2560 = vmatpush2.msra.mxu0 0.0
    %2561 = vmatprep.subr.mxu0 0.0
    %2562 = vmatpush2.msra.mxu0 0.0
    %2563 = vmatprep.subr.mxu0 0.0
    %2564 = vmatpush2.msra.mxu0 0.0
    %2565 = vmatprep.subr.mxu0 0.0
    %2566 = vmatpush2.msra.mxu0 0.0
    %2567 = vmatprep.mubr.f32.mxu0 0.0
    %2568 = vmatmul.mubr.f32.gmra.mxu0 %v2342
    %v2569 = vpop.f32.mrf.mxu0
    %v2570 = vadd.f32 %v2501, %v2569
    %v2571 = vpop.f32.mrf.mxu0
    %2572 = vmatprep.mubr.f32.mxu0 0.0
    %2573 = vmatmul.mubr.f32.gmra.mxu0 %v2345
    %v2574 = vpop.f32.mrf.mxu0
    %v2575 = vadd.f32 %v2501, %v2574
    %v2576 = vpop.f32.mrf.mxu0
    %2577 = vdwg.mxu0
    %v2578 = vmul.f32 %v2570, 1.442695
    %v2579 = vpow.pop %v2578
    %v2580 = vmul.f32 %v2575, 1.442695
    %v2581 = vpow.pop %v2580
    %v2582 = vadd.f32 %v2579, 1.0
    %v2583 = vlog2.pop %v2582
    %v2584 = vmul.f32 %v2583, 0.6931472
    %v2585 = vmul.f32 -0.5, %v2579
    %v2586 = vadd.f32 %v2585, 1.0
    %v2587 = vmul.f32 %v2586, %v2579
    %v2588 = vand.u32 2147483647, %v2579
    %vm2589 = vcmp.lt.f32.partialorder %v2588, 0.0004427343
    %v2590 = vsel %vm2589, %v2587, %v2584
    %v2591 = vadd.f32 %v2581, 1.0
    %v2592 = vlog2.pop %v2591
    %v2593 = vmul.f32 %v2592, 0.6931472
    %v2594 = vmul.f32 -0.5, %v2581
    %v2595 = vadd.f32 %v2594, 1.0
    %v2596 = vmul.f32 %v2595, %v2581
    %v2597 = vand.u32 2147483647, %v2581
    %vm2598 = vcmp.lt.f32.partialorder %v2597, 0.0004427343
    %v2599 = vsel %vm2598, %v2596, %v2593
    %v2602 = vcombine.high %v2590, %v2590
    %v2604 = vunpack.c.l.s4 1966171168
    %v2605 = vunpack.c.0.s8 %v2604
    %v2606 = vlaneseq
    %v2607 = vshrl.u32 %v2606, 7
    %v2608 = vsub.s32 %v2605, %v2607
    %v2609 = vrot.slane %v2590, %v2608
    %v2611 = vunpack.c.l.s4 1966171168
    %v2612 = vunpack.c.0.s8 %v2611
    %v2613 = vlaneseq
    %v2614 = vshrl.u32 %v2613, 7
    %v2615 = vsub.s32 %v2612, %v2614
    %v2616 = vrot.slane %v2602, %v2615
    %v2617 = vcombine.high %v2609, %v2609
    %v2618 = vcombine.high %v2616, %v2616
    %v2620 = vunpack.c.l.s4 1966171168
    %v2621 = vunpack.c.0.s8 %v2620
    %v2622 = vlaneseq
    %v2623 = vshrl.u32 %v2622, 7
    %v2624 = vsub.s32 %v2621, %v2623
    %v2625 = vrot.slane %v2609, %v2624
    %v2627 = vunpack.c.l.s4 1966171168
    %v2628 = vunpack.c.0.s8 %v2627
    %v2629 = vlaneseq
    %v2630 = vshrl.u32 %v2629, 7
    %v2631 = vsub.s32 %v2628, %v2630
    %v2632 = vrot.slane %v2616, %v2631
    %v2634 = vunpack.c.l.s4 1966171168
    %v2635 = vunpack.c.0.s8 %v2634
    %v2636 = vlaneseq
    %v2637 = vshrl.u32 %v2636, 7
    %v2638 = vsub.s32 %v2635, %v2637
    %v2639 = vrot.slane %v2617, %v2638
    %v2641 = vunpack.c.l.s4 1966171168
    %v2642 = vunpack.c.0.s8 %v2641
    %v2643 = vlaneseq
    %v2644 = vshrl.u32 %v2643, 7
    %v2645 = vsub.s32 %v2642, %v2644
    %v2646 = vrot.slane %v2618, %v2645
    %v2647 = vcombine.high %v2625, %v2625
    %v2648 = vcombine.high %v2632, %v2632
    %v2649 = vcombine.high %v2639, %v2639
    %v2650 = vcombine.high %v2646, %v2646
    %v2651 = vcombine.high %v2599, %v2599
    %v2653 = vunpack.c.l.s4 1966171168
    %v2654 = vunpack.c.0.s8 %v2653
    %v2655 = vlaneseq
    %v2656 = vshrl.u32 %v2655, 7
    %v2657 = vsub.s32 %v2654, %v2656
    %v2658 = vrot.slane %v2599, %v2657
    %v2660 = vunpack.c.l.s4 1966171168
    %v2661 = vunpack.c.0.s8 %v2660
    %v2662 = vlaneseq
    %v2663 = vshrl.u32 %v2662, 7
    %v2664 = vsub.s32 %v2661, %v2663
    %v2665 = vrot.slane %v2651, %v2664
    %v2666 = vcombine.high %v2658, %v2658
    %v2667 = vcombine.high %v2665, %v2665
    %v2669 = vunpack.c.l.s4 1966171168
    %v2670 = vunpack.c.0.s8 %v2669
    %v2671 = vlaneseq
    %v2672 = vshrl.u32 %v2671, 7
    %v2673 = vsub.s32 %v2670, %v2672
    %v2674 = vrot.slane %v2658, %v2673
    %v2676 = vunpack.c.l.s4 1966171168
    %v2677 = vunpack.c.0.s8 %v2676
    %v2678 = vlaneseq
    %v2679 = vshrl.u32 %v2678, 7
    %v2680 = vsub.s32 %v2677, %v2679
    %v2681 = vrot.slane %v2665, %v2680
    %v2683 = vunpack.c.l.s4 1966171168
    %v2684 = vunpack.c.0.s8 %v2683
    %v2685 = vlaneseq
    %v2686 = vshrl.u32 %v2685, 7
    %v2687 = vsub.s32 %v2684, %v2686
    %v2688 = vrot.slane %v2666, %v2687
    %v2690 = vunpack.c.l.s4 1966171168
    %v2691 = vunpack.c.0.s8 %v2690
    %v2692 = vlaneseq
    %v2693 = vshrl.u32 %v2692, 7
    %v2694 = vsub.s32 %v2691, %v2693
    %v2695 = vrot.slane %v2667, %v2694
    %v2696 = vcombine.high %v2674, %v2674
    %v2697 = vcombine.high %v2681, %v2681
    %v2698 = vcombine.high %v2688, %v2688
    %v2699 = vcombine.high %v2695, %v2695
    %v2700 = vlaneseq
    %v2701 = vshrl.u32 %v2700, 7
    %v2702 = vsub.s32 0, %v2701
    %v2703 = vrot.slane %v2625, %v2702
    %v2704 = vlaneseq
    %v2705 = vshrl.u32 %v2704, 7
    %v2706 = vsub.s32 0, %v2705
    %v2707 = vrot.slane %v2639, %v2706
    %v2708 = vlaneseq
    %v2709 = vshrl.u32 %v2708, 7
    %v2710 = vsub.s32 0, %v2709
    %v2711 = vrot.slane %v2647, %v2710
    %v2712 = vlaneseq
    %v2713 = vshrl.u32 %v2712, 7
    %v2714 = vsub.s32 0, %v2713
    %v2715 = vrot.slane %v2649, %v2714
    %v2716 = vlaneseq
    %v2717 = vshrl.u32 %v2716, 7
    %v2718 = vsub.s32 0, %v2717
    %v2719 = vrot.slane %v2632, %v2718
    %v2720 = vlaneseq
    %v2721 = vshrl.u32 %v2720, 7
    %v2722 = vsub.s32 0, %v2721
    %v2723 = vrot.slane %v2646, %v2722
    %v2724 = vlaneseq
    %v2725 = vshrl.u32 %v2724, 7
    %v2726 = vsub.s32 0, %v2725
    %v2727 = vrot.slane %v2648, %v2726
    %v2728 = vlaneseq
    %v2729 = vshrl.u32 %v2728, 7
    %v2730 = vsub.s32 0, %v2729
    %v2731 = vrot.slane %v2650, %v2730
    %v2732 = vlaneseq
    %v2733 = vshrl.u32 %v2732, 7
    %v2734 = vsub.s32 0, %v2733
    %v2735 = vrot.slane %v2674, %v2734
    %v2736 = vlaneseq
    %v2737 = vshrl.u32 %v2736, 7
    %v2738 = vsub.s32 0, %v2737
    %v2739 = vrot.slane %v2688, %v2738
    %v2740 = vlaneseq
    %v2741 = vshrl.u32 %v2740, 7
    %v2742 = vsub.s32 0, %v2741
    %v2743 = vrot.slane %v2696, %v2742
    %v2744 = vlaneseq
    %v2745 = vshrl.u32 %v2744, 7
    %v2746 = vsub.s32 0, %v2745
    %v2747 = vrot.slane %v2698, %v2746
    %v2748 = vlaneseq
    %v2749 = vshrl.u32 %v2748, 7
    %v2750 = vsub.s32 0, %v2749
    %v2751 = vrot.slane %v2681, %v2750
    %v2752 = vlaneseq
    %v2753 = vshrl.u32 %v2752, 7
    %v2754 = vsub.s32 0, %v2753
    %v2755 = vrot.slane %v2695, %v2754
    %v2756 = vlaneseq
    %v2757 = vshrl.u32 %v2756, 7
    %v2758 = vsub.s32 0, %v2757
    %v2759 = vrot.slane %v2697, %v2758
    %v2760 = vlaneseq
    %v2761 = vshrl.u32 %v2760, 7
    %v2762 = vsub.s32 0, %v2761
    %v2763 = vrot.slane %v2699, %v2762
    %v2780 = vmul.f32 %v2703, %v2104
    %v2781 = vmul.f32 %v2703, %v2105
    %v2782 = vmul.f32 %v2707, %v2104
    %v2783 = vmul.f32 %v2707, %v2105
    %v2784 = vmul.f32 %v2711, %v2104
    %v2785 = vmul.f32 %v2711, %v2105
    %v2786 = vmul.f32 %v2715, %v2104
    %v2787 = vmul.f32 %v2715, %v2105
    %v2788 = vmul.f32 %v2719, %v2104
    %v2789 = vmul.f32 %v2719, %v2105
    %v2790 = vmul.f32 %v2723, %v2104
    %v2791 = vmul.f32 %v2723, %v2105
    %v2792 = vmul.f32 %v2727, %v2104
    %v2793 = vmul.f32 %v2727, %v2105
    %v2794 = vmul.f32 %v2731, %v2104
    %v2795 = vmul.f32 %v2731, %v2105
    %v2796 = vmul.f32 %v2735, %v2104
    %v2797 = vmul.f32 %v2735, %v2105
    %v2798 = vmul.f32 %v2739, %v2104
    %v2799 = vmul.f32 %v2739, %v2105
    %v2800 = vmul.f32 %v2743, %v2104
    %v2801 = vmul.f32 %v2743, %v2105
    %v2802 = vmul.f32 %v2747, %v2104
    %v2803 = vmul.f32 %v2747, %v2105
    %v2804 = vmul.f32 %v2751, %v2104
    %v2805 = vmul.f32 %v2751, %v2105
    %v2806 = vmul.f32 %v2755, %v2104
    %v2807 = vmul.f32 %v2755, %v2105
    %v2808 = vmul.f32 %v2759, %v2104
    %v2809 = vmul.f32 %v2759, %v2105
    %v2810 = vmul.f32 %v2763, %v2104
    %v2811 = vmul.f32 %v2763, %v2105
    %v2812 = vmul.f32 %v2780, 1.442695
    %v2813 = vpow.pop %v2812
    %v2814 = vmul.f32 %v2781, 1.442695
    %v2815 = vpow.pop %v2814
    %v2816 = vmul.f32 %v2782, 1.442695
    %v2817 = vpow.pop %v2816
    %v2818 = vmul.f32 %v2783, 1.442695
    %v2819 = vpow.pop %v2818
    %v2820 = vmul.f32 %v2784, 1.442695
    %v2821 = vpow.pop %v2820
    %v2822 = vmul.f32 %v2785, 1.442695
    %v2823 = vpow.pop %v2822
    %v2824 = vmul.f32 %v2786, 1.442695
    %v2825 = vpow.pop %v2824
    %v2826 = vmul.f32 %v2787, 1.442695
    %v2827 = vpow.pop %v2826
    %v2828 = vmul.f32 %v2788, 1.442695
    %v2829 = vpow.pop %v2828
    %v2830 = vmul.f32 %v2789, 1.442695
    %v2831 = vpow.pop %v2830
    %v2832 = vmul.f32 %v2790, 1.442695
    %v2833 = vpow.pop %v2832
    %v2834 = vmul.f32 %v2791, 1.442695
    %v2835 = vpow.pop %v2834
    %v2836 = vmul.f32 %v2792, 1.442695
    %v2837 = vpow.pop %v2836
    %v2838 = vmul.f32 %v2793, 1.442695
    %v2839 = vpow.pop %v2838
    %v2840 = vmul.f32 %v2794, 1.442695
    %v2841 = vpow.pop %v2840
    %v2842 = vmul.f32 %v2795, 1.442695
    %v2843 = vpow.pop %v2842
    %v2844 = vmul.f32 %v2796, 1.442695
    %v2845 = vpow.pop %v2844
    %v2846 = vmul.f32 %v2797, 1.442695
    %v2847 = vpow.pop %v2846
    %v2848 = vmul.f32 %v2798, 1.442695
    %v2849 = vpow.pop %v2848
    %v2850 = vmul.f32 %v2799, 1.442695
    %v2851 = vpow.pop %v2850
    %v2852 = vmul.f32 %v2800, 1.442695
    %v2853 = vpow.pop %v2852
    %v2854 = vmul.f32 %v2801, 1.442695
    %v2855 = vpow.pop %v2854
    %v2856 = vmul.f32 %v2802, 1.442695
    %v2857 = vpow.pop %v2856
    %v2858 = vmul.f32 %v2803, 1.442695
    %v2859 = vpow.pop %v2858
    %v2860 = vmul.f32 %v2804, 1.442695
    %v2861 = vpow.pop %v2860
    %v2862 = vmul.f32 %v2805, 1.442695
    %v2863 = vpow.pop %v2862
    %v2864 = vmul.f32 %v2806, 1.442695
    %v2865 = vpow.pop %v2864
    %v2866 = vmul.f32 %v2807, 1.442695
    %v2867 = vpow.pop %v2866
    %v2868 = vmul.f32 %v2808, 1.442695
    %v2869 = vpow.pop %v2868
    %v2870 = vmul.f32 %v2809, 1.442695
    %v2871 = vpow.pop %v2870
    %v2872 = vmul.f32 %v2810, 1.442695
    %v2873 = vpow.pop %v2872
    %v2874 = vmul.f32 %v2811, 1.442695
    %v2875 = vpow.pop %v2874
    %v2876 = vmul.f32 %v2590, %v2339
    %v2877 = vmul.f32 %v2599, %v2340
    %v2880 = vcombine.high %v2876, %v2876
    %v2882 = vunpack.c.l.s4 1966171168
    %v2883 = vunpack.c.0.s8 %v2882
    %v2884 = vlaneseq
    %v2885 = vshrl.u32 %v2884, 7
    %v2886 = vsub.s32 %v2883, %v2885
    %v2887 = vrot.slane %v2876, %v2886
    %v2889 = vunpack.c.l.s4 1966171168
    %v2890 = vunpack.c.0.s8 %v2889
    %v2891 = vlaneseq
    %v2892 = vshrl.u32 %v2891, 7
    %v2893 = vsub.s32 %v2890, %v2892
    %v2894 = vrot.slane %v2880, %v2893
    %v2895 = vcombine.high %v2887, %v2887
    %v2896 = vcombine.high %v2894, %v2894
    %v2898 = vunpack.c.l.s4 1966171168
    %v2899 = vunpack.c.0.s8 %v2898
    %v2900 = vlaneseq
    %v2901 = vshrl.u32 %v2900, 7
    %v2902 = vsub.s32 %v2899, %v2901
    %v2903 = vrot.slane %v2887, %v2902
    %v2905 = vunpack.c.l.s4 1966171168
    %v2906 = vunpack.c.0.s8 %v2905
    %v2907 = vlaneseq
    %v2908 = vshrl.u32 %v2907, 7
    %v2909 = vsub.s32 %v2906, %v2908
    %v2910 = vrot.slane %v2894, %v2909
    %v2912 = vunpack.c.l.s4 1966171168
    %v2913 = vunpack.c.0.s8 %v2912
    %v2914 = vlaneseq
    %v2915 = vshrl.u32 %v2914, 7
    %v2916 = vsub.s32 %v2913, %v2915
    %v2917 = vrot.slane %v2895, %v2916
    %v2919 = vunpack.c.l.s4 1966171168
    %v2920 = vunpack.c.0.s8 %v2919
    %v2921 = vlaneseq
    %v2922 = vshrl.u32 %v2921, 7
    %v2923 = vsub.s32 %v2920, %v2922
    %v2924 = vrot.slane %v2896, %v2923
    %v2925 = vcombine.high %v2903, %v2903
    %v2926 = vcombine.high %v2910, %v2910
    %v2927 = vcombine.high %v2917, %v2917
    %v2928 = vcombine.high %v2924, %v2924
    %v2929 = vcombine.high %v2877, %v2877
    %v2931 = vunpack.c.l.s4 1966171168
    %v2932 = vunpack.c.0.s8 %v2931
    %v2933 = vlaneseq
    %v2934 = vshrl.u32 %v2933, 7
    %v2935 = vsub.s32 %v2932, %v2934
    %v2936 = vrot.slane %v2877, %v2935
    %v2938 = vunpack.c.l.s4 1966171168
    %v2939 = vunpack.c.0.s8 %v2938
    %v2940 = vlaneseq
    %v2941 = vshrl.u32 %v2940, 7
    %v2942 = vsub.s32 %v2939, %v2941
    %v2943 = vrot.slane %v2929, %v2942
    %v2944 = vcombine.high %v2936, %v2936
    %v2945 = vcombine.high %v2943, %v2943
    %v2947 = vunpack.c.l.s4 1966171168
    %v2948 = vunpack.c.0.s8 %v2947
    %v2949 = vlaneseq
    %v2950 = vshrl.u32 %v2949, 7
    %v2951 = vsub.s32 %v2948, %v2950
    %v2952 = vrot.slane %v2936, %v2951
    %v2954 = vunpack.c.l.s4 1966171168
    %v2955 = vunpack.c.0.s8 %v2954
    %v2956 = vlaneseq
    %v2957 = vshrl.u32 %v2956, 7
    %v2958 = vsub.s32 %v2955, %v2957
    %v2959 = vrot.slane %v2943, %v2958
    %v2961 = vunpack.c.l.s4 1966171168
    %v2962 = vunpack.c.0.s8 %v2961
    %v2963 = vlaneseq
    %v2964 = vshrl.u32 %v2963, 7
    %v2965 = vsub.s32 %v2962, %v2964
    %v2966 = vrot.slane %v2944, %v2965
    %v2968 = vunpack.c.l.s4 1966171168
    %v2969 = vunpack.c.0.s8 %v2968
    %v2970 = vlaneseq
    %v2971 = vshrl.u32 %v2970, 7
    %v2972 = vsub.s32 %v2969, %v2971
    %v2973 = vrot.slane %v2945, %v2972
    %v2974 = vcombine.high %v2952, %v2952
    %v2975 = vcombine.high %v2959, %v2959
    %v2976 = vcombine.high %v2966, %v2966
    %v2977 = vcombine.high %v2973, %v2973
    %v2978 = vlaneseq
    %v2979 = vshrl.u32 %v2978, 7
    %v2980 = vsub.s32 0, %v2979
    %v2981 = vrot.slane %v2414, %v2980
    %2983 = vbcast.lane.b32.xlu0 %v2981, 256
    %v2984 = vpop.permute.xlu0 %2983
    %s2986 = sor.u32 256, 8
    %2987 = vbcast.lane.b32.xlu0 %v2981, %s2986
    %v2988 = vpop.permute.xlu0 %2987
    %v2989 = vlaneseq
    %v2990 = vshrl.u32 %v2989, 7
    %v2991 = vsub.s32 1, %v2990
    %v2992 = vrot.slane %v2414, %v2991
    %2994 = vbcast.lane.b32.xlu0 %v2992, 256
    %v2995 = vpop.permute.xlu0 %2994
    %s2997 = sor.u32 256, 8
    %2998 = vbcast.lane.b32.xlu0 %v2992, %s2997
    %v2999 = vpop.permute.xlu0 %2998
    %v3000 = vlaneseq
    %v3001 = vshrl.u32 %v3000, 7
    %v3002 = vsub.s32 2, %v3001
    %v3003 = vrot.slane %v2414, %v3002
    %3005 = vbcast.lane.b32.xlu0 %v3003, 256
    %v3006 = vpop.permute.xlu0 %3005
    %s3008 = sor.u32 256, 8
    %3009 = vbcast.lane.b32.xlu0 %v3003, %s3008
    %v3010 = vpop.permute.xlu0 %3009
    %v3011 = vlaneseq
    %v3012 = vshrl.u32 %v3011, 7
    %v3013 = vsub.s32 3, %v3012
    %v3014 = vrot.slane %v2414, %v3013
    %3016 = vbcast.lane.b32.xlu0 %v3014, 256
    %v3017 = vpop.permute.xlu0 %3016
    %s3019 = sor.u32 256, 8
    %3020 = vbcast.lane.b32.xlu0 %v3014, %s3019
    %v3021 = vpop.permute.xlu0 %3020
    %v3022 = vlaneseq
    %v3023 = vshrl.u32 %v3022, 7
    %v3024 = vsub.s32 4, %v3023
    %v3025 = vrot.slane %v2414, %v3024
    %3027 = vbcast.lane.b32.xlu0 %v3025, 256
    %v3028 = vpop.permute.xlu0 %3027
    %s3030 = sor.u32 256, 8
    %3031 = vbcast.lane.b32.xlu0 %v3025, %s3030
    %v3032 = vpop.permute.xlu0 %3031
    %v3033 = vlaneseq
    %v3034 = vshrl.u32 %v3033, 7
    %v3035 = vsub.s32 5, %v3034
    %v3036 = vrot.slane %v2414, %v3035
    %3038 = vbcast.lane.b32.xlu0 %v3036, 256
    %v3039 = vpop.permute.xlu0 %3038
    %s3041 = sor.u32 256, 8
    %3042 = vbcast.lane.b32.xlu0 %v3036, %s3041
    %v3043 = vpop.permute.xlu0 %3042
    %v3044 = vlaneseq
    %v3045 = vshrl.u32 %v3044, 7
    %v3046 = vsub.s32 6, %v3045
    %v3047 = vrot.slane %v2414, %v3046
    %3049 = vbcast.lane.b32.xlu0 %v3047, 256
    %v3050 = vpop.permute.xlu0 %3049
    %s3052 = sor.u32 256, 8
    %3053 = vbcast.lane.b32.xlu0 %v3047, %s3052
    %v3054 = vpop.permute.xlu0 %3053
    %v3055 = vlaneseq
    %v3056 = vshrl.u32 %v3055, 7
    %v3057 = vsub.s32 7, %v3056
    %v3058 = vrot.slane %v2414, %v3057
    %3060 = vbcast.lane.b32.xlu0 %v3058, 256
    %v3061 = vpop.permute.xlu0 %3060
    %s3063 = sor.u32 256, 8
    %3064 = vbcast.lane.b32.xlu0 %v3058, %s3063
    %v3065 = vpop.permute.xlu0 %3064
    %v3066 = vlaneseq
    %v3067 = vshrl.u32 %v3066, 7
    %v3068 = vsub.s32 0, %v3067
    %v3069 = vrot.slane %v2419, %v3068
    %3071 = vbcast.lane.b32.xlu0 %v3069, 256
    %v3072 = vpop.permute.xlu0 %3071
    %s3074 = sor.u32 256, 8
    %3075 = vbcast.lane.b32.xlu0 %v3069, %s3074
    %v3076 = vpop.permute.xlu0 %3075
    %v3077 = vlaneseq
    %v3078 = vshrl.u32 %v3077, 7
    %v3079 = vsub.s32 1, %v3078
    %v3080 = vrot.slane %v2419, %v3079
    %3082 = vbcast.lane.b32.xlu0 %v3080, 256
    %v3083 = vpop.permute.xlu0 %3082
    %s3085 = sor.u32 256, 8
    %3086 = vbcast.lane.b32.xlu0 %v3080, %s3085
    %v3087 = vpop.permute.xlu0 %3086
    %v3088 = vlaneseq
    %v3089 = vshrl.u32 %v3088, 7
    %v3090 = vsub.s32 2, %v3089
    %v3091 = vrot.slane %v2419, %v3090
    %3093 = vbcast.lane.b32.xlu0 %v3091, 256
    %v3094 = vpop.permute.xlu0 %3093
    %s3096 = sor.u32 256, 8
    %3097 = vbcast.lane.b32.xlu0 %v3091, %s3096
    %v3098 = vpop.permute.xlu0 %3097
    %v3099 = vlaneseq
    %v3100 = vshrl.u32 %v3099, 7
    %v3101 = vsub.s32 3, %v3100
    %v3102 = vrot.slane %v2419, %v3101
    %3104 = vbcast.lane.b32.xlu0 %v3102, 256
    %v3105 = vpop.permute.xlu0 %3104
    %s3107 = sor.u32 256, 8
    %3108 = vbcast.lane.b32.xlu0 %v3102, %s3107
    %v3109 = vpop.permute.xlu0 %3108
    %v3110 = vlaneseq
    %v3111 = vshrl.u32 %v3110, 7
    %v3112 = vsub.s32 4, %v3111
    %v3113 = vrot.slane %v2419, %v3112
    %3115 = vbcast.lane.b32.xlu0 %v3113, 256
    %v3116 = vpop.permute.xlu0 %3115
    %s3118 = sor.u32 256, 8
    %3119 = vbcast.lane.b32.xlu0 %v3113, %s3118
    %v3120 = vpop.permute.xlu0 %3119
    %v3121 = vlaneseq
    %v3122 = vshrl.u32 %v3121, 7
    %v3123 = vsub.s32 5, %v3122
    %v3124 = vrot.slane %v2419, %v3123
    %3126 = vbcast.lane.b32.xlu0 %v3124, 256
    %v3127 = vpop.permute.xlu0 %3126
    %s3129 = sor.u32 256, 8
    %3130 = vbcast.lane.b32.xlu0 %v3124, %s3129
    %v3131 = vpop.permute.xlu0 %3130
    %v3132 = vlaneseq
    %v3133 = vshrl.u32 %v3132, 7
    %v3134 = vsub.s32 6, %v3133
    %v3135 = vrot.slane %v2419, %v3134
    %3137 = vbcast.lane.b32.xlu0 %v3135, 256
    %v3138 = vpop.permute.xlu0 %3137
    %s3140 = sor.u32 256, 8
    %3141 = vbcast.lane.b32.xlu0 %v3135, %s3140
    %v3142 = vpop.permute.xlu0 %3141
    %v3143 = vlaneseq
    %v3144 = vshrl.u32 %v3143, 7
    %v3145 = vsub.s32 7, %v3144
    %v3146 = vrot.slane %v2419, %v3145
    %3148 = vbcast.lane.b32.xlu0 %v3146, 256
    %v3149 = vpop.permute.xlu0 %3148
    %s3151 = sor.u32 256, 8
    %3152 = vbcast.lane.b32.xlu0 %v3146, %s3151
    %v3153 = vpop.permute.xlu0 %3152
    %v3154 = vlaneseq
    %v3155 = vshrl.u32 %v3154, 7
    %v3156 = vsub.s32 0, %v3155
    %v3157 = vrot.slane %v2903, %v3156
    %v3158 = vlaneseq
    %v3159 = vshrl.u32 %v3158, 7
    %v3160 = vsub.s32 0, %v3159
    %v3161 = vrot.slane %v2917, %v3160
    %v3162 = vlaneseq
    %v3163 = vshrl.u32 %v3162, 7
    %v3164 = vsub.s32 0, %v3163
    %v3165 = vrot.slane %v2925, %v3164
    %v3166 = vlaneseq
    %v3167 = vshrl.u32 %v3166, 7
    %v3168 = vsub.s32 0, %v3167
    %v3169 = vrot.slane %v2927, %v3168
    %v3170 = vlaneseq
    %v3171 = vshrl.u32 %v3170, 7
    %v3172 = vsub.s32 0, %v3171
    %v3173 = vrot.slane %v2910, %v3172
    %v3174 = vlaneseq
    %v3175 = vshrl.u32 %v3174, 7
    %v3176 = vsub.s32 0, %v3175
    %v3177 = vrot.slane %v2924, %v3176
    %v3178 = vlaneseq
    %v3179 = vshrl.u32 %v3178, 7
    %v3180 = vsub.s32 0, %v3179
    %v3181 = vrot.slane %v2926, %v3180
    %v3182 = vlaneseq
    %v3183 = vshrl.u32 %v3182, 7
    %v3184 = vsub.s32 0, %v3183
    %v3185 = vrot.slane %v2928, %v3184
    %v3186 = vlaneseq
    %v3187 = vshrl.u32 %v3186, 7
    %v3188 = vsub.s32 0, %v3187
    %v3189 = vrot.slane %v2952, %v3188
    %v3190 = vlaneseq
    %v3191 = vshrl.u32 %v3190, 7
    %v3192 = vsub.s32 0, %v3191
    %v3193 = vrot.slane %v2966, %v3192
    %v3194 = vlaneseq
    %v3195 = vshrl.u32 %v3194, 7
    %v3196 = vsub.s32 0, %v3195
    %v3197 = vrot.slane %v2974, %v3196
    %v3198 = vlaneseq
    %v3199 = vshrl.u32 %v3198, 7
    %v3200 = vsub.s32 0, %v3199
    %v3201 = vrot.slane %v2976, %v3200
    %v3202 = vlaneseq
    %v3203 = vshrl.u32 %v3202, 7
    %v3204 = vsub.s32 0, %v3203
    %v3205 = vrot.slane %v2959, %v3204
    %v3206 = vlaneseq
    %v3207 = vshrl.u32 %v3206, 7
    %v3208 = vsub.s32 0, %v3207
    %v3209 = vrot.slane %v2973, %v3208
    %v3210 = vlaneseq
    %v3211 = vshrl.u32 %v3210, 7
    %v3212 = vsub.s32 0, %v3211
    %v3213 = vrot.slane %v2975, %v3212
    %v3214 = vlaneseq
    %v3215 = vshrl.u32 %v3214, 7
    %v3216 = vsub.s32 0, %v3215
    %v3217 = vrot.slane %v2977, %v3216
    %v3234 = vmul.f32 %v3157, %v2984
    %v3235 = vmul.f32 %v3157, %v2988
    %v3236 = vmul.f32 %v3161, %v2995
    %v3237 = vmul.f32 %v3161, %v2999
    %v3238 = vmul.f32 %v3165, %v3006
    %v3239 = vmul.f32 %v3165, %v3010
    %v3240 = vmul.f32 %v3169, %v3017
    %v3241 = vmul.f32 %v3169, %v3021
    %v3242 = vmul.f32 %v3173, %v3028
    %v3243 = vmul.f32 %v3173, %v3032
    %v3244 = vmul.f32 %v3177, %v3039
    %v3245 = vmul.f32 %v3177, %v3043
    %v3246 = vmul.f32 %v3181, %v3050
    %v3247 = vmul.f32 %v3181, %v3054
    %v3248 = vmul.f32 %v3185, %v3061
    %v3249 = vmul.f32 %v3185, %v3065
    %v3250 = vmul.f32 %v3189, %v3072
    %v3251 = vmul.f32 %v3189, %v3076
    %v3252 = vmul.f32 %v3193, %v3083
    %v3253 = vmul.f32 %v3193, %v3087
    %v3254 = vmul.f32 %v3197, %v3094
    %v3255 = vmul.f32 %v3197, %v3098
    %v3256 = vmul.f32 %v3201, %v3105
    %v3257 = vmul.f32 %v3201, %v3109
    %v3258 = vmul.f32 %v3205, %v3116
    %v3259 = vmul.f32 %v3205, %v3120
    %v3260 = vmul.f32 %v3209, %v3127
    %v3261 = vmul.f32 %v3209, %v3131
    %v3262 = vmul.f32 %v3213, %v3138
    %v3263 = vmul.f32 %v3213, %v3142
    %v3264 = vmul.f32 %v3217, %v3149
    %v3265 = vmul.f32 %v3217, %v3153
    %v3266 = vmul.f32 %v2813, 0.0
    %v3267 = vmul.f32 %v2815, 0.0
    %v3268 = vmul.f32 %v2845, 0.0
    %v3269 = vmul.f32 %v2847, 0.0
    %v3270 = vadd.f32 %v3266, %v3234
    %v3271 = vadd.f32 %v3267, %v3235
    %v3272 = vadd.f32 %v3268, %v3250
    %v3273 = vadd.f32 %v3269, %v3251
    %v3274 = vmul.f32 %v2817, %v3270
    %v3275 = vmul.f32 %v2819, %v3271
    %v3276 = vmul.f32 %v2849, %v3272
    %v3277 = vmul.f32 %v2851, %v3273
    %v3278 = vadd.f32 %v3274, %v3236
    %v3279 = vadd.f32 %v3275, %v3237
    %v3280 = vadd.f32 %v3276, %v3252
    %v3281 = vadd.f32 %v3277, %v3253
    %v3282 = vmul.f32 %v2821, %v3278
    %v3283 = vmul.f32 %v2823, %v3279
    %v3284 = vmul.f32 %v2853, %v3280
    %v3285 = vmul.f32 %v2855, %v3281
    %v3286 = vadd.f32 %v3282, %v3238
    %v3287 = vadd.f32 %v3283, %v3239
    %v3288 = vadd.f32 %v3284, %v3254
    %v3289 = vadd.f32 %v3285, %v3255
    %v3290 = vmul.f32 %v2825, %v3286
    %v3291 = vmul.f32 %v2827, %v3287
    %v3292 = vmul.f32 %v2857, %v3288
    %v3293 = vmul.f32 %v2859, %v3289
    %v3294 = vadd.f32 %v3290, %v3240
    %v3295 = vadd.f32 %v3291, %v3241
    %v3296 = vadd.f32 %v3292, %v3256
    %v3297 = vadd.f32 %v3293, %v3257
    %v3298 = vmul.f32 %v2829, %v3294
    %v3299 = vmul.f32 %v2831, %v3295
    %v3300 = vmul.f32 %v2861, %v3296
    %v3301 = vmul.f32 %v2863, %v3297
    %v3302 = vadd.f32 %v3298, %v3242
    %v3303 = vadd.f32 %v3299, %v3243
    %v3304 = vadd.f32 %v3300, %v3258
    %v3305 = vadd.f32 %v3301, %v3259
    %v3306 = vmul.f32 %v2833, %v3302
    %v3307 = vmul.f32 %v2835, %v3303
    %v3308 = vmul.f32 %v2865, %v3304
    %v3309 = vmul.f32 %v2867, %v3305
    %v3310 = vadd.f32 %v3306, %v3244
    %v3311 = vadd.f32 %v3307, %v3245
    %v3312 = vadd.f32 %v3308, %v3260
    %v3313 = vadd.f32 %v3309, %v3261
    %v3314 = vmul.f32 %v2837, %v3310
    %v3315 = vmul.f32 %v2839, %v3311
    %v3316 = vmul.f32 %v2869, %v3312
    %v3317 = vmul.f32 %v2871, %v3313
    %v3318 = vadd.f32 %v3314, %v3246
    %v3319 = vadd.f32 %v3315, %v3247
    %v3320 = vadd.f32 %v3316, %v3262
    %v3321 = vadd.f32 %v3317, %v3263
    %v3322 = vmul.f32 %v2841, %v3318
    %v3323 = vmul.f32 %v2843, %v3319
    %v3324 = vmul.f32 %v2873, %v3320
    %v3325 = vmul.f32 %v2875, %v3321
    %v3326 = vadd.f32 %v3322, %v3248
    %v3327 = vadd.f32 %v3323, %v3249
    %v3328 = vadd.f32 %v3324, %v3264
    %v3329 = vadd.f32 %v3325, %v3265
    %v3330 = vlaneseq
    %v3331 = vshrl.u32 %v3330, 7
    %v3332 = vsub.s32 0, %v3331
    %v3333 = vrot.slane %v2489, %v3332
    %3335 = vbcast.lane.b32.xlu0 %v3333, 256
    %v3336 = vpop.permute.xlu0 %3335
    %s3338 = sor.u32 256, 8
    %3339 = vbcast.lane.b32.xlu0 %v3333, %s3338
    %v3340 = vpop.permute.xlu0 %3339
    %v3341 = vlaneseq
    %v3342 = vshrl.u32 %v3341, 7
    %v3343 = vsub.s32 1, %v3342
    %v3344 = vrot.slane %v2489, %v3343
    %3346 = vbcast.lane.b32.xlu0 %v3344, 256
    %v3347 = vpop.permute.xlu0 %3346
    %s3349 = sor.u32 256, 8
    %3350 = vbcast.lane.b32.xlu0 %v3344, %s3349
    %v3351 = vpop.permute.xlu0 %3350
    %v3352 = vlaneseq
    %v3353 = vshrl.u32 %v3352, 7
    %v3354 = vsub.s32 2, %v3353
    %v3355 = vrot.slane %v2489, %v3354
    %3357 = vbcast.lane.b32.xlu0 %v3355, 256
    %v3358 = vpop.permute.xlu0 %3357
    %s3360 = sor.u32 256, 8
    %3361 = vbcast.lane.b32.xlu0 %v3355, %s3360
    %v3362 = vpop.permute.xlu0 %3361
    %v3363 = vlaneseq
    %v3364 = vshrl.u32 %v3363, 7
    %v3365 = vsub.s32 3, %v3364
    %v3366 = vrot.slane %v2489, %v3365
    %3368 = vbcast.lane.b32.xlu0 %v3366, 256
    %v3369 = vpop.permute.xlu0 %3368
    %s3371 = sor.u32 256, 8
    %3372 = vbcast.lane.b32.xlu0 %v3366, %s3371
    %v3373 = vpop.permute.xlu0 %3372
    %v3374 = vlaneseq
    %v3375 = vshrl.u32 %v3374, 7
    %v3376 = vsub.s32 4, %v3375
    %v3377 = vrot.slane %v2489, %v3376
    %3379 = vbcast.lane.b32.xlu0 %v3377, 256
    %v3380 = vpop.permute.xlu0 %3379
    %s3382 = sor.u32 256, 8
    %3383 = vbcast.lane.b32.xlu0 %v3377, %s3382
    %v3384 = vpop.permute.xlu0 %3383
    %v3385 = vlaneseq
    %v3386 = vshrl.u32 %v3385, 7
    %v3387 = vsub.s32 5, %v3386
    %v3388 = vrot.slane %v2489, %v3387
    %3390 = vbcast.lane.b32.xlu0 %v3388, 256
    %v3391 = vpop.permute.xlu0 %3390
    %s3393 = sor.u32 256, 8
    %3394 = vbcast.lane.b32.xlu0 %v3388, %s3393
    %v3395 = vpop.permute.xlu0 %3394
    %v3396 = vlaneseq
    %v3397 = vshrl.u32 %v3396, 7
    %v3398 = vsub.s32 6, %v3397
    %v3399 = vrot.slane %v2489, %v3398
    %3401 = vbcast.lane.b32.xlu0 %v3399, 256
    %v3402 = vpop.permute.xlu0 %3401
    %s3404 = sor.u32 256, 8
    %3405 = vbcast.lane.b32.xlu0 %v3399, %s3404
    %v3406 = vpop.permute.xlu0 %3405
    %v3407 = vlaneseq
    %v3408 = vshrl.u32 %v3407, 7
    %v3409 = vsub.s32 7, %v3408
    %v3410 = vrot.slane %v2489, %v3409
    %3412 = vbcast.lane.b32.xlu0 %v3410, 256
    %v3413 = vpop.permute.xlu0 %3412
    %s3415 = sor.u32 256, 8
    %3416 = vbcast.lane.b32.xlu0 %v3410, %s3415
    %v3417 = vpop.permute.xlu0 %3416
    %v3418 = vlaneseq
    %v3419 = vshrl.u32 %v3418, 7
    %v3420 = vsub.s32 0, %v3419
    %v3421 = vrot.slane %v2494, %v3420
    %3423 = vbcast.lane.b32.xlu0 %v3421, 256
    %v3424 = vpop.permute.xlu0 %3423
    %s3426 = sor.u32 256, 8
    %3427 = vbcast.lane.b32.xlu0 %v3421, %s3426
    %v3428 = vpop.permute.xlu0 %3427
    %v3429 = vlaneseq
    %v3430 = vshrl.u32 %v3429, 7
    %v3431 = vsub.s32 1, %v3430
    %v3432 = vrot.slane %v2494, %v3431
    %3434 = vbcast.lane.b32.xlu0 %v3432, 256
    %v3435 = vpop.permute.xlu0 %3434
    %s3437 = sor.u32 256, 8
    %3438 = vbcast.lane.b32.xlu0 %v3432, %s3437
    %v3439 = vpop.permute.xlu0 %3438
    %v3440 = vlaneseq
    %v3441 = vshrl.u32 %v3440, 7
    %v3442 = vsub.s32 2, %v3441
    %v3443 = vrot.slane %v2494, %v3442
    %3445 = vbcast.lane.b32.xlu0 %v3443, 256
    %v3446 = vpop.permute.xlu0 %3445
    %s3448 = sor.u32 256, 8
    %3449 = vbcast.lane.b32.xlu0 %v3443, %s3448
    %v3450 = vpop.permute.xlu0 %3449
    %v3451 = vlaneseq
    %v3452 = vshrl.u32 %v3451, 7
    %v3453 = vsub.s32 3, %v3452
    %v3454 = vrot.slane %v2494, %v3453
    %3456 = vbcast.lane.b32.xlu0 %v3454, 256
    %v3457 = vpop.permute.xlu0 %3456
    %s3459 = sor.u32 256, 8
    %3460 = vbcast.lane.b32.xlu0 %v3454, %s3459
    %v3461 = vpop.permute.xlu0 %3460
    %v3462 = vlaneseq
    %v3463 = vshrl.u32 %v3462, 7
    %v3464 = vsub.s32 4, %v3463
    %v3465 = vrot.slane %v2494, %v3464
    %3467 = vbcast.lane.b32.xlu0 %v3465, 256
    %v3468 = vpop.permute.xlu0 %3467
    %s3470 = sor.u32 256, 8
    %3471 = vbcast.lane.b32.xlu0 %v3465, %s3470
    %v3472 = vpop.permute.xlu0 %3471
    %v3473 = vlaneseq
    %v3474 = vshrl.u32 %v3473, 7
    %v3475 = vsub.s32 5, %v3474
    %v3476 = vrot.slane %v2494, %v3475
    %3478 = vbcast.lane.b32.xlu0 %v3476, 256
    %v3479 = vpop.permute.xlu0 %3478
    %s3481 = sor.u32 256, 8
    %3482 = vbcast.lane.b32.xlu0 %v3476, %s3481
    %v3483 = vpop.permute.xlu0 %3482
    %v3484 = vlaneseq
    %v3485 = vshrl.u32 %v3484, 7
    %v3486 = vsub.s32 6, %v3485
    %v3487 = vrot.slane %v2494, %v3486
    %3489 = vbcast.lane.b32.xlu0 %v3487, 256
    %v3490 = vpop.permute.xlu0 %3489
    %s3492 = sor.u32 256, 8
    %3493 = vbcast.lane.b32.xlu0 %v3487, %s3492
    %v3494 = vpop.permute.xlu0 %3493
    %v3495 = vlaneseq
    %v3496 = vshrl.u32 %v3495, 7
    %v3497 = vsub.s32 7, %v3496
    %v3498 = vrot.slane %v2494, %v3497
    %3500 = vbcast.lane.b32.xlu0 %v3498, 256
    %v3501 = vpop.permute.xlu0 %3500
    %s3503 = sor.u32 256, 8
    %3504 = vbcast.lane.b32.xlu0 %v3498, %s3503
    %v3505 = vpop.permute.xlu0 %3504
    %v3506 = vmul.f32 %v3270, %v3336
    %v3507 = vmul.f32 %v3271, %v3340
    %v3508 = vmul.f32 %v3278, %v3347
    %v3509 = vmul.f32 %v3279, %v3351
    %v3510 = vmul.f32 %v3286, %v3358
    %v3511 = vmul.f32 %v3287, %v3362
    %v3512 = vmul.f32 %v3294, %v3369
    %v3513 = vmul.f32 %v3295, %v3373
    %v3514 = vmul.f32 %v3302, %v3380
    %v3515 = vmul.f32 %v3303, %v3384
    %v3516 = vmul.f32 %v3310, %v3391
    %v3517 = vmul.f32 %v3311, %v3395
    %v3518 = vmul.f32 %v3318, %v3402
    %v3519 = vmul.f32 %v3319, %v3406
    %v3520 = vmul.f32 %v3326, %v3413
    %v3521 = vmul.f32 %v3327, %v3417
    %v3522 = vmul.f32 %v3272, %v3424
    %v3523 = vmul.f32 %v3273, %v3428
    %v3524 = vmul.f32 %v3280, %v3435
    %v3525 = vmul.f32 %v3281, %v3439
    %v3526 = vmul.f32 %v3288, %v3446
    %v3527 = vmul.f32 %v3289, %v3450
    %v3528 = vmul.f32 %v3296, %v3457
    %v3529 = vmul.f32 %v3297, %v3461
    %v3530 = vmul.f32 %v3304, %v3468
    %v3531 = vmul.f32 %v3305, %v3472
    %v3532 = vmul.f32 %v3312, %v3479
    %v3533 = vmul.f32 %v3313, %v3483
    %v3534 = vmul.f32 %v3320, %v3490
    %v3535 = vmul.f32 %v3321, %v3494
    %v3536 = vmul.f32 %v3328, %v3501
    %v3537 = vmul.f32 %v3329, %v3505
    %v3538 = vsel %vm472, %v3506, 0.0
    %v3539 = vsel %vm472, %v3507, 0.0
    %v3540 = vadd.f32 %v3538, %v3539
    %v3541 = vrot.slane %v3540, 4
    %v3542 = vadd.f32 %v3540, %v3541
    %v3543 = vrot.slane %v3542, 2
    %v3544 = vadd.f32 %v3542, %v3543
    %v3545 = vrot.slane %v3544, 1
    %v3546 = vadd.f32 %v3544, %v3545
    %v3547 = vsel %vm472, %v3508, 0.0
    %v3548 = vsel %vm472, %v3509, 0.0
    %v3549 = vadd.f32 %v3547, %v3548
    %v3550 = vrot.slane %v3549, 4
    %v3551 = vadd.f32 %v3549, %v3550
    %v3552 = vrot.slane %v3551, 2
    %v3553 = vadd.f32 %v3551, %v3552
    %v3554 = vrot.slane %v3553, 1
    %v3555 = vadd.f32 %v3553, %v3554
    %v3556 = vsel %vm472, %v3510, 0.0
    %v3557 = vsel %vm472, %v3511, 0.0
    %v3558 = vadd.f32 %v3556, %v3557
    %v3559 = vrot.slane %v3558, 4
    %v3560 = vadd.f32 %v3558, %v3559
    %v3561 = vrot.slane %v3560, 2
    %v3562 = vadd.f32 %v3560, %v3561
    %v3563 = vrot.slane %v3562, 1
    %v3564 = vadd.f32 %v3562, %v3563
    %v3565 = vsel %vm472, %v3512, 0.0
    %v3566 = vsel %vm472, %v3513, 0.0
    %v3567 = vadd.f32 %v3565, %v3566
    %v3568 = vrot.slane %v3567, 4
    %v3569 = vadd.f32 %v3567, %v3568
    %v3570 = vrot.slane %v3569, 2
    %v3571 = vadd.f32 %v3569, %v3570
    %v3572 = vrot.slane %v3571, 1
    %v3573 = vadd.f32 %v3571, %v3572
    %v3574 = vsel %vm472, %v3514, 0.0
    %v3575 = vsel %vm472, %v3515, 0.0
    %v3576 = vadd.f32 %v3574, %v3575
    %v3577 = vrot.slane %v3576, 4
    %v3578 = vadd.f32 %v3576, %v3577
    %v3579 = vrot.slane %v3578, 2
    %v3580 = vadd.f32 %v3578, %v3579
    %v3581 = vrot.slane %v3580, 1
    %v3582 = vadd.f32 %v3580, %v3581
    %v3583 = vsel %vm472, %v3516, 0.0
    %v3584 = vsel %vm472, %v3517, 0.0
    %v3585 = vadd.f32 %v3583, %v3584
    %v3586 = vrot.slane %v3585, 4
    %v3587 = vadd.f32 %v3585, %v3586
    %v3588 = vrot.slane %v3587, 2
    %v3589 = vadd.f32 %v3587, %v3588
    %v3590 = vrot.slane %v3589, 1
    %v3591 = vadd.f32 %v3589, %v3590
    %v3592 = vsel %vm472, %v3518, 0.0
    %v3593 = vsel %vm472, %v3519, 0.0
    %v3594 = vadd.f32 %v3592, %v3593
    %v3595 = vrot.slane %v3594, 4
    %v3596 = vadd.f32 %v3594, %v3595
    %v3597 = vrot.slane %v3596, 2
    %v3598 = vadd.f32 %v3596, %v3597
    %v3599 = vrot.slane %v3598, 1
    %v3600 = vadd.f32 %v3598, %v3599
    %v3601 = vsel %vm472, %v3520, 0.0
    %v3602 = vsel %vm472, %v3521, 0.0
    %v3603 = vadd.f32 %v3601, %v3602
    %v3604 = vrot.slane %v3603, 4
    %v3605 = vadd.f32 %v3603, %v3604
    %v3606 = vrot.slane %v3605, 2
    %v3607 = vadd.f32 %v3605, %v3606
    %v3608 = vrot.slane %v3607, 1
    %v3609 = vadd.f32 %v3607, %v3608
    %v3610 = vsel %vm472, %v3522, 0.0
    %v3611 = vsel %vm472, %v3523, 0.0
    %v3612 = vadd.f32 %v3610, %v3611
    %v3613 = vrot.slane %v3612, 4
    %v3614 = vadd.f32 %v3612, %v3613
    %v3615 = vrot.slane %v3614, 2
    %v3616 = vadd.f32 %v3614, %v3615
    %v3617 = vrot.slane %v3616, 1
    %v3618 = vadd.f32 %v3616, %v3617
    %v3619 = vsel %vm472, %v3524, 0.0
    %v3620 = vsel %vm472, %v3525, 0.0
    %v3621 = vadd.f32 %v3619, %v3620
    %v3622 = vrot.slane %v3621, 4
    %v3623 = vadd.f32 %v3621, %v3622
    %v3624 = vrot.slane %v3623, 2
    %v3625 = vadd.f32 %v3623, %v3624
    %v3626 = vrot.slane %v3625, 1
    %v3627 = vadd.f32 %v3625, %v3626
    %v3628 = vsel %vm472, %v3526, 0.0
    %v3629 = vsel %vm472, %v3527, 0.0
    %v3630 = vadd.f32 %v3628, %v3629
    %v3631 = vrot.slane %v3630, 4
    %v3632 = vadd.f32 %v3630, %v3631
    %v3633 = vrot.slane %v3632, 2
    %v3634 = vadd.f32 %v3632, %v3633
    %v3635 = vrot.slane %v3634, 1
    %v3636 = vadd.f32 %v3634, %v3635
    %v3637 = vsel %vm472, %v3528, 0.0
    %v3638 = vsel %vm472, %v3529, 0.0
    %v3639 = vadd.f32 %v3637, %v3638
    %v3640 = vrot.slane %v3639, 4
    %v3641 = vadd.f32 %v3639, %v3640
    %v3642 = vrot.slane %v3641, 2
    %v3643 = vadd.f32 %v3641, %v3642
    %v3644 = vrot.slane %v3643, 1
    %v3645 = vadd.f32 %v3643, %v3644
    %v3646 = vsel %vm472, %v3530, 0.0
    %v3647 = vsel %vm472, %v3531, 0.0
    %v3648 = vadd.f32 %v3646, %v3647
    %v3649 = vrot.slane %v3648, 4
    %v3650 = vadd.f32 %v3648, %v3649
    %v3651 = vrot.slane %v3650, 2
    %v3652 = vadd.f32 %v3650, %v3651
    %v3653 = vrot.slane %v3652, 1
    %v3654 = vadd.f32 %v3652, %v3653
    %v3655 = vsel %vm472, %v3532, 0.0
    %v3656 = vsel %vm472, %v3533, 0.0
    %v3657 = vadd.f32 %v3655, %v3656
    %v3658 = vrot.slane %v3657, 4
    %v3659 = vadd.f32 %v3657, %v3658
    %v3660 = vrot.slane %v3659, 2
    %v3661 = vadd.f32 %v3659, %v3660
    %v3662 = vrot.slane %v3661, 1
    %v3663 = vadd.f32 %v3661, %v3662
    %v3664 = vsel %vm472, %v3534, 0.0
    %v3665 = vsel %vm472, %v3535, 0.0
    %v3666 = vadd.f32 %v3664, %v3665
    %v3667 = vrot.slane %v3666, 4
    %v3668 = vadd.f32 %v3666, %v3667
    %v3669 = vrot.slane %v3668, 2
    %v3670 = vadd.f32 %v3668, %v3669
    %v3671 = vrot.slane %v3670, 1
    %v3672 = vadd.f32 %v3670, %v3671
    %v3673 = vsel %vm472, %v3536, 0.0
    %v3674 = vsel %vm472, %v3537, 0.0
    %v3675 = vadd.f32 %v3673, %v3674
    %v3676 = vrot.slane %v3675, 4
    %v3677 = vadd.f32 %v3675, %v3676
    %v3678 = vrot.slane %v3677, 2
    %v3679 = vadd.f32 %v3677, %v3678
    %v3680 = vrot.slane %v3679, 1
    %v3681 = vadd.f32 %v3679, %v3680
    %v3683 = vlaneseq
    %v3684 = vshrl.u32 %v3683, 7
    %v3685 = vsub.s32 0, %v3684
    %v3686 = vrot.slane %v2107, %v3685
    %v3688 = vmul.f32 %v2339, %v3686
    %v3689 = vmul.f32 %v2340, %v3686
    %v3692 = vrot.slane %v3688, 1
    %v3693 = vrot.slane %v3688, 2
    %v3694 = vrot.slane %v3688, 3
    %v3695 = vrot.slane %v3688, 4
    %v3696 = vrot.slane %v3688, 5
    %v3697 = vrot.slane %v3688, 6
    %v3698 = vrot.slane %v3688, 7
    %v3699 = vrot.slane %v3689, 1
    %v3700 = vrot.slane %v3689, 2
    %v3701 = vrot.slane %v3689, 3
    %v3702 = vrot.slane %v3689, 4
    %v3703 = vrot.slane %v3689, 5
    %v3704 = vrot.slane %v3689, 6
    %v3705 = vrot.slane %v3689, 7
    %v3722 = vadd.f32 %v3546, %v3688
    %v3723 = vadd.f32 %v3555, %v3692
    %v3724 = vadd.f32 %v3564, %v3693
    %v3725 = vadd.f32 %v3573, %v3694
    %v3726 = vadd.f32 %v3582, %v3695
    %v3727 = vadd.f32 %v3591, %v3696
    %v3728 = vadd.f32 %v3600, %v3697
    %v3729 = vadd.f32 %v3609, %v3698
    %v3730 = vadd.f32 %v3618, %v3689
    %v3731 = vadd.f32 %v3627, %v3699
    %v3732 = vadd.f32 %v3636, %v3700
    %v3733 = vadd.f32 %v3645, %v3701
    %v3734 = vadd.f32 %v3654, %v3702
    %v3735 = vadd.f32 %v3663, %v3703
    %v3736 = vadd.f32 %v3672, %v3704
    %v3737 = vadd.f32 %v3681, %v3705
    %v3738 = vsub.f32 0.0, %v2265
    %v3739 = vsub.f32 0.0, %v2270
    %v3740 = vmul.f32 %v3738, 1.442695
    %v3741 = vpow.pop %v3740
    %v3742 = vmul.f32 %v3739, 1.442695
    %v3743 = vpow.pop %v3742
    %v3744 = vadd.f32 %v3741, 1.0
    %v3745 = vadd.f32 %v3743, 1.0
    %v3746 = vrcp.pop %v3744
    %v3747 = vrcp.pop %v3745
    %v3748 = vmul.f32 %v2265, %v3746
    %v3749 = vmul.f32 %v2270, %v3747
    %v3752 = vrot.slane %v3748, 1
    %v3753 = vrot.slane %v3748, 2
    %v3754 = vrot.slane %v3748, 3
    %v3755 = vrot.slane %v3748, 4
    %v3756 = vrot.slane %v3748, 5
    %v3757 = vrot.slane %v3748, 6
    %v3758 = vrot.slane %v3748, 7
    %v3759 = vrot.slane %v3749, 1
    %v3760 = vrot.slane %v3749, 2
    %v3761 = vrot.slane %v3749, 3
    %v3762 = vrot.slane %v3749, 4
    %v3763 = vrot.slane %v3749, 5
    %v3764 = vrot.slane %v3749, 6
    %v3765 = vrot.slane %v3749, 7
    %v3782 = vmul.f32 %v3722, %v3748
    %v3783 = vmul.f32 %v3723, %v3752
    %v3784 = vmul.f32 %v3724, %v3753
    %v3785 = vmul.f32 %v3725, %v3754
    %v3786 = vmul.f32 %v3726, %v3755
    %v3787 = vmul.f32 %v3727, %v3756
    %v3788 = vmul.f32 %v3728, %v3757
    %v3789 = vmul.f32 %v3729, %v3758
    %v3790 = vmul.f32 %v3730, %v3749
    %v3791 = vmul.f32 %v3731, %v3759
    %v3792 = vmul.f32 %v3732, %v3760
    %v3793 = vmul.f32 %v3733, %v3761
    %v3794 = vmul.f32 %v3734, %v3762
    %v3795 = vmul.f32 %v3735, %v3763
    %v3796 = vmul.f32 %v3736, %v3764
    %v3797 = vmul.f32 %v3737, %v3765
    %v3814 = vrot.slane %v3783, 7
    %v3815 = vsel %vm1947, %v3814, %v3782
    %v3816 = vrot.slane %v3784, 6
    %v3817 = vsel %vm1950, %v3816, %v3815
    %v3818 = vrot.slane %v3785, 5
    %v3819 = vsel %vm1953, %v3818, %v3817
    %v3820 = vrot.slane %v3786, 4
    %v3821 = vsel %vm1956, %v3820, %v3819
    %v3822 = vrot.slane %v3787, 3
    %v3823 = vsel %vm1959, %v3822, %v3821
    %v3824 = vrot.slane %v3788, 2
    %v3825 = vsel %vm1962, %v3824, %v3823
    %v3826 = vrot.slane %v3789, 1
    %v3827 = vsel %vm1965, %v3826, %v3825
    %v3828 = vrot.slane %v3791, 7
    %v3829 = vsel %vm1947, %v3828, %v3790
    %v3830 = vrot.slane %v3792, 6
    %v3831 = vsel %vm1950, %v3830, %v3829
    %v3832 = vrot.slane %v3793, 5
    %v3833 = vsel %vm1953, %v3832, %v3831
    %v3834 = vrot.slane %v3794, 4
    %v3835 = vsel %vm1956, %v3834, %v3833
    %v3836 = vrot.slane %v3795, 3
    %v3837 = vsel %vm1959, %v3836, %v3835
    %v3838 = vrot.slane %v3796, 2
    %v3839 = vsel %vm1962, %v3838, %v3837
    %v3840 = vrot.slane %v3797, 1
    %v3841 = vsel %vm1965, %v3840, %v3839
    %v3842 = vsel %vm472, %v3827, 0
    %v3844 = vsel %vm472, %v3841, 0
    %3846 = vmatprep.subr.mxu0 0.0
    %3847 = vmatpush1.msra.mxu0 0.0
    %3848 = vmatprep.subr.mxu0 0.0
    %3849 = vmatpush1.msra.mxu0 0.0
    %3850 = vmatprep.subr.mxu0 0.0
    %3851 = vmatpush1.msra.mxu0 0.0
    %3852 = vmatprep.subr.mxu0 0.0
    %3853 = vmatpush1.msra.mxu0 0.0
    %3854 = vmatprep.subr.mxu0 0.0
    %3855 = vmatpush1.msra.mxu0 0.0
    %3856 = vmatprep.subr.mxu0 0.0
    %3857 = vmatpush1.msra.mxu0 0.0
    %3858 = vmatprep.subr.mxu0 0.0
    %3859 = vmatpush1.msra.mxu0 0.0
    %3860 = vmatprep.subr.mxu0 0.0
    %3861 = vmatpush1.msra.mxu0 0.0
    %3862 = vmatprep.subr.mxu0 0.0
    %3863 = vmatpush1.msra.mxu0 %v2116
    %3864 = vmatprep.subr.mxu0 0.0
    %3865 = vmatpush1.msra.mxu0 %v2115
    %3866 = vmatprep.subr.mxu0 0.0
    %3867 = vmatpush1.msra.mxu0 %v2114
    %3868 = vmatprep.subr.mxu0 0.0
    %3869 = vmatpush1.msra.mxu0 %v2113
    %3870 = vmatprep.subr.mxu0 0.0
    %3871 = vmatpush1.msra.mxu0 %v2112
    %3872 = vmatprep.subr.mxu0 0.0
    %3873 = vmatpush1.msra.mxu0 %v2111
    %3874 = vmatprep.subr.mxu0 0.0
    %3875 = vmatpush1.msra.mxu0 %v2110
    %3876 = vmatprep.subr.mxu0 0.0
    %3877 = vmatpush1.msra.mxu0 %v2109
    %3878 = vmatprep.subr.mxu0 0.0
    %3879 = vmatpush2.msra.mxu0 0.0
    %3880 = vmatprep.subr.mxu0 0.0
    %3881 = vmatpush2.msra.mxu0 0.0
    %3882 = vmatprep.subr.mxu0 0.0
    %3883 = vmatpush2.msra.mxu0 0.0
    %3884 = vmatprep.subr.mxu0 0.0
    %3885 = vmatpush2.msra.mxu0 0.0
    %3886 = vmatprep.subr.mxu0 0.0
    %3887 = vmatpush2.msra.mxu0 0.0
    %3888 = vmatprep.subr.mxu0 0.0
    %3889 = vmatpush2.msra.mxu0 0.0
    %3890 = vmatprep.subr.mxu0 0.0
    %3891 = vmatpush2.msra.mxu0 0.0
    %3892 = vmatprep.subr.mxu0 0.0
    %3893 = vmatpush2.msra.mxu0 0.0
    %3894 = vmatprep.subr.mxu0 0.0
    %3895 = vmatpush2.msra.mxu0 0.0
    %3896 = vmatprep.subr.mxu0 0.0
    %3897 = vmatpush2.msra.mxu0 0.0
    %3898 = vmatprep.subr.mxu0 0.0
    %3899 = vmatpush2.msra.mxu0 0.0
    %3900 = vmatprep.subr.mxu0 0.0
    %3901 = vmatpush2.msra.mxu0 0.0
    %3902 = vmatprep.subr.mxu0 0.0
    %3903 = vmatpush2.msra.mxu0 0.0
    %3904 = vmatprep.subr.mxu0 0.0
    %3905 = vmatpush2.msra.mxu0 0.0
    %3906 = vmatprep.subr.mxu0 0.0
    %3907 = vmatpush2.msra.mxu0 0.0
    %3908 = vmatprep.subr.mxu0 0.0
    %3909 = vmatpush2.msra.mxu0 0.0
    %3910 = vmatprep.mubr.f32.mxu0 0.0
    %3911 = vmatmul.mubr.f32.gmra.mxu0 %v3842
    %v3912 = vpop.f32.mrf.mxu0
    %v3913 = vadd.f32 0.0, %v3912
    %v3914 = vpop.f32.mrf.mxu0
    %3915 = vmatprep.mubr.f32.mxu0 0.0
    %3916 = vmatmul.mubr.f32.gmra.mxu0 %v3844
    %v3917 = vpop.f32.mrf.mxu0
    %v3918 = vadd.f32 0.0, %v3917
    %v3919 = vpop.f32.mrf.mxu0
    %3920 = vdwg.mxu0
    %v3921 = vld [vmem:[%s15] sm:$0xff]
    %v3922 = vld [vmem:[%s15 + $0x8] sm:$0xff]
    %v3923 = vld [vmem:[%s15 + $0x10] sm:$0xff]
    %v3924 = vld [vmem:[%s15 + $0x18] sm:$0xff]
    %v3925 = vld [vmem:[%s16] sm:$0x1]
    %v3927 = vlaneseq
    %v3928 = vshrl.u32 %v3927, 7
    %v3929 = vsub.s32 0, %v3928
    %v3930 = vrot.slane %v3925, %v3929
    %v3933 = vsel %vm238, %v3913, 0
    %v3936 = vsel %vm238, %v3918, 0
    %3938 = vmatprep.subr.mxu0 0.0
    %3939 = vmatpush1.msra.mxu0 0.0
    %3940 = vmatprep.subr.mxu0 0.0
    %3941 = vmatpush1.msra.mxu0 0.0
    %3942 = vmatprep.subr.mxu0 0.0
    %3943 = vmatpush1.msra.mxu0 0.0
    %3944 = vmatprep.subr.mxu0 0.0
    %3945 = vmatpush1.msra.mxu0 0.0
    %3946 = vmatprep.subr.mxu0 0.0
    %3947 = vmatpush1.msra.mxu0 0.0
    %3948 = vmatprep.subr.mxu0 0.0
    %3949 = vmatpush1.msra.mxu0 0.0
    %3950 = vmatprep.subr.mxu0 0.0
    %3951 = vmatpush1.msra.mxu0 0.0
    %3952 = vmatprep.subr.mxu0 0.0
    %3953 = vmatpush1.msra.mxu0 0.0
    %3954 = vmatprep.subr.mxu0 0.0
    %3955 = vmatpush1.msra.mxu0 0.0
    %3956 = vmatprep.subr.mxu0 0.0
    %3957 = vmatpush1.msra.mxu0 0.0
    %3958 = vmatprep.subr.mxu0 0.0
    %3959 = vmatpush1.msra.mxu0 0.0
    %3960 = vmatprep.subr.mxu0 0.0
    %3961 = vmatpush1.msra.mxu0 0.0
    %3962 = vmatprep.subr.mxu0 0.0
    %3963 = vmatpush1.msra.mxu0 %v3924
    %3964 = vmatprep.subr.mxu0 0.0
    %3965 = vmatpush1.msra.mxu0 %v3923
    %3966 = vmatprep.subr.mxu0 0.0
    %3967 = vmatpush1.msra.mxu0 %v3922
    %3968 = vmatprep.subr.mxu0 0.0
    %3969 = vmatpush1.msra.mxu0 %v3921
    %3970 = vmatprep.subr.mxu0 0.0
    %3971 = vmatpush2.msra.mxu0 0.0
    %3972 = vmatprep.subr.mxu0 0.0
    %3973 = vmatpush2.msra.mxu0 0.0
    %3974 = vmatprep.subr.mxu0 0.0
    %3975 = vmatpush2.msra.mxu0 0.0
    %3976 = vmatprep.subr.mxu0 0.0
    %3977 = vmatpush2.msra.mxu0 0.0
    %3978 = vmatprep.subr.mxu0 0.0
    %3979 = vmatpush2.msra.mxu0 0.0
    %3980 = vmatprep.subr.mxu0 0.0
    %3981 = vmatpush2.msra.mxu0 0.0
    %3982 = vmatprep.subr.mxu0 0.0
    %3983 = vmatpush2.msra.mxu0 0.0
    %3984 = vmatprep.subr.mxu0 0.0
    %3985 = vmatpush2.msra.mxu0 0.0
    %3986 = vmatprep.subr.mxu0 0.0
    %3987 = vmatpush2.msra.mxu0 0.0
    %3988 = vmatprep.subr.mxu0 0.0
    %3989 = vmatpush2.msra.mxu0 0.0
    %3990 = vmatprep.subr.mxu0 0.0
    %3991 = vmatpush2.msra.mxu0 0.0
    %3992 = vmatprep.subr.mxu0 0.0
    %3993 = vmatpush2.msra.mxu0 0.0
    %3994 = vmatprep.subr.mxu0 0.0
    %3995 = vmatpush2.msra.mxu0 0.0
    %3996 = vmatprep.subr.mxu0 0.0
    %3997 = vmatpush2.msra.mxu0 0.0
    %3998 = vmatprep.subr.mxu0 0.0
    %3999 = vmatpush2.msra.mxu0 0.0
    %4000 = vmatprep.subr.mxu0 0.0
    %4001 = vmatpush2.msra.mxu0 0.0
    %4002 = vmatprep.mubr.f32.mxu0 0.0
    %4003 = vmatmul.mubr.f32.gmra.mxu0 %v3933
    %v4004 = vpop.f32.mrf.mxu0
    %v4005 = vadd.f32 %v3930, %v4004
    %v4006 = vpop.f32.mrf.mxu0
    %4007 = vmatprep.mubr.f32.mxu0 0.0
    %4008 = vmatmul.mubr.f32.gmra.mxu0 %v3936
    %v4009 = vpop.f32.mrf.mxu0
    %v4010 = vadd.f32 %v3930, %v4009
    %v4011 = vpop.f32.mrf.mxu0
    %4012 = vdwg.mxu0
    %v4013 = vmax.f32 %v4005, 0.0
    %v4014 = vmax.f32 %v4010, 0.0
    %v4015 = vld [vmem:[%s17] sm:$0xff]
    %v4016 = vld [vmem:[%s17 + $0x8] sm:$0xff]
    %v4017 = vld [vmem:[%s17 + $0x10] sm:$0xff]
    %v4018 = vld [vmem:[%s17 + $0x18] sm:$0xff]
    %v4019 = vld [vmem:[%s18] sm:$0x1]
    %v4021 = vlaneseq
    %v4022 = vshrl.u32 %v4021, 7
    %v4023 = vsub.s32 0, %v4022
    %v4024 = vrot.slane %v4019, %v4023
    %v4027 = vsel %vm238, %v4013, 0
    %v4030 = vsel %vm238, %v4014, 0
    %4032 = vmatprep.subr.mxu0 0.0
    %4033 = vmatpush1.msra.mxu0 0.0
    %4034 = vmatprep.subr.mxu0 0.0
    %4035 = vmatpush1.msra.mxu0 0.0
    %4036 = vmatprep.subr.mxu0 0.0
    %4037 = vmatpush1.msra.mxu0 0.0
    %4038 = vmatprep.subr.mxu0 0.0
    %4039 = vmatpush1.msra.mxu0 0.0
    %4040 = vmatprep.subr.mxu0 0.0
    %4041 = vmatpush1.msra.mxu0 0.0
    %4042 = vmatprep.subr.mxu0 0.0
    %4043 = vmatpush1.msra.mxu0 0.0
    %4044 = vmatprep.subr.mxu0 0.0
    %4045 = vmatpush1.msra.mxu0 0.0
    %4046 = vmatprep.subr.mxu0 0.0
    %4047 = vmatpush1.msra.mxu0 0.0
    %4048 = vmatprep.subr.mxu0 0.0
    %4049 = vmatpush1.msra.mxu0 0.0
    %4050 = vmatprep.subr.mxu0 0.0
    %4051 = vmatpush1.msra.mxu0 0.0
    %4052 = vmatprep.subr.mxu0 0.0
    %4053 = vmatpush1.msra.mxu0 0.0
    %4054 = vmatprep.subr.mxu0 0.0
    %4055 = vmatpush1.msra.mxu0 0.0
    %4056 = vmatprep.subr.mxu0 0.0
    %4057 = vmatpush1.msra.mxu0 %v4018
    %4058 = vmatprep.subr.mxu0 0.0
    %4059 = vmatpush1.msra.mxu0 %v4017
    %4060 = vmatprep.subr.mxu0 0.0
    %4061 = vmatpush1.msra.mxu0 %v4016
    %4062 = vmatprep.subr.mxu0 0.0
    %4063 = vmatpush1.msra.mxu0 %v4015
    %4064 = vmatprep.subr.mxu0 0.0
    %4065 = vmatpush2.msra.mxu0 0.0
    %4066 = vmatprep.subr.mxu0 0.0
    %4067 = vmatpush2.msra.mxu0 0.0
    %4068 = vmatprep.subr.mxu0 0.0
    %4069 = vmatpush2.msra.mxu0 0.0
    %4070 = vmatprep.subr.mxu0 0.0
    %4071 = vmatpush2.msra.mxu0 0.0
    %4072 = vmatprep.subr.mxu0 0.0
    %4073 = vmatpush2.msra.mxu0 0.0
    %4074 = vmatprep.subr.mxu0 0.0
    %4075 = vmatpush2.msra.mxu0 0.0
    %4076 = vmatprep.subr.mxu0 0.0
    %4077 = vmatpush2.msra.mxu0 0.0
    %4078 = vmatprep.subr.mxu0 0.0
    %4079 = vmatpush2.msra.mxu0 0.0
    %4080 = vmatprep.subr.mxu0 0.0
    %4081 = vmatpush2.msra.mxu0 0.0
    %4082 = vmatprep.subr.mxu0 0.0
    %4083 = vmatpush2.msra.mxu0 0.0
    %4084 = vmatprep.subr.mxu0 0.0
    %4085 = vmatpush2.msra.mxu0 0.0
    %4086 = vmatprep.subr.mxu0 0.0
    %4087 = vmatpush2.msra.mxu0 0.0
    %4088 = vmatprep.subr.mxu0 0.0
    %4089 = vmatpush2.msra.mxu0 0.0
    %4090 = vmatprep.subr.mxu0 0.0
    %4091 = vmatpush2.msra.mxu0 0.0
    %4092 = vmatprep.subr.mxu0 0.0
    %4093 = vmatpush2.msra.mxu0 0.0
    %4094 = vmatprep.subr.mxu0 0.0
    %4095 = vmatpush2.msra.mxu0 0.0
    %4096 = vmatprep.mubr.f32.mxu0 0.0
    %4097 = vmatmul.mubr.f32.gmra.mxu0 %v4027
    %v4098 = vpop.f32.mrf.mxu0
    %v4099 = vadd.f32 %v4024, %v4098
    %v4100 = vpop.f32.mrf.mxu0
    %4101 = vmatprep.mubr.f32.mxu0 0.0
    %4102 = vmatmul.mubr.f32.gmra.mxu0 %v4030
    %v4103 = vpop.f32.mrf.mxu0
    %v4104 = vadd.f32 %v4024, %v4103
    %v4105 = vpop.f32.mrf.mxu0
    %4106 = vdwg.mxu0
    %4107 = vst [vmem:[#allocation2] sm:$0xff] %v4099
    %4108 = vst [vmem:[#allocation2 + $0x8] sm:$0xff] %v4104
    // Predicated region
    $region78: #{tpu_custom_call.1} parent=1 // pred_check
      _
    $region79: #{tpu_custom_call.1} parent=1 // pred_check_branch
      %4110 = sbr.rel (0) target = $region81
    $region80: #{tpu_custom_call.1} parent=1 // pred_region
      %s4112 = ssub.s32 256, 256
      %4113 = vsyncadd [#allocation3], %s4112
      %s4114 = sshll.u32 [#allocation2], 4
      %s4115 = int_to_ptr.vmem [resolvable:$true] %s4114
      %4120 = dma.vmem_to_hbm [thread:$0]  %s4115, 256, %s19, [#allocation3], 128, 128, 8
    $region81: #{tpu_custom_call.1} parent=1 // pred_fallthru
      _
    // Predicated region
    $region82: #{tpu_custom_call.1} parent=1 // pred_check
      _
    $region83: #{tpu_custom_call.1} parent=1 // pred_check_branch
      %4122 = sbr.rel (0) target = $region85
    $region84: #{tpu_custom_call.1} parent=1 // pred_region
      %4123 = dma.done [#allocation3], 256
    $region85: #{tpu_custom_call.1} parent=1 // pred_fallthru
      _
    %4124 = vsyncpa [#allocation3], 1

</llo_original>
